<compile_context>
chip_gen: v6e
topology: v6e:2x2x1
jax: 0.10.0
libtpu: 0.0.40
codegen_flags: <defaults>
</compile_context>

<pallas_src>
import functools
import math

import jax
import jax.numpy as jnp
from jax.experimental import pallas as pl
from jax.experimental.pallas import tpu as pltpu

NUM_HEADS = 8
NUM_BLOCKS = 3
LN_EPS = 1e-5
OUT_PAD = 128  # lane-dense output slab width (out_channels=1 lives in column 0)

# Order in which the resident kernel parameter arrays are passed to pallas_call.
KERNEL_PARAM_ORDER = (
    "coor0_w", "coor0_b", "enc_w", "enc_b",
    "lnq_g", "lnq_b", "lno_g", "lno_b",
    "wq", "bq", "wo", "bo",
    "fc_w", "fc_b", "pj_w", "pj_b",
    "dec_w", "dec_b", "dec3_w", "dec3_b",
)


# ----------------------------------------------------------------------------
# small helpers (used both inside the kernel and in the XLA pre-compute)
# ----------------------------------------------------------------------------
def _round_up(x, m):
    return ((x + m - 1) // m) * m


def _gelu(x):
    # exact erf formulation == torch.nn.GELU() default
    return 0.5 * x * (1.0 + jax.lax.erf(x * (1.0 / math.sqrt(2.0))))


def _layernorm(x, g, b):
    mean = jnp.mean(x, axis=-1, keepdims=True)
    var = jnp.mean(jnp.square(x - mean), axis=-1, keepdims=True)
    return (x - mean) * jax.lax.rsqrt(var + LN_EPS) * g + b


def _linear(x, w, b, act=None):
    # cast activations to the weight dtype (bf16 for MXU operands), f32 accumulate
    y = jnp.dot(x.astype(w.dtype), w, preferred_element_type=jnp.float32) + b
    if act == "gelu":
        y = _gelu(y)
    return y


# ----------------------------------------------------------------------------
# fused forward kernel: coor encoder -> 3 residual cross-attn blocks -> decoder
# (one row tile per grid step; all weights + K/V operands stay resident)
# ----------------------------------------------------------------------------
def _fused_kernel(x_ref, kblk, vblk, seg,
                  coor0_w, coor0_b, enc_w, enc_b,
                  lnq_g, lnq_b, lno_g, lno_b,
                  wq, bq, wo, bo,
                  fc_w, fc_b, pj_w, pj_b,
                  dec_w, dec_b, dec3_w, dec3_b,
                  o_ref):
    bf16 = jnp.bfloat16
    f32 = jnp.float32

    # ---- query-coordinate encoder (f32 first layer: K=3 contraction is free) ----
    h = _linear(x_ref[...], coor0_w[...], coor0_b[...], act="gelu")
    h = _linear(h, enc_w[0], enc_b[0], act="gelu")
    h = _linear(h, enc_w[1], enc_b[1])                        # (T, H) f32

    # ---- 3 residual cross-attention blocks ----
    for blk in range(NUM_BLOCKS):
        # cross attention with block-diagonal K/V (all heads in dense matmuls)
        qn = _layernorm(h, lnq_g[blk], lnq_b[blk])
        q = _linear(qn, wq[blk], bq[blk])                     # (T, H); 1/sqrt(hd) folded in
        s = jnp.dot(q.astype(bf16), kblk[blk],
                    preferred_element_type=f32)               # (T, nh*M) all-head scores

        # per-head softmax on the lane-dense score tensor:
        #   subtract a per-row max (exact: softmax is shift-invariant per segment,
        #   and exp args stay <= 0), then get each 16-lane segment's sum with one
        #   dense matmul against a block-diagonal ones matrix; exact divide.
        s = s - jnp.max(s, axis=-1, keepdims=True)
        p = jnp.exp(s)
        denom = jnp.dot(p, seg[...], preferred_element_type=f32)   # per-lane segment sums
        p = p / jnp.maximum(denom, 1e-30)                     # clamp only guards underflow

        pv = jnp.dot(p.astype(bf16), vblk[blk],
                     preferred_element_type=f32)              # (T, H), heads already merged
        attn = _linear(pv, wo[blk], bo[blk])
        h = h + attn                                          # residual 1

        # MLP
        hn = _layernorm(h, lno_g[blk], lno_b[blk])
        u = _linear(hn, fc_w[blk], fc_b[blk], act="gelu")
        u = _linear(u, pj_w[blk], pj_b[blk])
        h = h + u                                             # residual 2

    # ---- decoder + sigmoid ----
    h = _linear(h, dec_w[0], dec_b[0], act="gelu")
    h = _linear(h, dec_w[1], dec_b[1], act="gelu")
    h = _linear(h, dec_w[2], dec_b[2], act="gelu")
    y = _linear(h, dec3_w[...], dec3_b[...])                  # (T, OUT_PAD)
    o_ref[...] = 1.0 / (1.0 + jnp.exp(-y))                    # exact sigmoid


# ----------------------------------------------------------------------------
# tile-invariant kv-side pre-compute (plain XLA, runs once per forward)
# ----------------------------------------------------------------------------
def _block_diag(blocks):
    n = len(blocks)
    r, c = blocks[0].shape
    out = jnp.zeros((n * r, n * c), blocks[0].dtype)
    for h, blk in enumerate(blocks):
        out = out.at[h * r:(h + 1) * r, h * c:(h + 1) * c].set(blk)
    return out


def _encode_kv_side(p, control_points, num_heads):
    """Control-point encoder, per-block ln_k/ln_v + K/V projections, packed into
    block-diagonal operands for the kernel's dense attention matmuls."""
    kv = control_points.astype(jnp.float32)
    kv = _gelu(kv @ p["kv0_w"] + p["kv0_b"])
    kv = _gelu(kv @ p["kv1_w"] + p["kv1_b"])
    kv = kv @ p["kv2_w"] + p["kv2_b"]                         # (M, H)
    hd = kv.shape[1] // num_heads
    kblks, vblks = [], []
    for blk in range(NUM_BLOCKS):
        kn = _layernorm(kv, p["lnk_g"][blk], p["lnk_b"][blk])
        vn = _layernorm(kv, p["lnv_g"][blk], p["lnv_b"][blk])
        k = kn @ p["wk"][blk] + p["bk"][blk]                  # (M, H)
        v = vn @ p["wv"][blk] + p["bv"][blk]                  # (M, H)
        kh = [k[:, h * hd:(h + 1) * hd].T for h in range(num_heads)]   # (hd, M)
        vh = [v[:, h * hd:(h + 1) * hd] for h in range(num_heads)]     # (M, hd)
        kblks.append(_block_diag(kh))                         # (H, nh*M)
        vblks.append(_block_diag(vh))                         # (nh*M, H)
    return (jnp.stack(kblks).astype(jnp.bfloat16),
            jnp.stack(vblks).astype(jnp.bfloat16))


# ----------------------------------------------------------------------------
# wrapper: one fused pallas_call over a row-tile grid
# ----------------------------------------------------------------------------
def _choose_tile(n_rows, cap=512):
    if n_rows <= cap:
        return _round_up(n_rows, 8)
    best_t, best_key = None, None
    for t in (512, 384, 256, 128):
        n_pad = _round_up(n_rows, t)
        key = ((n_pad - n_rows) / n_pad, -t)   # minimise relative waste, prefer bigger tile
        if best_key is None or key < best_key:
            best_t, best_key = t, key
    return best_t


def transformer_forward(params, x, control_points, y, *, num_heads=NUM_HEADS):
    # num_trunks = N//10000 + 1 == 1 at these sizes -> torch.chunk is identity.
    # TODO(synk): the optional `graph.param` concatenation branch is not modeled
    # (no `param` attribute in the demo graph).
    n_rows, in_ch = x.shape
    m_rows = control_points.shape[0]

    # ---- tile-invariant kv-side work: done once in plain XLA, not per grid step
    kblk, vblk = _encode_kv_side(params, control_points, num_heads)
    lanes = num_heads * m_rows
    idx = jnp.arange(lanes)
    seg_ones = (idx[:, None] // m_rows == idx[None, :] // m_rows).astype(jnp.float32)

    # ---- row tiling over a 1-D "parallel" grid ----
    tile = _choose_tile(n_rows)
    n_pad = _round_up(n_rows, tile)
    if n_pad != n_rows:
        x = jnp.pad(x, ((0, n_pad - n_rows), (0, 0)))
    grid = (n_pad // tile,)

    def _const_spec(arr):
        nd = arr.ndim
        return pl.BlockSpec(arr.shape, lambda i, nd=nd: (0,) * nd)

    kp = [params[n] for n in KERNEL_PARAM_ORDER]
    in_specs = ([pl.BlockSpec((tile, in_ch), lambda i: (i, 0)),   # x: row tiled
                 _const_spec(kblk), _const_spec(vblk), _const_spec(seg_ones)]
                + [_const_spec(a) for a in kp])                   # weights: resident
    out_spec = pl.BlockSpec((tile, OUT_PAD), lambda i: (i, 0))    # lane-dense store

    out = pl.pallas_call(
        _fused_kernel,
        grid=grid,
        in_specs=in_specs,
        out_specs=out_spec,
        out_shape=jax.ShapeDtypeStruct((n_pad, OUT_PAD), jnp.float32),
        compiler_params=pltpu.CompilerParams(
            dimension_semantics=("parallel",),   # megacore-shardable row tiles
        ),
    )(x, kblk, vblk, seg_ones, *kp)

    # column 0 holds the real (out_channels=1) prediction; the rest is lane padding.
    return out[:n_rows, 0], y[:, 0]


# ----------------------------------------------------------------------------
# parameter construction (deterministic, PyTorch-Linear-style init),
# already in kernel layout: stacked bf16 matmul weights, f32 biases,
# 1/sqrt(head_dim) folded into Wq/bq; kv-side params kept f32 for the
# XLA pre-compute.
# ----------------------------------------------------------------------------
def _init_linear(key, din, dout):
    k1, k2 = jax.random.split(key)
    bound = 1.0 / math.sqrt(din)
    w = jax.random.uniform(k1, (din, dout), jnp.float32, -bound, bound)
    b = jax.random.uniform(k2, (1, dout), jnp.float32, -bound, bound)
    return w, b


def make_params(key, in_channels, hidden, out_channels, num_heads=NUM_HEADS):
    hd = hidden // num_heads
    h4 = hidden * 4
    bf16 = jnp.bfloat16
    keys = iter(jax.random.split(key, 64))
    p = {}

    # ---- query-coordinate encoder (in-kernel) ----
    w, b = _init_linear(next(keys), in_channels, hidden)
    p["coor0_w"], p["coor0_b"] = w, b                         # f32: K=3 contraction is free
    enc = [_init_linear(next(keys), hidden, hidden) for _ in range(2)]
    p["enc_w"] = jnp.stack([w for w, _ in enc]).astype(bf16)  # (2, H, H)
    p["enc_b"] = jnp.stack([b for _, b in enc])               # (2, 1, H)

    # ---- control-point encoder (XLA pre-compute, f32) ----
    for i, name in enumerate(("kv0", "kv1", "kv2")):
        w, b = _init_linear(next(keys), 3 if i == 0 else hidden, hidden)
        p[name + "_w"], p[name + "_b"] = w, b

    # ---- 3 residual cross-attention blocks ----
    scale = 1.0 / math.sqrt(hd)
    names = ("lnq_g", "lnq_b", "lnk_g", "lnk_b", "lnv_g", "lnv_b", "lno_g", "lno_b",
             "wq", "bq", "wk", "bk", "wv", "bv", "wo", "bo",
             "fc_w", "fc_b", "pj_w", "pj_b")
    acc = {n: [] for n in names}
    for _ in range(NUM_BLOCKS):
        for ln in ("lnq", "lnk", "lnv", "lno"):
            acc[ln + "_g"].append(jnp.ones((1, hidden), jnp.float32))
            acc[ln + "_b"].append(jnp.zeros((1, hidden), jnp.float32))
        wq, bq = _init_linear(next(keys), hidden, hidden)
        wk, bk = _init_linear(next(keys), hidden, hidden)
        wv, bv = _init_linear(next(keys), hidden, hidden)
        wo, bo = _init_linear(next(keys), hidden, hidden)
        acc["wq"].append(wq * scale); acc["bq"].append(bq * scale)   # fold 1/sqrt(hd)
        acc["wk"].append(wk); acc["bk"].append(bk)
        acc["wv"].append(wv); acc["bv"].append(bv)
        acc["wo"].append(wo); acc["bo"].append(bo)
        fw, fb = _init_linear(next(keys), hidden, h4)
        pw, pb = _init_linear(next(keys), h4, hidden)
        acc["fc_w"].append(fw); acc["fc_b"].append(fb)
        acc["pj_w"].append(pw); acc["pj_b"].append(pb)
    for n, lst in acc.items():
        p[n] = jnp.stack(lst)
    for n in ("wq", "wo", "fc_w", "pj_w"):                    # in-kernel MXU operands
        p[n] = p[n].astype(bf16)

    # ---- decoder ----
    dec = [_init_linear(next(keys), hidden, hidden) for _ in range(3)]
    p["dec_w"] = jnp.stack([w for w, _ in dec]).astype(bf16)  # (3, H, H)
    p["dec_b"] = jnp.stack([b for _, b in dec])               # (3, 1, H)
    # final projection padded to 128 output lanes -> lane-dense HBM store
    w3, b3 = _init_linear(next(keys), hidden, out_channels)
    p["dec3_w"] = (jnp.zeros((hidden, OUT_PAD), jnp.float32)
                   .at[:, :out_channels].set(w3).astype(bf16))
    p["dec3_b"] = jnp.zeros((1, OUT_PAD), jnp.float32).at[:, :out_channels].set(b3)
    return p


# ----------------------------------------------------------------------------
# main
# ----------------------------------------------------------------------------
if __name__ == "__main__":
    IN_CHANNELS = 3       # graph.x features
    HIDDEN = 64           # hidden_channels (divisible by num_heads=8)
    OUT_CHANNELS = 1
    N = 32                # number of query points (graph.x rows)
    M = 16                # number of control points

    key = jax.random.PRNGKey(0)
    k_par, k_x, k_cp, k_y = jax.random.split(key, 4)

    params = make_params(k_par, IN_CHANNELS, HIDDEN, OUT_CHANNELS)
    x = jax.random.normal(k_x, (N, IN_CHANNELS), jnp.float32)        # graph.x
    control_points = jax.random.normal(k_cp, (M, 3), jnp.float32)    # graph.control_points
    y = jax.random.normal(k_y, (N, 1), jnp.float32)                  # graph.y

    fwd = jax.jit(functools.partial(transformer_forward, params))
    out, y_gt = fwd(x, control_points, y)
    jax.block_until_ready((out, y_gt))

    assert out.shape == (N,) and y_gt.shape == (N,)
    assert bool(jnp.all(jnp.isfinite(out)))
    print("KERNEL_OK")
</pallas_src>

<mosaic_0001>
module attributes {stable_mosaic.version = 11 : i64} {
  func.func @_fused_kernel(%arg0: i32, %arg1: memref<32x3xf32, #tpu.memory_space<vmem>>, %arg2: memref<3x64x128xbf16, #tpu.memory_space<vmem>>, %arg3: memref<3x128x64xbf16, #tpu.memory_space<vmem>>, %arg4: memref<128x128xf32, #tpu.memory_space<vmem>>, %arg5: memref<3x64xf32, #tpu.memory_space<vmem>>, %arg6: memref<1x64xf32, #tpu.memory_space<vmem>>, %arg7: memref<2x64x64xbf16, #tpu.memory_space<vmem>>, %arg8: memref<2x1x64xf32, #tpu.memory_space<vmem>>, %arg9: memref<3x1x64xf32, #tpu.memory_space<vmem>>, %arg10: memref<3x1x64xf32, #tpu.memory_space<vmem>>, %arg11: memref<3x1x64xf32, #tpu.memory_space<vmem>>, %arg12: memref<3x1x64xf32, #tpu.memory_space<vmem>>, %arg13: memref<3x64x64xbf16, #tpu.memory_space<vmem>>, %arg14: memref<3x1x64xf32, #tpu.memory_space<vmem>>, %arg15: memref<3x64x64xbf16, #tpu.memory_space<vmem>>, %arg16: memref<3x1x64xf32, #tpu.memory_space<vmem>>, %arg17: memref<3x64x256xbf16, #tpu.memory_space<vmem>>, %arg18: memref<3x1x256xf32, #tpu.memory_space<vmem>>, %arg19: memref<3x256x64xbf16, #tpu.memory_space<vmem>>, %arg20: memref<3x1x64xf32, #tpu.memory_space<vmem>>, %arg21: memref<3x64x64xbf16, #tpu.memory_space<vmem>>, %arg22: memref<3x1x64xf32, #tpu.memory_space<vmem>>, %arg23: memref<64x128xbf16, #tpu.memory_space<vmem>>, %arg24: memref<1x128xf32, #tpu.memory_space<vmem>>, %arg25: memref<32x128xf32, #tpu.memory_space<vmem>>) attributes {dimension_semantics = [#tpu.dimension_semantics<parallel>], iteration_bounds = array<i64: 1>, scalar_prefetch = 0 : i64, scratch_operands = 0 : i64, tpu.core_type = #tpu.core_type<tc>, window_params = [{transform_indices = @transform_0, window_bounds = array<i64: 32, 3>}, {pipeline_mode = #tpu.pipeline_mode<synchronous>, transform_indices = @transform_1, window_bounds = array<i64: 3, 64, 128>}, {pipeline_mode = #tpu.pipeline_mode<synchronous>, transform_indices = @transform_2, window_bounds = array<i64: 3, 128, 64>}, {pipeline_mode = #tpu.pipeline_mode<synchronous>, transform_indices = @transform_3, window_bounds = array<i64: 128, 128>}, {pipeline_mode = #tpu.pipeline_mode<synchronous>, transform_indices = @transform_4, window_bounds = array<i64: 3, 64>}, {pipeline_mode = #tpu.pipeline_mode<synchronous>, transform_indices = @transform_5, window_bounds = array<i64: 1, 64>}, {pipeline_mode = #tpu.pipeline_mode<synchronous>, transform_indices = @transform_6, window_bounds = array<i64: 2, 64, 64>}, {pipeline_mode = #tpu.pipeline_mode<synchronous>, transform_indices = @transform_7, window_bounds = array<i64: 2, 1, 64>}, {pipeline_mode = #tpu.pipeline_mode<synchronous>, transform_indices = @transform_8, window_bounds = array<i64: 3, 1, 64>}, {pipeline_mode = #tpu.pipeline_mode<synchronous>, transform_indices = @transform_9, window_bounds = array<i64: 3, 1, 64>}, {pipeline_mode = #tpu.pipeline_mode<synchronous>, transform_indices = @transform_10, window_bounds = array<i64: 3, 1, 64>}, {pipeline_mode = #tpu.pipeline_mode<synchronous>, transform_indices = @transform_11, window_bounds = array<i64: 3, 1, 64>}, {pipeline_mode = #tpu.pipeline_mode<synchronous>, transform_indices = @transform_12, window_bounds = array<i64: 3, 64, 64>}, {pipeline_mode = #tpu.pipeline_mode<synchronous>, transform_indices = @transform_13, window_bounds = array<i64: 3, 1, 64>}, {pipeline_mode = #tpu.pipeline_mode<synchronous>, transform_indices = @transform_14, window_bounds = array<i64: 3, 64, 64>}, {pipeline_mode = #tpu.pipeline_mode<synchronous>, transform_indices = @transform_15, window_bounds = array<i64: 3, 1, 64>}, {pipeline_mode = #tpu.pipeline_mode<synchronous>, transform_indices = @transform_16, window_bounds = array<i64: 3, 64, 256>}, {pipeline_mode = #tpu.pipeline_mode<synchronous>, transform_indices = @transform_17, window_bounds = array<i64: 3, 1, 256>}, {pipeline_mode = #tpu.pipeline_mode<synchronous>, transform_indices = @transform_18, window_bounds = array<i64: 3, 256, 64>}, {pipeline_mode = #tpu.pipeline_mode<synchronous>, transform_indices = @transform_19, window_bounds = array<i64: 3, 1, 64>}, {pipeline_mode = #tpu.pipeline_mode<synchronous>, transform_indices = @transform_20, window_bounds = array<i64: 3, 64, 64>}, {pipeline_mode = #tpu.pipeline_mode<synchronous>, transform_indices = @transform_21, window_bounds = array<i64: 3, 1, 64>}, {pipeline_mode = #tpu.pipeline_mode<synchronous>, transform_indices = @transform_22, window_bounds = array<i64: 64, 128>}, {pipeline_mode = #tpu.pipeline_mode<synchronous>, transform_indices = @transform_23, window_bounds = array<i64: 1, 128>}, {transform_indices = @transform_24, window_bounds = array<i64: 32, 128>}]} {
    %c0 = arith.constant 0 : index
    %c0_0 = arith.constant 0 : index
    %0 = vector.load %arg1[%c0, %c0_0] : memref<32x3xf32, #tpu.memory_space<vmem>>, vector<32x3xf32>
    %c0_1 = arith.constant 0 : index
    %c0_2 = arith.constant 0 : index
    %1 = vector.load %arg5[%c0_1, %c0_2] : memref<3x64xf32, #tpu.memory_space<vmem>>, vector<3x64xf32>
    %c0_3 = arith.constant 0 : index
    %c0_4 = arith.constant 0 : index
    %2 = vector.load %arg6[%c0_3, %c0_4] : memref<1x64xf32, #tpu.memory_space<vmem>>, vector<1x64xf32>
    %cst = arith.constant dense<0.000000e+00> : vector<32x64xf32>
    %3 = tpu.matmul %0, %1, %cst {dimension_numbers = #tpu.dot_dimension_numbers<[1], [0], [0], [1], [0, 0, 1, 1], [], []>} : vector<32x3xf32>, vector<3x64xf32>, vector<32x64xf32> -> vector<32x64xf32>
    %4 = vector.broadcast %2 : vector<1x64xf32> to vector<32x64xf32>
    %5 = arith.addf %3, %4 : vector<32x64xf32>
    %cst_5 = arith.constant 5.000000e-01 : f32
    %6 = vector.broadcast %cst_5 : f32 to vector<32x64xf32>
    %7 = arith.mulf %6, %5 : vector<32x64xf32>
    %cst_6 = arith.constant 0.707106769 : f32
    %8 = vector.broadcast %cst_6 : f32 to vector<32x64xf32>
    %9 = arith.mulf %5, %8 : vector<32x64xf32>
    %10 = math.erf %9 : vector<32x64xf32>
    %cst_7 = arith.constant 1.000000e+00 : f32
    %11 = vector.broadcast %cst_7 : f32 to vector<32x64xf32>
    %12 = arith.addf %11, %10 : vector<32x64xf32>
    %13 = arith.mulf %7, %12 : vector<32x64xf32>
    %c0_8 = arith.constant 0 : index
    %c0_9 = arith.constant 0 : index
    %c0_10 = arith.constant 0 : index
    %14 = vector.load %arg7[%c0_8, %c0_9, %c0_10] : memref<2x64x64xbf16, #tpu.memory_space<vmem>>, vector<1x64x64xbf16>
    %15 = vector.shape_cast %14 : vector<1x64x64xbf16> to vector<64x64xbf16>
    %c0_11 = arith.constant 0 : index
    %c0_12 = arith.constant 0 : index
    %c0_13 = arith.constant 0 : index
    %16 = vector.load %arg8[%c0_11, %c0_12, %c0_13] : memref<2x1x64xf32, #tpu.memory_space<vmem>>, vector<1x1x64xf32>
    %17 = vector.shape_cast %16 : vector<1x1x64xf32> to vector<1x64xf32>
    %18 = arith.truncf %13 : vector<32x64xf32> to vector<32x64xbf16>
    %cst_14 = arith.constant dense<0.000000e+00> : vector<32x64xf32>
    %19 = tpu.matmul %18, %15, %cst_14 {dimension_numbers = #tpu.dot_dimension_numbers<[1], [0], [0], [1], [0, 0, 1, 1], [], []>} : vector<32x64xbf16>, vector<64x64xbf16>, vector<32x64xf32> -> vector<32x64xf32>
    %20 = vector.broadcast %17 : vector<1x64xf32> to vector<32x64xf32>
    %21 = arith.addf %19, %20 : vector<32x64xf32>
    %cst_15 = arith.constant 5.000000e-01 : f32
    %22 = vector.broadcast %cst_15 : f32 to vector<32x64xf32>
    %23 = arith.mulf %22, %21 : vector<32x64xf32>
    %cst_16 = arith.constant 0.707106769 : f32
    %24 = vector.broadcast %cst_16 : f32 to vector<32x64xf32>
    %25 = arith.mulf %21, %24 : vector<32x64xf32>
    %26 = math.erf %25 : vector<32x64xf32>
    %cst_17 = arith.constant 1.000000e+00 : f32
    %27 = vector.broadcast %cst_17 : f32 to vector<32x64xf32>
    %28 = arith.addf %27, %26 : vector<32x64xf32>
    %29 = arith.mulf %23, %28 : vector<32x64xf32>
    %c1 = arith.constant 1 : index
    %c0_18 = arith.constant 0 : index
    %c0_19 = arith.constant 0 : index
    %30 = vector.load %arg7[%c1, %c0_18, %c0_19] : memref<2x64x64xbf16, #tpu.memory_space<vmem>>, vector<1x64x64xbf16>
    %31 = vector.shape_cast %30 : vector<1x64x64xbf16> to vector<64x64xbf16>
    %c1_20 = arith.constant 1 : index
    %c0_21 = arith.constant 0 : index
    %c0_22 = arith.constant 0 : index
    %32 = vector.load %arg8[%c1_20, %c0_21, %c0_22] : memref<2x1x64xf32, #tpu.memory_space<vmem>>, vector<1x1x64xf32>
    %33 = vector.shape_cast %32 : vector<1x1x64xf32> to vector<1x64xf32>
    %34 = arith.truncf %29 : vector<32x64xf32> to vector<32x64xbf16>
    %cst_23 = arith.constant dense<0.000000e+00> : vector<32x64xf32>
    %35 = tpu.matmul %34, %31, %cst_23 {dimension_numbers = #tpu.dot_dimension_numbers<[1], [0], [0], [1], [0, 0, 1, 1], [], []>} : vector<32x64xbf16>, vector<64x64xbf16>, vector<32x64xf32> -> vector<32x64xf32>
    %36 = vector.broadcast %33 : vector<1x64xf32> to vector<32x64xf32>
    %37 = arith.addf %35, %36 : vector<32x64xf32>
    %c0_24 = arith.constant 0 : index
    %c0_25 = arith.constant 0 : index
    %c0_26 = arith.constant 0 : index
    %38 = vector.load %arg9[%c0_24, %c0_25, %c0_26] : memref<3x1x64xf32, #tpu.memory_space<vmem>>, vector<1x1x64xf32>
    %39 = vector.shape_cast %38 : vector<1x1x64xf32> to vector<1x64xf32>
    %c0_27 = arith.constant 0 : index
    %c0_28 = arith.constant 0 : index
    %c0_29 = arith.constant 0 : index
    %40 = vector.load %arg10[%c0_27, %c0_28, %c0_29] : memref<3x1x64xf32, #tpu.memory_space<vmem>>, vector<1x1x64xf32>
    %41 = vector.shape_cast %40 : vector<1x1x64xf32> to vector<1x64xf32>
    %cst_30 = arith.constant dense<0.000000e+00> : vector<32xf32>
    %42 = vector.multi_reduction <add>, %37, %cst_30 [1] : vector<32x64xf32> to vector<32xf32>
    %43 = vector.shape_cast %42 : vector<32xf32> to vector<32x1xf32>
    %cst_31 = arith.constant 6.400000e+01 : f32
    %44 = vector.broadcast %cst_31 : f32 to vector<32x1xf32>
    %45 = arith.divf %43, %44 : vector<32x1xf32>
    %46 = vector.broadcast %45 : vector<32x1xf32> to vector<32x64xf32>
    %47 = arith.subf %37, %46 : vector<32x64xf32>
    %48 = arith.mulf %47, %47 : vector<32x64xf32>
    %cst_32 = arith.constant dense<0.000000e+00> : vector<32xf32>
    %49 = vector.multi_reduction <add>, %48, %cst_32 [1] : vector<32x64xf32> to vector<32xf32>
    %50 = vector.shape_cast %49 : vector<32xf32> to vector<32x1xf32>
    %cst_33 = arith.constant 6.400000e+01 : f32
    %51 = vector.broadcast %cst_33 : f32 to vector<32x1xf32>
    %52 = arith.divf %50, %51 : vector<32x1xf32>
    %53 = vector.broadcast %45 : vector<32x1xf32> to vector<32x64xf32>
    %54 = arith.subf %37, %53 : vector<32x64xf32>
    %cst_34 = arith.constant 9.99999974E-6 : f32
    %55 = vector.broadcast %cst_34 : f32 to vector<32x1xf32>
    %56 = arith.addf %52, %55 : vector<32x1xf32>
    %57 = math.rsqrt %56 : vector<32x1xf32>
    %58 = vector.broadcast %57 : vector<32x1xf32> to vector<32x64xf32>
    %59 = arith.mulf %54, %58 : vector<32x64xf32>
    %60 = vector.broadcast %39 : vector<1x64xf32> to vector<32x64xf32>
    %61 = arith.mulf %59, %60 : vector<32x64xf32>
    %62 = vector.broadcast %41 : vector<1x64xf32> to vector<32x64xf32>
    %63 = arith.addf %61, %62 : vector<32x64xf32>
    %c0_35 = arith.constant 0 : index
    %c0_36 = arith.constant 0 : index
    %c0_37 = arith.constant 0 : index
    %64 = vector.load %arg13[%c0_35, %c0_36, %c0_37] : memref<3x64x64xbf16, #tpu.memory_space<vmem>>, vector<1x64x64xbf16>
    %65 = vector.shape_cast %64 : vector<1x64x64xbf16> to vector<64x64xbf16>
    %c0_38 = arith.constant 0 : index
    %c0_39 = arith.constant 0 : index
    %c0_40 = arith.constant 0 : index
    %66 = vector.load %arg14[%c0_38, %c0_39, %c0_40] : memref<3x1x64xf32, #tpu.memory_space<vmem>>, vector<1x1x64xf32>
    %67 = vector.shape_cast %66 : vector<1x1x64xf32> to vector<1x64xf32>
    %68 = arith.truncf %63 : vector<32x64xf32> to vector<32x64xbf16>
    %cst_41 = arith.constant dense<0.000000e+00> : vector<32x64xf32>
    %69 = tpu.matmul %68, %65, %cst_41 {dimension_numbers = #tpu.dot_dimension_numbers<[1], [0], [0], [1], [0, 0, 1, 1], [], []>} : vector<32x64xbf16>, vector<64x64xbf16>, vector<32x64xf32> -> vector<32x64xf32>
    %70 = vector.broadcast %67 : vector<1x64xf32> to vector<32x64xf32>
    %71 = arith.addf %69, %70 : vector<32x64xf32>
    %72 = arith.truncf %71 : vector<32x64xf32> to vector<32x64xbf16>
    %c0_42 = arith.constant 0 : index
    %c0_43 = arith.constant 0 : index
    %c0_44 = arith.constant 0 : index
    %73 = vector.load %arg2[%c0_42, %c0_43, %c0_44] : memref<3x64x128xbf16, #tpu.memory_space<vmem>>, vector<1x64x128xbf16>
    %74 = vector.shape_cast %73 : vector<1x64x128xbf16> to vector<64x128xbf16>
    %cst_45 = arith.constant dense<0.000000e+00> : vector<32x128xf32>
    %75 = tpu.matmul %72, %74, %cst_45 {dimension_numbers = #tpu.dot_dimension_numbers<[1], [0], [0], [1], [0, 0, 1, 1], [], []>} : vector<32x64xbf16>, vector<64x128xbf16>, vector<32x128xf32> -> vector<32x128xf32>
    %cst_46 = arith.constant dense<0xFF800000> : vector<32xf32>
    %76 = vector.multi_reduction <maximumf>, %75, %cst_46 [1] : vector<32x128xf32> to vector<32xf32>
    %77 = vector.shape_cast %76 : vector<32xf32> to vector<32x1xf32>
    %78 = vector.broadcast %77 : vector<32x1xf32> to vector<32x128xf32>
    %79 = arith.subf %75, %78 : vector<32x128xf32>
    %80 = math.exp %79 : vector<32x128xf32>
    %c0_47 = arith.constant 0 : index
    %c0_48 = arith.constant 0 : index
    %81 = vector.load %arg4[%c0_47, %c0_48] : memref<128x128xf32, #tpu.memory_space<vmem>>, vector<128x128xf32>
    %cst_49 = arith.constant dense<0.000000e+00> : vector<32x128xf32>
    %82 = tpu.matmul %80, %81, %cst_49 {dimension_numbers = #tpu.dot_dimension_numbers<[1], [0], [0], [1], [0, 0, 1, 1], [], []>} : vector<32x128xf32>, vector<128x128xf32>, vector<32x128xf32> -> vector<32x128xf32>
    %cst_50 = arith.constant 1.000000e-30 : f32
    %83 = vector.broadcast %cst_50 : f32 to vector<32x128xf32>
    %84 = arith.maximumf %82, %83 : vector<32x128xf32>
    %85 = arith.divf %80, %84 : vector<32x128xf32>
    %86 = arith.truncf %85 : vector<32x128xf32> to vector<32x128xbf16>
    %c0_51 = arith.constant 0 : index
    %c0_52 = arith.constant 0 : index
    %c0_53 = arith.constant 0 : index
    %87 = vector.load %arg3[%c0_51, %c0_52, %c0_53] : memref<3x128x64xbf16, #tpu.memory_space<vmem>>, vector<1x128x64xbf16>
    %88 = vector.shape_cast %87 : vector<1x128x64xbf16> to vector<128x64xbf16>
    %cst_54 = arith.constant dense<0.000000e+00> : vector<32x64xf32>
    %89 = tpu.matmul %86, %88, %cst_54 {dimension_numbers = #tpu.dot_dimension_numbers<[1], [0], [0], [1], [0, 0, 1, 1], [], []>} : vector<32x128xbf16>, vector<128x64xbf16>, vector<32x64xf32> -> vector<32x64xf32>
    %c0_55 = arith.constant 0 : index
    %c0_56 = arith.constant 0 : index
    %c0_57 = arith.constant 0 : index
    %90 = vector.load %arg15[%c0_55, %c0_56, %c0_57] : memref<3x64x64xbf16, #tpu.memory_space<vmem>>, vector<1x64x64xbf16>
    %91 = vector.shape_cast %90 : vector<1x64x64xbf16> to vector<64x64xbf16>
    %c0_58 = arith.constant 0 : index
    %c0_59 = arith.constant 0 : index
    %c0_60 = arith.constant 0 : index
    %92 = vector.load %arg16[%c0_58, %c0_59, %c0_60] : memref<3x1x64xf32, #tpu.memory_space<vmem>>, vector<1x1x64xf32>
    %93 = vector.shape_cast %92 : vector<1x1x64xf32> to vector<1x64xf32>
    %94 = arith.truncf %89 : vector<32x64xf32> to vector<32x64xbf16>
    %cst_61 = arith.constant dense<0.000000e+00> : vector<32x64xf32>
    %95 = tpu.matmul %94, %91, %cst_61 {dimension_numbers = #tpu.dot_dimension_numbers<[1], [0], [0], [1], [0, 0, 1, 1], [], []>} : vector<32x64xbf16>, vector<64x64xbf16>, vector<32x64xf32> -> vector<32x64xf32>
    %96 = vector.broadcast %93 : vector<1x64xf32> to vector<32x64xf32>
    %97 = arith.addf %95, %96 : vector<32x64xf32>
    %98 = arith.addf %37, %97 : vector<32x64xf32>
    %c0_62 = arith.constant 0 : index
    %c0_63 = arith.constant 0 : index
    %c0_64 = arith.constant 0 : index
    %99 = vector.load %arg11[%c0_62, %c0_63, %c0_64] : memref<3x1x64xf32, #tpu.memory_space<vmem>>, vector<1x1x64xf32>
    %100 = vector.shape_cast %99 : vector<1x1x64xf32> to vector<1x64xf32>
    %c0_65 = arith.constant 0 : index
    %c0_66 = arith.constant 0 : index
    %c0_67 = arith.constant 0 : index
    %101 = vector.load %arg12[%c0_65, %c0_66, %c0_67] : memref<3x1x64xf32, #tpu.memory_space<vmem>>, vector<1x1x64xf32>
    %102 = vector.shape_cast %101 : vector<1x1x64xf32> to vector<1x64xf32>
    %cst_68 = arith.constant dense<0.000000e+00> : vector<32xf32>
    %103 = vector.multi_reduction <add>, %98, %cst_68 [1] : vector<32x64xf32> to vector<32xf32>
    %104 = vector.shape_cast %103 : vector<32xf32> to vector<32x1xf32>
    %cst_69 = arith.constant 6.400000e+01 : f32
    %105 = vector.broadcast %cst_69 : f32 to vector<32x1xf32>
    %106 = arith.divf %104, %105 : vector<32x1xf32>
    %107 = vector.broadcast %106 : vector<32x1xf32> to vector<32x64xf32>
    %108 = arith.subf %98, %107 : vector<32x64xf32>
    %109 = arith.mulf %108, %108 : vector<32x64xf32>
    %cst_70 = arith.constant dense<0.000000e+00> : vector<32xf32>
    %110 = vector.multi_reduction <add>, %109, %cst_70 [1] : vector<32x64xf32> to vector<32xf32>
    %111 = vector.shape_cast %110 : vector<32xf32> to vector<32x1xf32>
    %cst_71 = arith.constant 6.400000e+01 : f32
    %112 = vector.broadcast %cst_71 : f32 to vector<32x1xf32>
    %113 = arith.divf %111, %112 : vector<32x1xf32>
    %114 = vector.broadcast %106 : vector<32x1xf32> to vector<32x64xf32>
    %115 = arith.subf %98, %114 : vector<32x64xf32>
    %cst_72 = arith.constant 9.99999974E-6 : f32
    %116 = vector.broadcast %cst_72 : f32 to vector<32x1xf32>
    %117 = arith.addf %113, %116 : vector<32x1xf32>
    %118 = math.rsqrt %117 : vector<32x1xf32>
    %119 = vector.broadcast %118 : vector<32x1xf32> to vector<32x64xf32>
    %120 = arith.mulf %115, %119 : vector<32x64xf32>
    %121 = vector.broadcast %100 : vector<1x64xf32> to vector<32x64xf32>
    %122 = arith.mulf %120, %121 : vector<32x64xf32>
    %123 = vector.broadcast %102 : vector<1x64xf32> to vector<32x64xf32>
    %124 = arith.addf %122, %123 : vector<32x64xf32>
    %c0_73 = arith.constant 0 : index
    %c0_74 = arith.constant 0 : index
    %c0_75 = arith.constant 0 : index
    %125 = vector.load %arg17[%c0_73, %c0_74, %c0_75] : memref<3x64x256xbf16, #tpu.memory_space<vmem>>, vector<1x64x256xbf16>
    %126 = vector.shape_cast %125 : vector<1x64x256xbf16> to vector<64x256xbf16>
    %c0_76 = arith.constant 0 : index
    %c0_77 = arith.constant 0 : index
    %c0_78 = arith.constant 0 : index
    %127 = vector.load %arg18[%c0_76, %c0_77, %c0_78] : memref<3x1x256xf32, #tpu.memory_space<vmem>>, vector<1x1x256xf32>
    %128 = vector.shape_cast %127 : vector<1x1x256xf32> to vector<1x256xf32>
    %129 = arith.truncf %124 : vector<32x64xf32> to vector<32x64xbf16>
    %cst_79 = arith.constant dense<0.000000e+00> : vector<32x256xf32>
    %130 = tpu.matmul %129, %126, %cst_79 {dimension_numbers = #tpu.dot_dimension_numbers<[1], [0], [0], [1], [0, 0, 1, 1], [], []>} : vector<32x64xbf16>, vector<64x256xbf16>, vector<32x256xf32> -> vector<32x256xf32>
    %131 = vector.broadcast %128 : vector<1x256xf32> to vector<32x256xf32>
    %132 = arith.addf %130, %131 : vector<32x256xf32>
    %cst_80 = arith.constant 5.000000e-01 : f32
    %133 = vector.broadcast %cst_80 : f32 to vector<32x256xf32>
    %134 = arith.mulf %133, %132 : vector<32x256xf32>
    %cst_81 = arith.constant 0.707106769 : f32
    %135 = vector.broadcast %cst_81 : f32 to vector<32x256xf32>
    %136 = arith.mulf %132, %135 : vector<32x256xf32>
    %137 = math.erf %136 : vector<32x256xf32>
    %cst_82 = arith.constant 1.000000e+00 : f32
    %138 = vector.broadcast %cst_82 : f32 to vector<32x256xf32>
    %139 = arith.addf %138, %137 : vector<32x256xf32>
    %140 = arith.mulf %134, %139 : vector<32x256xf32>
    %c0_83 = arith.constant 0 : index
    %c0_84 = arith.constant 0 : index
    %c0_85 = arith.constant 0 : index
    %141 = vector.load %arg19[%c0_83, %c0_84, %c0_85] : memref<3x256x64xbf16, #tpu.memory_space<vmem>>, vector<1x256x64xbf16>
    %142 = vector.shape_cast %141 : vector<1x256x64xbf16> to vector<256x64xbf16>
    %c0_86 = arith.constant 0 : index
    %c0_87 = arith.constant 0 : index
    %c0_88 = arith.constant 0 : index
    %143 = vector.load %arg20[%c0_86, %c0_87, %c0_88] : memref<3x1x64xf32, #tpu.memory_space<vmem>>, vector<1x1x64xf32>
    %144 = vector.shape_cast %143 : vector<1x1x64xf32> to vector<1x64xf32>
    %145 = arith.truncf %140 : vector<32x256xf32> to vector<32x256xbf16>
    %cst_89 = arith.constant dense<0.000000e+00> : vector<32x64xf32>
    %146 = tpu.matmul %145, %142, %cst_89 {dimension_numbers = #tpu.dot_dimension_numbers<[1], [0], [0], [1], [0, 0, 1, 1], [], []>} : vector<32x256xbf16>, vector<256x64xbf16>, vector<32x64xf32> -> vector<32x64xf32>
    %147 = vector.broadcast %144 : vector<1x64xf32> to vector<32x64xf32>
    %148 = arith.addf %146, %147 : vector<32x64xf32>
    %149 = arith.addf %98, %148 : vector<32x64xf32>
    %c1_90 = arith.constant 1 : index
    %c0_91 = arith.constant 0 : index
    %c0_92 = arith.constant 0 : index
    %150 = vector.load %arg9[%c1_90, %c0_91, %c0_92] : memref<3x1x64xf32, #tpu.memory_space<vmem>>, vector<1x1x64xf32>
    %151 = vector.shape_cast %150 : vector<1x1x64xf32> to vector<1x64xf32>
    %c1_93 = arith.constant 1 : index
    %c0_94 = arith.constant 0 : index
    %c0_95 = arith.constant 0 : index
    %152 = vector.load %arg10[%c1_93, %c0_94, %c0_95] : memref<3x1x64xf32, #tpu.memory_space<vmem>>, vector<1x1x64xf32>
    %153 = vector.shape_cast %152 : vector<1x1x64xf32> to vector<1x64xf32>
    %cst_96 = arith.constant dense<0.000000e+00> : vector<32xf32>
    %154 = vector.multi_reduction <add>, %149, %cst_96 [1] : vector<32x64xf32> to vector<32xf32>
    %155 = vector.shape_cast %154 : vector<32xf32> to vector<32x1xf32>
    %cst_97 = arith.constant 6.400000e+01 : f32
    %156 = vector.broadcast %cst_97 : f32 to vector<32x1xf32>
    %157 = arith.divf %155, %156 : vector<32x1xf32>
    %158 = vector.broadcast %157 : vector<32x1xf32> to vector<32x64xf32>
    %159 = arith.subf %149, %158 : vector<32x64xf32>
    %160 = arith.mulf %159, %159 : vector<32x64xf32>
    %cst_98 = arith.constant dense<0.000000e+00> : vector<32xf32>
    %161 = vector.multi_reduction <add>, %160, %cst_98 [1] : vector<32x64xf32> to vector<32xf32>
    %162 = vector.shape_cast %161 : vector<32xf32> to vector<32x1xf32>
    %cst_99 = arith.constant 6.400000e+01 : f32
    %163 = vector.broadcast %cst_99 : f32 to vector<32x1xf32>
    %164 = arith.divf %162, %163 : vector<32x1xf32>
    %165 = vector.broadcast %157 : vector<32x1xf32> to vector<32x64xf32>
    %166 = arith.subf %149, %165 : vector<32x64xf32>
    %cst_100 = arith.constant 9.99999974E-6 : f32
    %167 = vector.broadcast %cst_100 : f32 to vector<32x1xf32>
    %168 = arith.addf %164, %167 : vector<32x1xf32>
    %169 = math.rsqrt %168 : vector<32x1xf32>
    %170 = vector.broadcast %169 : vector<32x1xf32> to vector<32x64xf32>
    %171 = arith.mulf %166, %170 : vector<32x64xf32>
    %172 = vector.broadcast %151 : vector<1x64xf32> to vector<32x64xf32>
    %173 = arith.mulf %171, %172 : vector<32x64xf32>
    %174 = vector.broadcast %153 : vector<1x64xf32> to vector<32x64xf32>
    %175 = arith.addf %173, %174 : vector<32x64xf32>
    %c1_101 = arith.constant 1 : index
    %c0_102 = arith.constant 0 : index
    %c0_103 = arith.constant 0 : index
    %176 = vector.load %arg13[%c1_101, %c0_102, %c0_103] : memref<3x64x64xbf16, #tpu.memory_space<vmem>>, vector<1x64x64xbf16>
    %177 = vector.shape_cast %176 : vector<1x64x64xbf16> to vector<64x64xbf16>
    %c1_104 = arith.constant 1 : index
    %c0_105 = arith.constant 0 : index
    %c0_106 = arith.constant 0 : index
    %178 = vector.load %arg14[%c1_104, %c0_105, %c0_106] : memref<3x1x64xf32, #tpu.memory_space<vmem>>, vector<1x1x64xf32>
    %179 = vector.shape_cast %178 : vector<1x1x64xf32> to vector<1x64xf32>
    %180 = arith.truncf %175 : vector<32x64xf32> to vector<32x64xbf16>
    %cst_107 = arith.constant dense<0.000000e+00> : vector<32x64xf32>
    %181 = tpu.matmul %180, %177, %cst_107 {dimension_numbers = #tpu.dot_dimension_numbers<[1], [0], [0], [1], [0, 0, 1, 1], [], []>} : vector<32x64xbf16>, vector<64x64xbf16>, vector<32x64xf32> -> vector<32x64xf32>
    %182 = vector.broadcast %179 : vector<1x64xf32> to vector<32x64xf32>
    %183 = arith.addf %181, %182 : vector<32x64xf32>
    %184 = arith.truncf %183 : vector<32x64xf32> to vector<32x64xbf16>
    %c1_108 = arith.constant 1 : index
    %c0_109 = arith.constant 0 : index
    %c0_110 = arith.constant 0 : index
    %185 = vector.load %arg2[%c1_108, %c0_109, %c0_110] : memref<3x64x128xbf16, #tpu.memory_space<vmem>>, vector<1x64x128xbf16>
    %186 = vector.shape_cast %185 : vector<1x64x128xbf16> to vector<64x128xbf16>
    %cst_111 = arith.constant dense<0.000000e+00> : vector<32x128xf32>
    %187 = tpu.matmul %184, %186, %cst_111 {dimension_numbers = #tpu.dot_dimension_numbers<[1], [0], [0], [1], [0, 0, 1, 1], [], []>} : vector<32x64xbf16>, vector<64x128xbf16>, vector<32x128xf32> -> vector<32x128xf32>
    %cst_112 = arith.constant dense<0xFF800000> : vector<32xf32>
    %188 = vector.multi_reduction <maximumf>, %187, %cst_112 [1] : vector<32x128xf32> to vector<32xf32>
    %189 = vector.shape_cast %188 : vector<32xf32> to vector<32x1xf32>
    %190 = vector.broadcast %189 : vector<32x1xf32> to vector<32x128xf32>
    %191 = arith.subf %187, %190 : vector<32x128xf32>
    %192 = math.exp %191 : vector<32x128xf32>
    %c0_113 = arith.constant 0 : index
    %c0_114 = arith.constant 0 : index
    %193 = vector.load %arg4[%c0_113, %c0_114] : memref<128x128xf32, #tpu.memory_space<vmem>>, vector<128x128xf32>
    %cst_115 = arith.constant dense<0.000000e+00> : vector<32x128xf32>
    %194 = tpu.matmul %192, %193, %cst_115 {dimension_numbers = #tpu.dot_dimension_numbers<[1], [0], [0], [1], [0, 0, 1, 1], [], []>} : vector<32x128xf32>, vector<128x128xf32>, vector<32x128xf32> -> vector<32x128xf32>
    %cst_116 = arith.constant 1.000000e-30 : f32
    %195 = vector.broadcast %cst_116 : f32 to vector<32x128xf32>
    %196 = arith.maximumf %194, %195 : vector<32x128xf32>
    %197 = arith.divf %192, %196 : vector<32x128xf32>
    %198 = arith.truncf %197 : vector<32x128xf32> to vector<32x128xbf16>
    %c1_117 = arith.constant 1 : index
    %c0_118 = arith.constant 0 : index
    %c0_119 = arith.constant 0 : index
    %199 = vector.load %arg3[%c1_117, %c0_118, %c0_119] : memref<3x128x64xbf16, #tpu.memory_space<vmem>>, vector<1x128x64xbf16>
    %200 = vector.shape_cast %199 : vector<1x128x64xbf16> to vector<128x64xbf16>
    %cst_120 = arith.constant dense<0.000000e+00> : vector<32x64xf32>
    %201 = tpu.matmul %198, %200, %cst_120 {dimension_numbers = #tpu.dot_dimension_numbers<[1], [0], [0], [1], [0, 0, 1, 1], [], []>} : vector<32x128xbf16>, vector<128x64xbf16>, vector<32x64xf32> -> vector<32x64xf32>
    %c1_121 = arith.constant 1 : index
    %c0_122 = arith.constant 0 : index
    %c0_123 = arith.constant 0 : index
    %202 = vector.load %arg15[%c1_121, %c0_122, %c0_123] : memref<3x64x64xbf16, #tpu.memory_space<vmem>>, vector<1x64x64xbf16>
    %203 = vector.shape_cast %202 : vector<1x64x64xbf16> to vector<64x64xbf16>
    %c1_124 = arith.constant 1 : index
    %c0_125 = arith.constant 0 : index
    %c0_126 = arith.constant 0 : index
    %204 = vector.load %arg16[%c1_124, %c0_125, %c0_126] : memref<3x1x64xf32, #tpu.memory_space<vmem>>, vector<1x1x64xf32>
    %205 = vector.shape_cast %204 : vector<1x1x64xf32> to vector<1x64xf32>
    %206 = arith.truncf %201 : vector<32x64xf32> to vector<32x64xbf16>
    %cst_127 = arith.constant dense<0.000000e+00> : vector<32x64xf32>
    %207 = tpu.matmul %206, %203, %cst_127 {dimension_numbers = #tpu.dot_dimension_numbers<[1], [0], [0], [1], [0, 0, 1, 1], [], []>} : vector<32x64xbf16>, vector<64x64xbf16>, vector<32x64xf32> -> vector<32x64xf32>
    %208 = vector.broadcast %205 : vector<1x64xf32> to vector<32x64xf32>
    %209 = arith.addf %207, %208 : vector<32x64xf32>
    %210 = arith.addf %149, %209 : vector<32x64xf32>
    %c1_128 = arith.constant 1 : index
    %c0_129 = arith.constant 0 : index
    %c0_130 = arith.constant 0 : index
    %211 = vector.load %arg11[%c1_128, %c0_129, %c0_130] : memref<3x1x64xf32, #tpu.memory_space<vmem>>, vector<1x1x64xf32>
    %212 = vector.shape_cast %211 : vector<1x1x64xf32> to vector<1x64xf32>
    %c1_131 = arith.constant 1 : index
    %c0_132 = arith.constant 0 : index
    %c0_133 = arith.constant 0 : index
    %213 = vector.load %arg12[%c1_131, %c0_132, %c0_133] : memref<3x1x64xf32, #tpu.memory_space<vmem>>, vector<1x1x64xf32>
    %214 = vector.shape_cast %213 : vector<1x1x64xf32> to vector<1x64xf32>
    %cst_134 = arith.constant dense<0.000000e+00> : vector<32xf32>
    %215 = vector.multi_reduction <add>, %210, %cst_134 [1] : vector<32x64xf32> to vector<32xf32>
    %216 = vector.shape_cast %215 : vector<32xf32> to vector<32x1xf32>
    %cst_135 = arith.constant 6.400000e+01 : f32
    %217 = vector.broadcast %cst_135 : f32 to vector<32x1xf32>
    %218 = arith.divf %216, %217 : vector<32x1xf32>
    %219 = vector.broadcast %218 : vector<32x1xf32> to vector<32x64xf32>
    %220 = arith.subf %210, %219 : vector<32x64xf32>
    %221 = arith.mulf %220, %220 : vector<32x64xf32>
    %cst_136 = arith.constant dense<0.000000e+00> : vector<32xf32>
    %222 = vector.multi_reduction <add>, %221, %cst_136 [1] : vector<32x64xf32> to vector<32xf32>
    %223 = vector.shape_cast %222 : vector<32xf32> to vector<32x1xf32>
    %cst_137 = arith.constant 6.400000e+01 : f32
    %224 = vector.broadcast %cst_137 : f32 to vector<32x1xf32>
    %225 = arith.divf %223, %224 : vector<32x1xf32>
    %226 = vector.broadcast %218 : vector<32x1xf32> to vector<32x64xf32>
    %227 = arith.subf %210, %226 : vector<32x64xf32>
    %cst_138 = arith.constant 9.99999974E-6 : f32
    %228 = vector.broadcast %cst_138 : f32 to vector<32x1xf32>
    %229 = arith.addf %225, %228 : vector<32x1xf32>
    %230 = math.rsqrt %229 : vector<32x1xf32>
    %231 = vector.broadcast %230 : vector<32x1xf32> to vector<32x64xf32>
    %232 = arith.mulf %227, %231 : vector<32x64xf32>
    %233 = vector.broadcast %212 : vector<1x64xf32> to vector<32x64xf32>
    %234 = arith.mulf %232, %233 : vector<32x64xf32>
    %235 = vector.broadcast %214 : vector<1x64xf32> to vector<32x64xf32>
    %236 = arith.addf %234, %235 : vector<32x64xf32>
    %c1_139 = arith.constant 1 : index
    %c0_140 = arith.constant 0 : index
    %c0_141 = arith.constant 0 : index
    %237 = vector.load %arg17[%c1_139, %c0_140, %c0_141] : memref<3x64x256xbf16, #tpu.memory_space<vmem>>, vector<1x64x256xbf16>
    %238 = vector.shape_cast %237 : vector<1x64x256xbf16> to vector<64x256xbf16>
    %c1_142 = arith.constant 1 : index
    %c0_143 = arith.constant 0 : index
    %c0_144 = arith.constant 0 : index
    %239 = vector.load %arg18[%c1_142, %c0_143, %c0_144] : memref<3x1x256xf32, #tpu.memory_space<vmem>>, vector<1x1x256xf32>
    %240 = vector.shape_cast %239 : vector<1x1x256xf32> to vector<1x256xf32>
    %241 = arith.truncf %236 : vector<32x64xf32> to vector<32x64xbf16>
    %cst_145 = arith.constant dense<0.000000e+00> : vector<32x256xf32>
    %242 = tpu.matmul %241, %238, %cst_145 {dimension_numbers = #tpu.dot_dimension_numbers<[1], [0], [0], [1], [0, 0, 1, 1], [], []>} : vector<32x64xbf16>, vector<64x256xbf16>, vector<32x256xf32> -> vector<32x256xf32>
    %243 = vector.broadcast %240 : vector<1x256xf32> to vector<32x256xf32>
    %244 = arith.addf %242, %243 : vector<32x256xf32>
    %cst_146 = arith.constant 5.000000e-01 : f32
    %245 = vector.broadcast %cst_146 : f32 to vector<32x256xf32>
    %246 = arith.mulf %245, %244 : vector<32x256xf32>
    %cst_147 = arith.constant 0.707106769 : f32
    %247 = vector.broadcast %cst_147 : f32 to vector<32x256xf32>
    %248 = arith.mulf %244, %247 : vector<32x256xf32>
    %249 = math.erf %248 : vector<32x256xf32>
    %cst_148 = arith.constant 1.000000e+00 : f32
    %250 = vector.broadcast %cst_148 : f32 to vector<32x256xf32>
    %251 = arith.addf %250, %249 : vector<32x256xf32>
    %252 = arith.mulf %246, %251 : vector<32x256xf32>
    %c1_149 = arith.constant 1 : index
    %c0_150 = arith.constant 0 : index
    %c0_151 = arith.constant 0 : index
    %253 = vector.load %arg19[%c1_149, %c0_150, %c0_151] : memref<3x256x64xbf16, #tpu.memory_space<vmem>>, vector<1x256x64xbf16>
    %254 = vector.shape_cast %253 : vector<1x256x64xbf16> to vector<256x64xbf16>
    %c1_152 = arith.constant 1 : index
    %c0_153 = arith.constant 0 : index
    %c0_154 = arith.constant 0 : index
    %255 = vector.load %arg20[%c1_152, %c0_153, %c0_154] : memref<3x1x64xf32, #tpu.memory_space<vmem>>, vector<1x1x64xf32>
    %256 = vector.shape_cast %255 : vector<1x1x64xf32> to vector<1x64xf32>
    %257 = arith.truncf %252 : vector<32x256xf32> to vector<32x256xbf16>
    %cst_155 = arith.constant dense<0.000000e+00> : vector<32x64xf32>
    %258 = tpu.matmul %257, %254, %cst_155 {dimension_numbers = #tpu.dot_dimension_numbers<[1], [0], [0], [1], [0, 0, 1, 1], [], []>} : vector<32x256xbf16>, vector<256x64xbf16>, vector<32x64xf32> -> vector<32x64xf32>
    %259 = vector.broadcast %256 : vector<1x64xf32> to vector<32x64xf32>
    %260 = arith.addf %258, %259 : vector<32x64xf32>
    %261 = arith.addf %210, %260 : vector<32x64xf32>
    %c2 = arith.constant 2 : index
    %c0_156 = arith.constant 0 : index
    %c0_157 = arith.constant 0 : index
    %262 = vector.load %arg9[%c2, %c0_156, %c0_157] : memref<3x1x64xf32, #tpu.memory_space<vmem>>, vector<1x1x64xf32>
    %263 = vector.shape_cast %262 : vector<1x1x64xf32> to vector<1x64xf32>
    %c2_158 = arith.constant 2 : index
    %c0_159 = arith.constant 0 : index
    %c0_160 = arith.constant 0 : index
    %264 = vector.load %arg10[%c2_158, %c0_159, %c0_160] : memref<3x1x64xf32, #tpu.memory_space<vmem>>, vector<1x1x64xf32>
    %265 = vector.shape_cast %264 : vector<1x1x64xf32> to vector<1x64xf32>
    %cst_161 = arith.constant dense<0.000000e+00> : vector<32xf32>
    %266 = vector.multi_reduction <add>, %261, %cst_161 [1] : vector<32x64xf32> to vector<32xf32>
    %267 = vector.shape_cast %266 : vector<32xf32> to vector<32x1xf32>
    %cst_162 = arith.constant 6.400000e+01 : f32
    %268 = vector.broadcast %cst_162 : f32 to vector<32x1xf32>
    %269 = arith.divf %267, %268 : vector<32x1xf32>
    %270 = vector.broadcast %269 : vector<32x1xf32> to vector<32x64xf32>
    %271 = arith.subf %261, %270 : vector<32x64xf32>
    %272 = arith.mulf %271, %271 : vector<32x64xf32>
    %cst_163 = arith.constant dense<0.000000e+00> : vector<32xf32>
    %273 = vector.multi_reduction <add>, %272, %cst_163 [1] : vector<32x64xf32> to vector<32xf32>
    %274 = vector.shape_cast %273 : vector<32xf32> to vector<32x1xf32>
    %cst_164 = arith.constant 6.400000e+01 : f32
    %275 = vector.broadcast %cst_164 : f32 to vector<32x1xf32>
    %276 = arith.divf %274, %275 : vector<32x1xf32>
    %277 = vector.broadcast %269 : vector<32x1xf32> to vector<32x64xf32>
    %278 = arith.subf %261, %277 : vector<32x64xf32>
    %cst_165 = arith.constant 9.99999974E-6 : f32
    %279 = vector.broadcast %cst_165 : f32 to vector<32x1xf32>
    %280 = arith.addf %276, %279 : vector<32x1xf32>
    %281 = math.rsqrt %280 : vector<32x1xf32>
    %282 = vector.broadcast %281 : vector<32x1xf32> to vector<32x64xf32>
    %283 = arith.mulf %278, %282 : vector<32x64xf32>
    %284 = vector.broadcast %263 : vector<1x64xf32> to vector<32x64xf32>
    %285 = arith.mulf %283, %284 : vector<32x64xf32>
    %286 = vector.broadcast %265 : vector<1x64xf32> to vector<32x64xf32>
    %287 = arith.addf %285, %286 : vector<32x64xf32>
    %c2_166 = arith.constant 2 : index
    %c0_167 = arith.constant 0 : index
    %c0_168 = arith.constant 0 : index
    %288 = vector.load %arg13[%c2_166, %c0_167, %c0_168] : memref<3x64x64xbf16, #tpu.memory_space<vmem>>, vector<1x64x64xbf16>
    %289 = vector.shape_cast %288 : vector<1x64x64xbf16> to vector<64x64xbf16>
    %c2_169 = arith.constant 2 : index
    %c0_170 = arith.constant 0 : index
    %c0_171 = arith.constant 0 : index
    %290 = vector.load %arg14[%c2_169, %c0_170, %c0_171] : memref<3x1x64xf32, #tpu.memory_space<vmem>>, vector<1x1x64xf32>
    %291 = vector.shape_cast %290 : vector<1x1x64xf32> to vector<1x64xf32>
    %292 = arith.truncf %287 : vector<32x64xf32> to vector<32x64xbf16>
    %cst_172 = arith.constant dense<0.000000e+00> : vector<32x64xf32>
    %293 = tpu.matmul %292, %289, %cst_172 {dimension_numbers = #tpu.dot_dimension_numbers<[1], [0], [0], [1], [0, 0, 1, 1], [], []>} : vector<32x64xbf16>, vector<64x64xbf16>, vector<32x64xf32> -> vector<32x64xf32>
    %294 = vector.broadcast %291 : vector<1x64xf32> to vector<32x64xf32>
    %295 = arith.addf %293, %294 : vector<32x64xf32>
    %296 = arith.truncf %295 : vector<32x64xf32> to vector<32x64xbf16>
    %c2_173 = arith.constant 2 : index
    %c0_174 = arith.constant 0 : index
    %c0_175 = arith.constant 0 : index
    %297 = vector.load %arg2[%c2_173, %c0_174, %c0_175] : memref<3x64x128xbf16, #tpu.memory_space<vmem>>, vector<1x64x128xbf16>
    %298 = vector.shape_cast %297 : vector<1x64x128xbf16> to vector<64x128xbf16>
    %cst_176 = arith.constant dense<0.000000e+00> : vector<32x128xf32>
    %299 = tpu.matmul %296, %298, %cst_176 {dimension_numbers = #tpu.dot_dimension_numbers<[1], [0], [0], [1], [0, 0, 1, 1], [], []>} : vector<32x64xbf16>, vector<64x128xbf16>, vector<32x128xf32> -> vector<32x128xf32>
    %cst_177 = arith.constant dense<0xFF800000> : vector<32xf32>
    %300 = vector.multi_reduction <maximumf>, %299, %cst_177 [1] : vector<32x128xf32> to vector<32xf32>
    %301 = vector.shape_cast %300 : vector<32xf32> to vector<32x1xf32>
    %302 = vector.broadcast %301 : vector<32x1xf32> to vector<32x128xf32>
    %303 = arith.subf %299, %302 : vector<32x128xf32>
    %304 = math.exp %303 : vector<32x128xf32>
    %c0_178 = arith.constant 0 : index
    %c0_179 = arith.constant 0 : index
    %305 = vector.load %arg4[%c0_178, %c0_179] : memref<128x128xf32, #tpu.memory_space<vmem>>, vector<128x128xf32>
    %cst_180 = arith.constant dense<0.000000e+00> : vector<32x128xf32>
    %306 = tpu.matmul %304, %305, %cst_180 {dimension_numbers = #tpu.dot_dimension_numbers<[1], [0], [0], [1], [0, 0, 1, 1], [], []>} : vector<32x128xf32>, vector<128x128xf32>, vector<32x128xf32> -> vector<32x128xf32>
    %cst_181 = arith.constant 1.000000e-30 : f32
    %307 = vector.broadcast %cst_181 : f32 to vector<32x128xf32>
    %308 = arith.maximumf %306, %307 : vector<32x128xf32>
    %309 = arith.divf %304, %308 : vector<32x128xf32>
    %310 = arith.truncf %309 : vector<32x128xf32> to vector<32x128xbf16>
    %c2_182 = arith.constant 2 : index
    %c0_183 = arith.constant 0 : index
    %c0_184 = arith.constant 0 : index
    %311 = vector.load %arg3[%c2_182, %c0_183, %c0_184] : memref<3x128x64xbf16, #tpu.memory_space<vmem>>, vector<1x128x64xbf16>
    %312 = vector.shape_cast %311 : vector<1x128x64xbf16> to vector<128x64xbf16>
    %cst_185 = arith.constant dense<0.000000e+00> : vector<32x64xf32>
    %313 = tpu.matmul %310, %312, %cst_185 {dimension_numbers = #tpu.dot_dimension_numbers<[1], [0], [0], [1], [0, 0, 1, 1], [], []>} : vector<32x128xbf16>, vector<128x64xbf16>, vector<32x64xf32> -> vector<32x64xf32>
    %c2_186 = arith.constant 2 : index
    %c0_187 = arith.constant 0 : index
    %c0_188 = arith.constant 0 : index
    %314 = vector.load %arg15[%c2_186, %c0_187, %c0_188] : memref<3x64x64xbf16, #tpu.memory_space<vmem>>, vector<1x64x64xbf16>
    %315 = vector.shape_cast %314 : vector<1x64x64xbf16> to vector<64x64xbf16>
    %c2_189 = arith.constant 2 : index
    %c0_190 = arith.constant 0 : index
    %c0_191 = arith.constant 0 : index
    %316 = vector.load %arg16[%c2_189, %c0_190, %c0_191] : memref<3x1x64xf32, #tpu.memory_space<vmem>>, vector<1x1x64xf32>
    %317 = vector.shape_cast %316 : vector<1x1x64xf32> to vector<1x64xf32>
    %318 = arith.truncf %313 : vector<32x64xf32> to vector<32x64xbf16>
    %cst_192 = arith.constant dense<0.000000e+00> : vector<32x64xf32>
    %319 = tpu.matmul %318, %315, %cst_192 {dimension_numbers = #tpu.dot_dimension_numbers<[1], [0], [0], [1], [0, 0, 1, 1], [], []>} : vector<32x64xbf16>, vector<64x64xbf16>, vector<32x64xf32> -> vector<32x64xf32>
    %320 = vector.broadcast %317 : vector<1x64xf32> to vector<32x64xf32>
    %321 = arith.addf %319, %320 : vector<32x64xf32>
    %322 = arith.addf %261, %321 : vector<32x64xf32>
    %c2_193 = arith.constant 2 : index
    %c0_194 = arith.constant 0 : index
    %c0_195 = arith.constant 0 : index
    %323 = vector.load %arg11[%c2_193, %c0_194, %c0_195] : memref<3x1x64xf32, #tpu.memory_space<vmem>>, vector<1x1x64xf32>
    %324 = vector.shape_cast %323 : vector<1x1x64xf32> to vector<1x64xf32>
    %c2_196 = arith.constant 2 : index
    %c0_197 = arith.constant 0 : index
    %c0_198 = arith.constant 0 : index
    %325 = vector.load %arg12[%c2_196, %c0_197, %c0_198] : memref<3x1x64xf32, #tpu.memory_space<vmem>>, vector<1x1x64xf32>
    %326 = vector.shape_cast %325 : vector<1x1x64xf32> to vector<1x64xf32>
    %cst_199 = arith.constant dense<0.000000e+00> : vector<32xf32>
    %327 = vector.multi_reduction <add>, %322, %cst_199 [1] : vector<32x64xf32> to vector<32xf32>
    %328 = vector.shape_cast %327 : vector<32xf32> to vector<32x1xf32>
    %cst_200 = arith.constant 6.400000e+01 : f32
    %329 = vector.broadcast %cst_200 : f32 to vector<32x1xf32>
    %330 = arith.divf %328, %329 : vector<32x1xf32>
    %331 = vector.broadcast %330 : vector<32x1xf32> to vector<32x64xf32>
    %332 = arith.subf %322, %331 : vector<32x64xf32>
    %333 = arith.mulf %332, %332 : vector<32x64xf32>
    %cst_201 = arith.constant dense<0.000000e+00> : vector<32xf32>
    %334 = vector.multi_reduction <add>, %333, %cst_201 [1] : vector<32x64xf32> to vector<32xf32>
    %335 = vector.shape_cast %334 : vector<32xf32> to vector<32x1xf32>
    %cst_202 = arith.constant 6.400000e+01 : f32
    %336 = vector.broadcast %cst_202 : f32 to vector<32x1xf32>
    %337 = arith.divf %335, %336 : vector<32x1xf32>
    %338 = vector.broadcast %330 : vector<32x1xf32> to vector<32x64xf32>
    %339 = arith.subf %322, %338 : vector<32x64xf32>
    %cst_203 = arith.constant 9.99999974E-6 : f32
    %340 = vector.broadcast %cst_203 : f32 to vector<32x1xf32>
    %341 = arith.addf %337, %340 : vector<32x1xf32>
    %342 = math.rsqrt %341 : vector<32x1xf32>
    %343 = vector.broadcast %342 : vector<32x1xf32> to vector<32x64xf32>
    %344 = arith.mulf %339, %343 : vector<32x64xf32>
    %345 = vector.broadcast %324 : vector<1x64xf32> to vector<32x64xf32>
    %346 = arith.mulf %344, %345 : vector<32x64xf32>
    %347 = vector.broadcast %326 : vector<1x64xf32> to vector<32x64xf32>
    %348 = arith.addf %346, %347 : vector<32x64xf32>
    %c2_204 = arith.constant 2 : index
    %c0_205 = arith.constant 0 : index
    %c0_206 = arith.constant 0 : index
    %349 = vector.load %arg17[%c2_204, %c0_205, %c0_206] : memref<3x64x256xbf16, #tpu.memory_space<vmem>>, vector<1x64x256xbf16>
    %350 = vector.shape_cast %349 : vector<1x64x256xbf16> to vector<64x256xbf16>
    %c2_207 = arith.constant 2 : index
    %c0_208 = arith.constant 0 : index
    %c0_209 = arith.constant 0 : index
    %351 = vector.load %arg18[%c2_207, %c0_208, %c0_209] : memref<3x1x256xf32, #tpu.memory_space<vmem>>, vector<1x1x256xf32>
    %352 = vector.shape_cast %351 : vector<1x1x256xf32> to vector<1x256xf32>
    %353 = arith.truncf %348 : vector<32x64xf32> to vector<32x64xbf16>
    %cst_210 = arith.constant dense<0.000000e+00> : vector<32x256xf32>
    %354 = tpu.matmul %353, %350, %cst_210 {dimension_numbers = #tpu.dot_dimension_numbers<[1], [0], [0], [1], [0, 0, 1, 1], [], []>} : vector<32x64xbf16>, vector<64x256xbf16>, vector<32x256xf32> -> vector<32x256xf32>
    %355 = vector.broadcast %352 : vector<1x256xf32> to vector<32x256xf32>
    %356 = arith.addf %354, %355 : vector<32x256xf32>
    %cst_211 = arith.constant 5.000000e-01 : f32
    %357 = vector.broadcast %cst_211 : f32 to vector<32x256xf32>
    %358 = arith.mulf %357, %356 : vector<32x256xf32>
    %cst_212 = arith.constant 0.707106769 : f32
    %359 = vector.broadcast %cst_212 : f32 to vector<32x256xf32>
    %360 = arith.mulf %356, %359 : vector<32x256xf32>
    %361 = math.erf %360 : vector<32x256xf32>
    %cst_213 = arith.constant 1.000000e+00 : f32
    %362 = vector.broadcast %cst_213 : f32 to vector<32x256xf32>
    %363 = arith.addf %362, %361 : vector<32x256xf32>
    %364 = arith.mulf %358, %363 : vector<32x256xf32>
    %c2_214 = arith.constant 2 : index
    %c0_215 = arith.constant 0 : index
    %c0_216 = arith.constant 0 : index
    %365 = vector.load %arg19[%c2_214, %c0_215, %c0_216] : memref<3x256x64xbf16, #tpu.memory_space<vmem>>, vector<1x256x64xbf16>
    %366 = vector.shape_cast %365 : vector<1x256x64xbf16> to vector<256x64xbf16>
    %c2_217 = arith.constant 2 : index
    %c0_218 = arith.constant 0 : index
    %c0_219 = arith.constant 0 : index
    %367 = vector.load %arg20[%c2_217, %c0_218, %c0_219] : memref<3x1x64xf32, #tpu.memory_space<vmem>>, vector<1x1x64xf32>
    %368 = vector.shape_cast %367 : vector<1x1x64xf32> to vector<1x64xf32>
    %369 = arith.truncf %364 : vector<32x256xf32> to vector<32x256xbf16>
    %cst_220 = arith.constant dense<0.000000e+00> : vector<32x64xf32>
    %370 = tpu.matmul %369, %366, %cst_220 {dimension_numbers = #tpu.dot_dimension_numbers<[1], [0], [0], [1], [0, 0, 1, 1], [], []>} : vector<32x256xbf16>, vector<256x64xbf16>, vector<32x64xf32> -> vector<32x64xf32>
    %371 = vector.broadcast %368 : vector<1x64xf32> to vector<32x64xf32>
    %372 = arith.addf %370, %371 : vector<32x64xf32>
    %373 = arith.addf %322, %372 : vector<32x64xf32>
    %c0_221 = arith.constant 0 : index
    %c0_222 = arith.constant 0 : index
    %c0_223 = arith.constant 0 : index
    %374 = vector.load %arg21[%c0_221, %c0_222, %c0_223] : memref<3x64x64xbf16, #tpu.memory_space<vmem>>, vector<1x64x64xbf16>
    %375 = vector.shape_cast %374 : vector<1x64x64xbf16> to vector<64x64xbf16>
    %c0_224 = arith.constant 0 : index
    %c0_225 = arith.constant 0 : index
    %c0_226 = arith.constant 0 : index
    %376 = vector.load %arg22[%c0_224, %c0_225, %c0_226] : memref<3x1x64xf32, #tpu.memory_space<vmem>>, vector<1x1x64xf32>
    %377 = vector.shape_cast %376 : vector<1x1x64xf32> to vector<1x64xf32>
    %378 = arith.truncf %373 : vector<32x64xf32> to vector<32x64xbf16>
    %cst_227 = arith.constant dense<0.000000e+00> : vector<32x64xf32>
    %379 = tpu.matmul %378, %375, %cst_227 {dimension_numbers = #tpu.dot_dimension_numbers<[1], [0], [0], [1], [0, 0, 1, 1], [], []>} : vector<32x64xbf16>, vector<64x64xbf16>, vector<32x64xf32> -> vector<32x64xf32>
    %380 = vector.broadcast %377 : vector<1x64xf32> to vector<32x64xf32>
    %381 = arith.addf %379, %380 : vector<32x64xf32>
    %cst_228 = arith.constant 5.000000e-01 : f32
    %382 = vector.broadcast %cst_228 : f32 to vector<32x64xf32>
    %383 = arith.mulf %382, %381 : vector<32x64xf32>
    %cst_229 = arith.constant 0.707106769 : f32
    %384 = vector.broadcast %cst_229 : f32 to vector<32x64xf32>
    %385 = arith.mulf %381, %384 : vector<32x64xf32>
    %386 = math.erf %385 : vector<32x64xf32>
    %cst_230 = arith.constant 1.000000e+00 : f32
    %387 = vector.broadcast %cst_230 : f32 to vector<32x64xf32>
    %388 = arith.addf %387, %386 : vector<32x64xf32>
    %389 = arith.mulf %383, %388 : vector<32x64xf32>
    %c1_231 = arith.constant 1 : index
    %c0_232 = arith.constant 0 : index
    %c0_233 = arith.constant 0 : index
    %390 = vector.load %arg21[%c1_231, %c0_232, %c0_233] : memref<3x64x64xbf16, #tpu.memory_space<vmem>>, vector<1x64x64xbf16>
    %391 = vector.shape_cast %390 : vector<1x64x64xbf16> to vector<64x64xbf16>
    %c1_234 = arith.constant 1 : index
    %c0_235 = arith.constant 0 : index
    %c0_236 = arith.constant 0 : index
    %392 = vector.load %arg22[%c1_234, %c0_235, %c0_236] : memref<3x1x64xf32, #tpu.memory_space<vmem>>, vector<1x1x64xf32>
    %393 = vector.shape_cast %392 : vector<1x1x64xf32> to vector<1x64xf32>
    %394 = arith.truncf %389 : vector<32x64xf32> to vector<32x64xbf16>
    %cst_237 = arith.constant dense<0.000000e+00> : vector<32x64xf32>
    %395 = tpu.matmul %394, %391, %cst_237 {dimension_numbers = #tpu.dot_dimension_numbers<[1], [0], [0], [1], [0, 0, 1, 1], [], []>} : vector<32x64xbf16>, vector<64x64xbf16>, vector<32x64xf32> -> vector<32x64xf32>
    %396 = vector.broadcast %393 : vector<1x64xf32> to vector<32x64xf32>
    %397 = arith.addf %395, %396 : vector<32x64xf32>
    %cst_238 = arith.constant 5.000000e-01 : f32
    %398 = vector.broadcast %cst_238 : f32 to vector<32x64xf32>
    %399 = arith.mulf %398, %397 : vector<32x64xf32>
    %cst_239 = arith.constant 0.707106769 : f32
    %400 = vector.broadcast %cst_239 : f32 to vector<32x64xf32>
    %401 = arith.mulf %397, %400 : vector<32x64xf32>
    %402 = math.erf %401 : vector<32x64xf32>
    %cst_240 = arith.constant 1.000000e+00 : f32
    %403 = vector.broadcast %cst_240 : f32 to vector<32x64xf32>
    %404 = arith.addf %403, %402 : vector<32x64xf32>
    %405 = arith.mulf %399, %404 : vector<32x64xf32>
    %c2_241 = arith.constant 2 : index
    %c0_242 = arith.constant 0 : index
    %c0_243 = arith.constant 0 : index
    %406 = vector.load %arg21[%c2_241, %c0_242, %c0_243] : memref<3x64x64xbf16, #tpu.memory_space<vmem>>, vector<1x64x64xbf16>
    %407 = vector.shape_cast %406 : vector<1x64x64xbf16> to vector<64x64xbf16>
    %c2_244 = arith.constant 2 : index
    %c0_245 = arith.constant 0 : index
    %c0_246 = arith.constant 0 : index
    %408 = vector.load %arg22[%c2_244, %c0_245, %c0_246] : memref<3x1x64xf32, #tpu.memory_space<vmem>>, vector<1x1x64xf32>
    %409 = vector.shape_cast %408 : vector<1x1x64xf32> to vector<1x64xf32>
    %410 = arith.truncf %405 : vector<32x64xf32> to vector<32x64xbf16>
    %cst_247 = arith.constant dense<0.000000e+00> : vector<32x64xf32>
    %411 = tpu.matmul %410, %407, %cst_247 {dimension_numbers = #tpu.dot_dimension_numbers<[1], [0], [0], [1], [0, 0, 1, 1], [], []>} : vector<32x64xbf16>, vector<64x64xbf16>, vector<32x64xf32> -> vector<32x64xf32>
    %412 = vector.broadcast %409 : vector<1x64xf32> to vector<32x64xf32>
    %413 = arith.addf %411, %412 : vector<32x64xf32>
    %cst_248 = arith.constant 5.000000e-01 : f32
    %414 = vector.broadcast %cst_248 : f32 to vector<32x64xf32>
    %415 = arith.mulf %414, %413 : vector<32x64xf32>
    %cst_249 = arith.constant 0.707106769 : f32
    %416 = vector.broadcast %cst_249 : f32 to vector<32x64xf32>
    %417 = arith.mulf %413, %416 : vector<32x64xf32>
    %418 = math.erf %417 : vector<32x64xf32>
    %cst_250 = arith.constant 1.000000e+00 : f32
    %419 = vector.broadcast %cst_250 : f32 to vector<32x64xf32>
    %420 = arith.addf %419, %418 : vector<32x64xf32>
    %421 = arith.mulf %415, %420 : vector<32x64xf32>
    %c0_251 = arith.constant 0 : index
    %c0_252 = arith.constant 0 : index
    %422 = vector.load %arg23[%c0_251, %c0_252] : memref<64x128xbf16, #tpu.memory_space<vmem>>, vector<64x128xbf16>
    %c0_253 = arith.constant 0 : index
    %c0_254 = arith.constant 0 : index
    %423 = vector.load %arg24[%c0_253, %c0_254] : memref<1x128xf32, #tpu.memory_space<vmem>>, vector<1x128xf32>
    %424 = arith.truncf %421 : vector<32x64xf32> to vector<32x64xbf16>
    %cst_255 = arith.constant dense<0.000000e+00> : vector<32x128xf32>
    %425 = tpu.matmul %424, %422, %cst_255 {dimension_numbers = #tpu.dot_dimension_numbers<[1], [0], [0], [1], [0, 0, 1, 1], [], []>} : vector<32x64xbf16>, vector<64x128xbf16>, vector<32x128xf32> -> vector<32x128xf32>
    %426 = vector.broadcast %423 : vector<1x128xf32> to vector<32x128xf32>
    %427 = arith.addf %425, %426 : vector<32x128xf32>
    %cst_256 = arith.constant 0.000000e+00 : f32
    %428 = vector.broadcast %cst_256 : f32 to vector<32x128xf32>
    %429 = arith.subf %428, %427 : vector<32x128xf32>
    %430 = math.exp %429 : vector<32x128xf32>
    %cst_257 = arith.constant 1.000000e+00 : f32
    %431 = vector.broadcast %cst_257 : f32 to vector<32x128xf32>
    %432 = arith.addf %431, %430 : vector<32x128xf32>
    %cst_258 = arith.constant 1.000000e+00 : f32
    %433 = vector.broadcast %cst_258 : f32 to vector<32x128xf32>
    %434 = arith.divf %433, %432 : vector<32x128xf32>
    %c0_259 = arith.constant 0 : index
    %c0_260 = arith.constant 0 : index
    %435 = vector.load %arg25[%c0_259, %c0_260] : memref<32x128xf32, #tpu.memory_space<vmem>>, vector<32x128xf32>
    tpu.vector_store %arg25[%c0_259, %c0_260], %434 {strides = array<i32>} : memref<32x128xf32, #tpu.memory_space<vmem>>, vector<32x128xf32>,
    return
  }
  func.func @transform_0(%arg0: i32) -> (i32, i32) {
    %c0_i32 = arith.constant 0 : i32
    %c0_i32_0 = arith.constant 0 : i32
    return %arg0, %c0_i32 : i32, i32
  }
  func.func @transform_1(%arg0: i32) -> (i32, i32, i32) {
    %c0_i32 = arith.constant 0 : i32
    %c0_i32_0 = arith.constant 0 : i32
    %c0_i32_1 = arith.constant 0 : i32
    %c0_i32_2 = arith.constant 0 : i32
    return %c0_i32, %c0_i32_0, %c0_i32_1 : i32, i32, i32
  }
  func.func @transform_2(%arg0: i32) -> (i32, i32, i32) {
    %c0_i32 = arith.constant 0 : i32
    %c0_i32_0 = arith.constant 0 : i32
    %c0_i32_1 = arith.constant 0 : i32
    %c0_i32_2 = arith.constant 0 : i32
    return %c0_i32, %c0_i32_0, %c0_i32_1 : i32, i32, i32
  }
  func.func @transform_3(%arg0: i32) -> (i32, i32) {
    %c0_i32 = arith.constant 0 : i32
    %c0_i32_0 = arith.constant 0 : i32
    %c0_i32_1 = arith.constant 0 : i32
    return %c0_i32, %c0_i32_0 : i32, i32
  }
  func.func @transform_4(%arg0: i32) -> (i32, i32) {
    %c0_i32 = arith.constant 0 : i32
    %c0_i32_0 = arith.constant 0 : i32
    %c0_i32_1 = arith.constant 0 : i32
    return %c0_i32, %c0_i32_0 : i32, i32
  }
  func.func @transform_5(%arg0: i32) -> (i32, i32) {
    %c0_i32 = arith.constant 0 : i32
    %c0_i32_0 = arith.constant 0 : i32
    %c0_i32_1 = arith.constant 0 : i32
    return %c0_i32, %c0_i32_0 : i32, i32
  }
  func.func @transform_6(%arg0: i32) -> (i32, i32, i32) {
    %c0_i32 = arith.constant 0 : i32
    %c0_i32_0 = arith.constant 0 : i32
    %c0_i32_1 = arith.constant 0 : i32
    %c0_i32_2 = arith.constant 0 : i32
    return %c0_i32, %c0_i32_0, %c0_i32_1 : i32, i32, i32
  }
  func.func @transform_7(%arg0: i32) -> (i32, i32, i32) {
    %c0_i32 = arith.constant 0 : i32
    %c0_i32_0 = arith.constant 0 : i32
    %c0_i32_1 = arith.constant 0 : i32
    %c0_i32_2 = arith.constant 0 : i32
    return %c0_i32, %c0_i32_0, %c0_i32_1 : i32, i32, i32
  }
  func.func @transform_8(%arg0: i32) -> (i32, i32, i32) {
    %c0_i32 = arith.constant 0 : i32
    %c0_i32_0 = arith.constant 0 : i32
    %c0_i32_1 = arith.constant 0 : i32
    %c0_i32_2 = arith.constant 0 : i32
    return %c0_i32, %c0_i32_0, %c0_i32_1 : i32, i32, i32
  }
  func.func @transform_9(%arg0: i32) -> (i32, i32, i32) {
    %c0_i32 = arith.constant 0 : i32
    %c0_i32_0 = arith.constant 0 : i32
    %c0_i32_1 = arith.constant 0 : i32
    %c0_i32_2 = arith.constant 0 : i32
    return %c0_i32, %c0_i32_0, %c0_i32_1 : i32, i32, i32
  }
  func.func @transform_10(%arg0: i32) -> (i32, i32, i32) {
    %c0_i32 = arith.constant 0 : i32
    %c0_i32_0 = arith.constant 0 : i32
    %c0_i32_1 = arith.constant 0 : i32
    %c0_i32_2 = arith.constant 0 : i32
    return %c0_i32, %c0_i32_0, %c0_i32_1 : i32, i32, i32
  }
  func.func @transform_11(%arg0: i32) -> (i32, i32, i32) {
    %c0_i32 = arith.constant 0 : i32
    %c0_i32_0 = arith.constant 0 : i32
    %c0_i32_1 = arith.constant 0 : i32
    %c0_i32_2 = arith.constant 0 : i32
    return %c0_i32, %c0_i32_0, %c0_i32_1 : i32, i32, i32
  }
  func.func @transform_12(%arg0: i32) -> (i32, i32, i32) {
    %c0_i32 = arith.constant 0 : i32
    %c0_i32_0 = arith.constant 0 : i32
    %c0_i32_1 = arith.constant 0 : i32
    %c0_i32_2 = arith.constant 0 : i32
    return %c0_i32, %c0_i32_0, %c0_i32_1 : i32, i32, i32
  }
  func.func @transform_13(%arg0: i32) -> (i32, i32, i32) {
    %c0_i32 = arith.constant 0 : i32
    %c0_i32_0 = arith.constant 0 : i32
    %c0_i32_1 = arith.constant 0 : i32
    %c0_i32_2 = arith.constant 0 : i32
    return %c0_i32, %c0_i32_0, %c0_i32_1 : i32, i32, i32
  }
  func.func @transform_14(%arg0: i32) -> (i32, i32, i32) {
    %c0_i32 = arith.constant 0 : i32
    %c0_i32_0 = arith.constant 0 : i32
    %c0_i32_1 = arith.constant 0 : i32
    %c0_i32_2 = arith.constant 0 : i32
    return %c0_i32, %c0_i32_0, %c0_i32_1 : i32, i32, i32
  }
  func.func @transform_15(%arg0: i32) -> (i32, i32, i32) {
    %c0_i32 = arith.constant 0 : i32
    %c0_i32_0 = arith.constant 0 : i32
    %c0_i32_1 = arith.constant 0 : i32
    %c0_i32_2 = arith.constant 0 : i32
    return %c0_i32, %c0_i32_0, %c0_i32_1 : i32, i32, i32
  }
  func.func @transform_16(%arg0: i32) -> (i32, i32, i32) {
    %c0_i32 = arith.constant 0 : i32
    %c0_i32_0 = arith.constant 0 : i32
    %c0_i32_1 = arith.constant 0 : i32
    %c0_i32_2 = arith.constant 0 : i32
    return %c0_i32, %c0_i32_0, %c0_i32_1 : i32, i32, i32
  }
  func.func @transform_17(%arg0: i32) -> (i32, i32, i32) {
    %c0_i32 = arith.constant 0 : i32
    %c0_i32_0 = arith.constant 0 : i32
    %c0_i32_1 = arith.constant 0 : i32
    %c0_i32_2 = arith.constant 0 : i32
    return %c0_i32, %c0_i32_0, %c0_i32_1 : i32, i32, i32
  }
  func.func @transform_18(%arg0: i32) -> (i32, i32, i32) {
    %c0_i32 = arith.constant 0 : i32
    %c0_i32_0 = arith.constant 0 : i32
    %c0_i32_1 = arith.constant 0 : i32
    %c0_i32_2 = arith.constant 0 : i32
    return %c0_i32, %c0_i32_0, %c0_i32_1 : i32, i32, i32
  }
  func.func @transform_19(%arg0: i32) -> (i32, i32, i32) {
    %c0_i32 = arith.constant 0 : i32
    %c0_i32_0 = arith.constant 0 : i32
    %c0_i32_1 = arith.constant 0 : i32
    %c0_i32_2 = arith.constant 0 : i32
    return %c0_i32, %c0_i32_0, %c0_i32_1 : i32, i32, i32
  }
  func.func @transform_20(%arg0: i32) -> (i32, i32, i32) {
    %c0_i32 = arith.constant 0 : i32
    %c0_i32_0 = arith.constant 0 : i32
    %c0_i32_1 = arith.constant 0 : i32
    %c0_i32_2 = arith.constant 0 : i32
    return %c0_i32, %c0_i32_0, %c0_i32_1 : i32, i32, i32
  }
  func.func @transform_21(%arg0: i32) -> (i32, i32, i32) {
    %c0_i32 = arith.constant 0 : i32
    %c0_i32_0 = arith.constant 0 : i32
    %c0_i32_1 = arith.constant 0 : i32
    %c0_i32_2 = arith.constant 0 : i32
    return %c0_i32, %c0_i32_0, %c0_i32_1 : i32, i32, i32
  }
  func.func @transform_22(%arg0: i32) -> (i32, i32) {
    %c0_i32 = arith.constant 0 : i32
    %c0_i32_0 = arith.constant 0 : i32
    %c0_i32_1 = arith.constant 0 : i32
    return %c0_i32, %c0_i32_0 : i32, i32
  }
  func.func @transform_23(%arg0: i32) -> (i32, i32) {
    %c0_i32 = arith.constant 0 : i32
    %c0_i32_0 = arith.constant 0 : i32
    %c0_i32_1 = arith.constant 0 : i32
    return %c0_i32, %c0_i32_0 : i32, i32
  }
  func.func @transform_24(%arg0: i32) -> (i32, i32) {
    %c0_i32 = arith.constant 0 : i32
    %c0_i32_0 = arith.constant 0 : i32
    return %arg0, %c0_i32 : i32, i32
  }
}

</mosaic_0001>

<llo_original>
// kernel: transformer_forward.1
$region0: #{transformer_forward.1}
  #allocation0 [shape = 'u32[]', space=smem, size = 0x4, offset = 0x4, fixed_abs, tag = 'smem constant byte address 0x4 - core index']
  #allocation1 [shape = 'u32[144,128]{1,0:T(1,128)}', space=vmem, size = 0x12000, scoped, tag = 'internal scratch']
  %s0 = inlined_call_operand.vmem [shape: f32[32,3], index: 0, kind: input, shape index: {}]
  %s1 = inlined_call_operand.vmem [shape: bf16[3,64,128], index: 1, kind: input, shape index: {}]
  %s2 = inlined_call_operand.vmem [shape: bf16[3,128,64], index: 2, kind: input, shape index: {}]
  %s3 = inlined_call_operand.vmem [shape: f32[128,128], index: 3, kind: input, shape index: {}]
  %s4 = inlined_call_operand.vmem [shape: f32[3,64], index: 4, kind: input, shape index: {}]
  %s5 = inlined_call_operand.vmem [shape: f32[1,64], index: 5, kind: input, shape index: {}]
  %s6 = inlined_call_operand.vmem [shape: bf16[2,64,64], index: 6, kind: input, shape index: {}]
  %s7 = inlined_call_operand.vmem [shape: f32[2,1,64], index: 7, kind: input, shape index: {}]
  %s8 = inlined_call_operand.vmem [shape: f32[3,1,64], index: 8, kind: input, shape index: {}, may-alias: {8,10}]
  %s9 = inlined_call_operand.vmem [shape: f32[3,1,64], index: 9, kind: input, shape index: {}, may-alias: {9,11}]
  %s10 = inlined_call_operand.vmem [shape: f32[3,1,64], index: 10, kind: input, shape index: {}, may-alias: {8,10}]
  %s11 = inlined_call_operand.vmem [shape: f32[3,1,64], index: 11, kind: input, shape index: {}, may-alias: {9,11}]
  %s12 = inlined_call_operand.vmem [shape: bf16[3,64,64], index: 12, kind: input, shape index: {}]
  %s13 = inlined_call_operand.vmem [shape: f32[3,1,64], index: 13, kind: input, shape index: {}]
  %s14 = inlined_call_operand.vmem [shape: bf16[3,64,64], index: 14, kind: input, shape index: {}]
  %s15 = inlined_call_operand.vmem [shape: f32[3,1,64], index: 15, kind: input, shape index: {}]
  %s16 = inlined_call_operand.vmem [shape: bf16[3,64,256], index: 16, kind: input, shape index: {}]
  %s17 = inlined_call_operand.vmem [shape: f32[3,1,256], index: 17, kind: input, shape index: {}]
  %s18 = inlined_call_operand.vmem [shape: bf16[3,256,64], index: 18, kind: input, shape index: {}]
  %s19 = inlined_call_operand.vmem [shape: f32[3,1,64], index: 19, kind: input, shape index: {}]
  %s20 = inlined_call_operand.vmem [shape: bf16[3,64,64], index: 20, kind: input, shape index: {}]
  %s21 = inlined_call_operand.vmem [shape: f32[3,1,64], index: 21, kind: input, shape index: {}]
  %s22 = inlined_call_operand.vmem [shape: bf16[64,128], index: 22, kind: input, shape index: {}]
  %s23 = inlined_call_operand.vmem [shape: f32[1,128], index: 23, kind: input, shape index: {}]
  %s24 = inlined_call_operand.vmem [shape: f32[32,128], index: 24, kind: output, shape index: {}]
  %s25 = sld [smem:[#allocation0]]
  $region106: #{transformer_forward.1} parent=0
    _
  %s27 = ssub.s32 1, %s25
  %s28 = scalar_select 0, %s27, %s25
  // Predicated region
  $region2: #{transformer_forward.1} parent=0 // pred_check
    _
  $region3: #{transformer_forward.1} parent=0 // pred_check_branch
    %30 = sbr.rel (0) target = $region5
  $region4: #{transformer_forward.1} parent=0 // pred_region
    _
  $region5: #{transformer_forward.1} parent=0 // pred_fallthru
    _
  // Predicated region
  $region6: #{transformer_forward.1} parent=0 // pred_check
    _
  $region7: #{transformer_forward.1} parent=0 // pred_check_branch
    %32 = sbr.rel (0) target = $region9
  $region8: #{transformer_forward.1} parent=0 // pred_region
    _
  $region9: #{transformer_forward.1} parent=0 // pred_fallthru
    _
  // Predicated region
  $region10: #{transformer_forward.1} parent=0 // pred_check
    _
  $region11: #{transformer_forward.1} parent=0 // pred_check_branch
    %34 = sbr.rel (0) target = $region13
  $region12: #{transformer_forward.1} parent=0 // pred_region
    _
  $region13: #{transformer_forward.1} parent=0 // pred_fallthru
    _
  // Predicated region
  $region14: #{transformer_forward.1} parent=0 // pred_check
    _
  $region15: #{transformer_forward.1} parent=0 // pred_check_branch
    %36 = sbr.rel (0) target = $region17
  $region16: #{transformer_forward.1} parent=0 // pred_region
    _
  $region17: #{transformer_forward.1} parent=0 // pred_fallthru
    _
  // Predicated region
  $region18: #{transformer_forward.1} parent=0 // pred_check
    _
  $region19: #{transformer_forward.1} parent=0 // pred_check_branch
    %38 = sbr.rel (0) target = $region21
  $region20: #{transformer_forward.1} parent=0 // pred_region
    _
  $region21: #{transformer_forward.1} parent=0 // pred_fallthru
    _
  // Predicated region
  $region22: #{transformer_forward.1} parent=0 // pred_check
    _
  $region23: #{transformer_forward.1} parent=0 // pred_check_branch
    %40 = sbr.rel (0) target = $region25
  $region24: #{transformer_forward.1} parent=0 // pred_region
    _
  $region25: #{transformer_forward.1} parent=0 // pred_fallthru
    _
  // Predicated region
  $region26: #{transformer_forward.1} parent=0 // pred_check
    _
  $region27: #{transformer_forward.1} parent=0 // pred_check_branch
    %42 = sbr.rel (0) target = $region29
  $region28: #{transformer_forward.1} parent=0 // pred_region
    _
  $region29: #{transformer_forward.1} parent=0 // pred_fallthru
    _
  // Predicated region
  $region30: #{transformer_forward.1} parent=0 // pred_check
    _
  $region31: #{transformer_forward.1} parent=0 // pred_check_branch
    %44 = sbr.rel (0) target = $region33
  $region32: #{transformer_forward.1} parent=0 // pred_region
    _
  $region33: #{transformer_forward.1} parent=0 // pred_fallthru
    _
  // Predicated region
  $region34: #{transformer_forward.1} parent=0 // pred_check
    _
  $region35: #{transformer_forward.1} parent=0 // pred_check_branch
    %46 = sbr.rel (0) target = $region37
  $region36: #{transformer_forward.1} parent=0 // pred_region
    _
  $region37: #{transformer_forward.1} parent=0 // pred_fallthru
    _
  // Predicated region
  $region38: #{transformer_forward.1} parent=0 // pred_check
    _
  $region39: #{transformer_forward.1} parent=0 // pred_check_branch
    %48 = sbr.rel (0) target = $region41
  $region40: #{transformer_forward.1} parent=0 // pred_region
    _
  $region41: #{transformer_forward.1} parent=0 // pred_fallthru
    _
  // Predicated region
  $region42: #{transformer_forward.1} parent=0 // pred_check
    _
  $region43: #{transformer_forward.1} parent=0 // pred_check_branch
    %50 = sbr.rel (0) target = $region45
  $region44: #{transformer_forward.1} parent=0 // pred_region
    _
  $region45: #{transformer_forward.1} parent=0 // pred_fallthru
    _
  // Predicated region
  $region46: #{transformer_forward.1} parent=0 // pred_check
    _
  $region47: #{transformer_forward.1} parent=0 // pred_check_branch
    %52 = sbr.rel (0) target = $region49
  $region48: #{transformer_forward.1} parent=0 // pred_region
    _
  $region49: #{transformer_forward.1} parent=0 // pred_fallthru
    _
  // Predicated region
  $region50: #{transformer_forward.1} parent=0 // pred_check
    _
  $region51: #{transformer_forward.1} parent=0 // pred_check_branch
    %54 = sbr.rel (0) target = $region53
  $region52: #{transformer_forward.1} parent=0 // pred_region
    _
  $region53: #{transformer_forward.1} parent=0 // pred_fallthru
    _
  // Predicated region
  $region54: #{transformer_forward.1} parent=0 // pred_check
    _
  $region55: #{transformer_forward.1} parent=0 // pred_check_branch
    %56 = sbr.rel (0) target = $region57
  $region56: #{transformer_forward.1} parent=0 // pred_region
    _
  $region57: #{transformer_forward.1} parent=0 // pred_fallthru
    _
  // Predicated region
  $region58: #{transformer_forward.1} parent=0 // pred_check
    _
  $region59: #{transformer_forward.1} parent=0 // pred_check_branch
    %58 = sbr.rel (0) target = $region61
  $region60: #{transformer_forward.1} parent=0 // pred_region
    _
  $region61: #{transformer_forward.1} parent=0 // pred_fallthru
    _
  // Predicated region
  $region62: #{transformer_forward.1} parent=0 // pred_check
    _
  $region63: #{transformer_forward.1} parent=0 // pred_check_branch
    %60 = sbr.rel (0) target = $region65
  $region64: #{transformer_forward.1} parent=0 // pred_region
    _
  $region65: #{transformer_forward.1} parent=0 // pred_fallthru
    _
  // Predicated region
  $region66: #{transformer_forward.1} parent=0 // pred_check
    _
  $region67: #{transformer_forward.1} parent=0 // pred_check_branch
    %62 = sbr.rel (0) target = $region69
  $region68: #{transformer_forward.1} parent=0 // pred_region
    _
  $region69: #{transformer_forward.1} parent=0 // pred_fallthru
    _
  // Predicated region
  $region70: #{transformer_forward.1} parent=0 // pred_check
    _
  $region71: #{transformer_forward.1} parent=0 // pred_check_branch
    %64 = sbr.rel (0) target = $region73
  $region72: #{transformer_forward.1} parent=0 // pred_region
    _
  $region73: #{transformer_forward.1} parent=0 // pred_fallthru
    _
  // Predicated region
  $region74: #{transformer_forward.1} parent=0 // pred_check
    _
  $region75: #{transformer_forward.1} parent=0 // pred_check_branch
    %66 = sbr.rel (0) target = $region77
  $region76: #{transformer_forward.1} parent=0 // pred_region
    _
  $region77: #{transformer_forward.1} parent=0 // pred_fallthru
    _
  // Predicated region
  $region78: #{transformer_forward.1} parent=0 // pred_check
    _
  $region79: #{transformer_forward.1} parent=0 // pred_check_branch
    %68 = sbr.rel (0) target = $region81
  $region80: #{transformer_forward.1} parent=0 // pred_region
    _
  $region81: #{transformer_forward.1} parent=0 // pred_fallthru
    _
  // Predicated region
  $region82: #{transformer_forward.1} parent=0 // pred_check
    _
  $region83: #{transformer_forward.1} parent=0 // pred_check_branch
    %70 = sbr.rel (0) target = $region85
  $region84: #{transformer_forward.1} parent=0 // pred_region
    _
  $region85: #{transformer_forward.1} parent=0 // pred_fallthru
    _
  // Predicated region
  $region86: #{transformer_forward.1} parent=0 // pred_check
    _
  $region87: #{transformer_forward.1} parent=0 // pred_check_branch
    %72 = sbr.rel (0) target = $region89
  $region88: #{transformer_forward.1} parent=0 // pred_region
    _
  $region89: #{transformer_forward.1} parent=0 // pred_fallthru
    _
  // Predicated region
  $region90: #{transformer_forward.1} parent=0 // pred_check
    _
  $region91: #{transformer_forward.1} parent=0 // pred_check_branch
    %74 = sbr.rel (0) target = $region93
  $region92: #{transformer_forward.1} parent=0 // pred_region
    _
  $region93: #{transformer_forward.1} parent=0 // pred_fallthru
    _
  // Predicated region
  $region94: #{transformer_forward.1} parent=0 // pred_check
    _
  $region95: #{transformer_forward.1} parent=0 // pred_check_branch
    %76 = sbr.rel (0) target = $region97
  $region96: #{transformer_forward.1} parent=0 // pred_region
    _
  $region97: #{transformer_forward.1} parent=0 // pred_fallthru
    _
  %v78 = vld [vmem:[%s0] sm:$0xff]
  %v79 = vld [vmem:[%s0 + $0x8] sm:$0xff]
  %v80 = vld [vmem:[%s0 + $0x10] sm:$0xff]
  %v81 = vld [vmem:[%s0 + $0x18] sm:$0xff]
  %v82 = vld [vmem:[%s4] sm:$0x7]
  %v83 = vld [vmem:[%s5] sm:$0x1]
  %v85 = vlaneseq
  %v86 = vshrl.u32 %v85, 7
  %v87 = vsub.s32 0, %v86
  %v88 = vrot.slane %v83, %v87
  %vm90 = vcmask 23552
  %v92 = vsel %vm90, %v78, 0
  %v95 = vsel %vm90, %v79, 0
  %v98 = vsel %vm90, %v80, 0
  %v101 = vsel %vm90, %v81, 0
  %vm103 = vcmask 1042432
  %v105 = vsel %vm103, %v82, 0
  %107 = vmatprep.subr.mxu0 0.0
  %108 = vmatpush1.msra.mxu0 0.0
  %109 = vmatprep.subr.mxu0 0.0
  %110 = vmatpush1.msra.mxu0 0.0
  %111 = vmatprep.subr.mxu0 0.0
  %112 = vmatpush1.msra.mxu0 0.0
  %113 = vmatprep.subr.mxu0 0.0
  %114 = vmatpush1.msra.mxu0 0.0
  %115 = vmatprep.subr.mxu0 0.0
  %116 = vmatpush1.msra.mxu0 0.0
  %117 = vmatprep.subr.mxu0 0.0
  %118 = vmatpush1.msra.mxu0 0.0
  %119 = vmatprep.subr.mxu0 0.0
  %120 = vmatpush1.msra.mxu0 0.0
  %121 = vmatprep.subr.mxu0 0.0
  %122 = vmatpush1.msra.mxu0 0.0
  %123 = vmatprep.subr.mxu0 0.0
  %124 = vmatpush1.msra.mxu0 0.0
  %125 = vmatprep.subr.mxu0 0.0
  %126 = vmatpush1.msra.mxu0 0.0
  %127 = vmatprep.subr.mxu0 0.0
  %128 = vmatpush1.msra.mxu0 0.0
  %129 = vmatprep.subr.mxu0 0.0
  %130 = vmatpush1.msra.mxu0 0.0
  %131 = vmatprep.subr.mxu0 0.0
  %132 = vmatpush1.msra.mxu0 0.0
  %133 = vmatprep.subr.mxu0 0.0
  %134 = vmatpush1.msra.mxu0 0.0
  %135 = vmatprep.subr.mxu0 0.0
  %136 = vmatpush1.msra.mxu0 0.0
  %137 = vmatprep.subr.mxu0 0.0
  %138 = vmatpush1.msra.mxu0 %v105
  %139 = vmatprep.subr.mxu0 0.0
  %140 = vmatpush2.msra.mxu0 0.0
  %141 = vmatprep.subr.mxu0 0.0
  %142 = vmatpush2.msra.mxu0 0.0
  %143 = vmatprep.subr.mxu0 0.0
  %144 = vmatpush2.msra.mxu0 0.0
  %145 = vmatprep.subr.mxu0 0.0
  %146 = vmatpush2.msra.mxu0 0.0
  %147 = vmatprep.subr.mxu0 0.0
  %148 = vmatpush2.msra.mxu0 0.0
  %149 = vmatprep.subr.mxu0 0.0
  %150 = vmatpush2.msra.mxu0 0.0
  %151 = vmatprep.subr.mxu0 0.0
  %152 = vmatpush2.msra.mxu0 0.0
  %153 = vmatprep.subr.mxu0 0.0
  %154 = vmatpush2.msra.mxu0 0.0
  %155 = vmatprep.subr.mxu0 0.0
  %156 = vmatpush2.msra.mxu0 0.0
  %157 = vmatprep.subr.mxu0 0.0
  %158 = vmatpush2.msra.mxu0 0.0
  %159 = vmatprep.subr.mxu0 0.0
  %160 = vmatpush2.msra.mxu0 0.0
  %161 = vmatprep.subr.mxu0 0.0
  %162 = vmatpush2.msra.mxu0 0.0
  %163 = vmatprep.subr.mxu0 0.0
  %164 = vmatpush2.msra.mxu0 0.0
  %165 = vmatprep.subr.mxu0 0.0
  %166 = vmatpush2.msra.mxu0 0.0
  %167 = vmatprep.subr.mxu0 0.0
  %168 = vmatpush2.msra.mxu0 0.0
  %169 = vmatprep.subr.mxu0 0.0
  %170 = vmatpush2.msra.mxu0 0.0
  %171 = vmatprep.mubr.f32.mxu0 0.0
  %172 = vmatmul.mubr.f32.gmra.mxu0 %v92
  %v173 = vpop.f32.mrf.mxu0
  %v174 = vadd.f32 %v88, %v173
  %v175 = vpop.f32.mrf.mxu0
  %176 = vmatprep.mubr.f32.mxu0 0.0
  %177 = vmatmul.mubr.f32.gmra.mxu0 %v95
  %v178 = vpop.f32.mrf.mxu0
  %v179 = vadd.f32 %v88, %v178
  %v180 = vpop.f32.mrf.mxu0
  %181 = vmatprep.mubr.f32.mxu0 0.0
  %182 = vmatmul.mubr.f32.gmra.mxu0 %v98
  %v183 = vpop.f32.mrf.mxu0
  %v184 = vadd.f32 %v88, %v183
  %v185 = vpop.f32.mrf.mxu0
  %186 = vmatprep.mubr.f32.mxu0 0.0
  %187 = vmatmul.mubr.f32.gmra.mxu0 %v101
  %v188 = vpop.f32.mrf.mxu0
  %v189 = vadd.f32 %v88, %v188
  %v190 = vpop.f32.mrf.mxu0
  %191 = vdwg.mxu0
  %v192 = vmul.f32 %v174, 0.5
  %v193 = vmul.f32 %v179, 0.5
  %v194 = vmul.f32 %v184, 0.5
  %v195 = vmul.f32 %v189, 0.5
  %v196 = vmul.f32 %v174, 0.70710677
  %v197 = vmul.f32 %v179, 0.70710677
  %v198 = vmul.f32 %v184, 0.70710677
  %v199 = vmul.f32 %v189, 0.70710677
  %v200 = verf.f32.pop %v196
  %v201 = verf.f32.pop %v197
  %v202 = verf.f32.pop %v198
  %v203 = verf.f32.pop %v199
  %v204 = vadd.f32 %v200, 1.0
  %v205 = vadd.f32 %v201, 1.0
  %v206 = vadd.f32 %v202, 1.0
  %v207 = vadd.f32 %v203, 1.0
  %v208 = vmul.f32 %v192, %v204
  %v209 = vmul.f32 %v193, %v205
  %v210 = vmul.f32 %v194, %v206
  %v211 = vmul.f32 %v195, %v207
  %v212 = vld [vmem:[%s6] sm:$0xf]
  %v213 = vld [vmem:[%s6 + $0x4] sm:$0xf]
  %v214 = vld [vmem:[%s6 + $0x8] sm:$0xf]
  %v215 = vld [vmem:[%s6 + $0xc] sm:$0xf]
  %v216 = vld [vmem:[%s6 + $0x10] sm:$0xf]
  %v217 = vld [vmem:[%s6 + $0x14] sm:$0xf]
  %v218 = vld [vmem:[%s6 + $0x18] sm:$0xf]
  %v219 = vld [vmem:[%s6 + $0x1c] sm:$0xf]
  %v220 = vld [vmem:[%s7] sm:$0x1]
  %v221 = vpack.c.bf16 %v209, %v208
  %v222 = vpack.c.bf16 %v211, %v210
  %v224 = vlaneseq
  %v225 = vshrl.u32 %v224, 7
  %v226 = vsub.s32 0, %v225
  %v227 = vrot.slane %v220, %v226
  %v237 = vunpack.c.l.b16 %v212
  %v238 = vunpack.c.l.b16 %v213
  %v239 = vunpack.c.l.b16 %v214
  %v240 = vunpack.c.l.b16 %v215
  %v241 = vunpack.c.l.b16 %v216
  %v242 = vunpack.c.l.b16 %v217
  %v243 = vunpack.c.l.b16 %v218
  %v244 = vunpack.c.l.b16 %v219
  %v245 = vpack.c.b16 %v238, %v237
  %v246 = vpack.c.b16 %v240, %v239
  %v247 = vpack.c.b16 %v242, %v241
  %v248 = vpack.c.b16 %v244, %v243
  %vm253 = vcmask 523264
  %v255 = vsel %vm253, %v221, 0
  %v258 = vsel %vm253, %v222, 0
  %260 = vmatprep.subr.bf16.mxu0 0
  %261 = vmatpush1.bf16.msra.mxu0 0
  %262 = vmatprep.subr.bf16.mxu0 0
  %263 = vmatpush1.bf16.msra.mxu0 0
  %264 = vmatprep.subr.bf16.mxu0 0
  %265 = vmatpush1.bf16.msra.mxu0 0
  %266 = vmatprep.subr.bf16.mxu0 0
  %267 = vmatpush1.bf16.msra.mxu0 0
  %268 = vmatprep.subr.bf16.mxu0 0
  %269 = vmatpush1.bf16.msra.mxu0 %v248
  %270 = vmatprep.subr.bf16.mxu0 0
  %271 = vmatpush1.bf16.msra.mxu0 %v247
  %272 = vmatprep.subr.bf16.mxu0 0
  %273 = vmatpush1.bf16.msra.mxu0 %v246
  %274 = vmatprep.subr.bf16.mxu0 0
  %275 = vmatpush1.bf16.msra.mxu0 %v245
  %276 = vmatprep.subr.bf16.mxu0 0
  %277 = vmatpush2.bf16.msra.mxu0 0
  %278 = vmatprep.subr.bf16.mxu0 0
  %279 = vmatpush2.bf16.msra.mxu0 0
  %280 = vmatprep.subr.bf16.mxu0 0
  %281 = vmatpush2.bf16.msra.mxu0 0
  %282 = vmatprep.subr.bf16.mxu0 0
  %283 = vmatpush2.bf16.msra.mxu0 0
  %284 = vmatprep.subr.bf16.mxu0 0
  %285 = vmatpush2.bf16.msra.mxu0 0
  %286 = vmatprep.subr.bf16.mxu0 0
  %287 = vmatpush2.bf16.msra.mxu0 0
  %288 = vmatprep.subr.bf16.mxu0 0
  %289 = vmatpush2.bf16.msra.mxu0 0
  %290 = vmatprep.subr.bf16.mxu0 0
  %291 = vmatpush2.bf16.msra.mxu0 0
  %292 = vmatprep.mubr.bf16.mxu0 0
  %293 = vmatmul.mubr.bf16.gmra.mxu0 %v255
  %v294 = vpop.f32.mrf.mxu0
  %v295 = vadd.f32 %v227, %v294
  %v296 = vpop.f32.mrf.mxu0
  %v297 = vpop.f32.mrf.mxu0
  %v298 = vadd.f32 %v227, %v297
  %v299 = vpop.f32.mrf.mxu0
  %300 = vmatprep.mubr.bf16.mxu0 0
  %301 = vmatmul.mubr.bf16.gmra.mxu0 %v258
  %v302 = vpop.f32.mrf.mxu0
  %v303 = vadd.f32 %v227, %v302
  %v304 = vpop.f32.mrf.mxu0
  %v305 = vpop.f32.mrf.mxu0
  %v306 = vadd.f32 %v227, %v305
  %v307 = vpop.f32.mrf.mxu0
  %308 = vdwg.mxu0
  %v309 = vmul.f32 %v295, 0.5
  %v310 = vmul.f32 %v298, 0.5
  %v311 = vmul.f32 %v303, 0.5
  %v312 = vmul.f32 %v306, 0.5
  %v313 = vmul.f32 %v295, 0.70710677
  %v314 = vmul.f32 %v298, 0.70710677
  %v315 = vmul.f32 %v303, 0.70710677
  %v316 = vmul.f32 %v306, 0.70710677
  %v317 = verf.f32.pop %v313
  %v318 = verf.f32.pop %v314
  %v319 = verf.f32.pop %v315
  %v320 = verf.f32.pop %v316
  %v321 = vadd.f32 %v317, 1.0
  %v322 = vadd.f32 %v318, 1.0
  %v323 = vadd.f32 %v319, 1.0
  %v324 = vadd.f32 %v320, 1.0
  %v325 = vmul.f32 %v309, %v321
  %v326 = vmul.f32 %v310, %v322
  %v327 = vmul.f32 %v311, %v323
  %v328 = vmul.f32 %v312, %v324
  %s329 = scalar_lea.vmem %s6, 32
  %v330 = vld [vmem:[%s329] sm:$0xf]
  %v331 = vld [vmem:[%s329 + $0x4] sm:$0xf]
  %v332 = vld [vmem:[%s329 + $0x8] sm:$0xf]
  %v333 = vld [vmem:[%s329 + $0xc] sm:$0xf]
  %v334 = vld [vmem:[%s329 + $0x10] sm:$0xf]
  %v335 = vld [vmem:[%s329 + $0x14] sm:$0xf]
  %v336 = vld [vmem:[%s329 + $0x18] sm:$0xf]
  %v337 = vld [vmem:[%s329 + $0x1c] sm:$0xf]
  %s338 = scalar_lea.vmem %s7, 1
  %v339 = vld [vmem:[%s338] sm:$0x1]
  %v340 = vpack.c.bf16 %v326, %v325
  %v341 = vpack.c.bf16 %v328, %v327
  %v343 = vlaneseq
  %v344 = vshrl.u32 %v343, 7
  %v345 = vsub.s32 0, %v344
  %v346 = vrot.slane %v339, %v345
  %v356 = vunpack.c.l.b16 %v330
  %v357 = vunpack.c.l.b16 %v331
  %v358 = vunpack.c.l.b16 %v332
  %v359 = vunpack.c.l.b16 %v333
  %v360 = vunpack.c.l.b16 %v334
  %v361 = vunpack.c.l.b16 %v335
  %v362 = vunpack.c.l.b16 %v336
  %v363 = vunpack.c.l.b16 %v337
  %v364 = vpack.c.b16 %v357, %v356
  %v365 = vpack.c.b16 %v359, %v358
  %v366 = vpack.c.b16 %v361, %v360
  %v367 = vpack.c.b16 %v363, %v362
  %v373 = vsel %vm253, %v340, 0
  %v376 = vsel %vm253, %v341, 0
  %378 = vmatprep.subr.bf16.mxu0 0
  %379 = vmatpush1.bf16.msra.mxu0 0
  %380 = vmatprep.subr.bf16.mxu0 0
  %381 = vmatpush1.bf16.msra.mxu0 0
  %382 = vmatprep.subr.bf16.mxu0 0
  %383 = vmatpush1.bf16.msra.mxu0 0
  %384 = vmatprep.subr.bf16.mxu0 0
  %385 = vmatpush1.bf16.msra.mxu0 0
  %386 = vmatprep.subr.bf16.mxu0 0
  %387 = vmatpush1.bf16.msra.mxu0 %v367
  %388 = vmatprep.subr.bf16.mxu0 0
  %389 = vmatpush1.bf16.msra.mxu0 %v366
  %390 = vmatprep.subr.bf16.mxu0 0
  %391 = vmatpush1.bf16.msra.mxu0 %v365
  %392 = vmatprep.subr.bf16.mxu0 0
  %393 = vmatpush1.bf16.msra.mxu0 %v364
  %394 = vmatprep.subr.bf16.mxu0 0
  %395 = vmatpush2.bf16.msra.mxu0 0
  %396 = vmatprep.subr.bf16.mxu0 0
  %397 = vmatpush2.bf16.msra.mxu0 0
  %398 = vmatprep.subr.bf16.mxu0 0
  %399 = vmatpush2.bf16.msra.mxu0 0
  %400 = vmatprep.subr.bf16.mxu0 0
  %401 = vmatpush2.bf16.msra.mxu0 0
  %402 = vmatprep.subr.bf16.mxu0 0
  %403 = vmatpush2.bf16.msra.mxu0 0
  %404 = vmatprep.subr.bf16.mxu0 0
  %405 = vmatpush2.bf16.msra.mxu0 0
  %406 = vmatprep.subr.bf16.mxu0 0
  %407 = vmatpush2.bf16.msra.mxu0 0
  %408 = vmatprep.subr.bf16.mxu0 0
  %409 = vmatpush2.bf16.msra.mxu0 0
  %410 = vmatprep.mubr.bf16.mxu0 0
  %411 = vmatmul.mubr.bf16.gmra.mxu0 %v373
  %v412 = vpop.f32.mrf.mxu0
  %v413 = vadd.f32 %v346, %v412
  %v414 = vpop.f32.mrf.mxu0
  %v415 = vpop.f32.mrf.mxu0
  %v416 = vadd.f32 %v346, %v415
  %v417 = vpop.f32.mrf.mxu0
  %418 = vmatprep.mubr.bf16.mxu0 0
  %419 = vmatmul.mubr.bf16.gmra.mxu0 %v376
  %v420 = vpop.f32.mrf.mxu0
  %v421 = vadd.f32 %v346, %v420
  %v422 = vpop.f32.mrf.mxu0
  %v423 = vpop.f32.mrf.mxu0
  %v424 = vadd.f32 %v346, %v423
  %v425 = vpop.f32.mrf.mxu0
  %426 = vdwg.mxu0
  %v427 = vld [vmem:[%s8] sm:$0x1]
  %v428 = vld [vmem:[%s9] sm:$0x1]
  %v429 = vsel %vm253, %v413, 0.0
  %430 = vadd.xlane.f32.xlu0 %v429
  %v431 = vpop.xlane.xlu0 %430
  %v432 = vsel %vm253, %v416, 0.0
  %433 = vadd.xlane.f32.xlu0 %v432
  %v434 = vpop.xlane.xlu0 %433
  %v435 = vsel %vm253, %v421, 0.0
  %436 = vadd.xlane.f32.xlu0 %v435
  %v437 = vpop.xlane.xlu0 %436
  %v438 = vsel %vm253, %v424, 0.0
  %439 = vadd.xlane.f32.xlu0 %v438
  %v440 = vpop.xlane.xlu0 %439
  %v441 = vrcp.pop 64.0
  %v442 = vmul.f32 %v431, %v441
  %v443 = vmul.f32 %v434, %v441
  %v444 = vmul.f32 %v437, %v441
  %v445 = vmul.f32 %v440, %v441
  %v446 = vsub.f32 %v413, %v442
  %v447 = vsub.f32 %v416, %v443
  %v448 = vsub.f32 %v421, %v444
  %v449 = vsub.f32 %v424, %v445
  %v450 = vmul.f32 %v446, %v446
  %v451 = vmul.f32 %v447, %v447
  %v452 = vmul.f32 %v448, %v448
  %v453 = vmul.f32 %v449, %v449
  %v454 = vsel %vm253, %v450, 0.0
  %455 = vadd.xlane.f32.xlu0 %v454
  %v456 = vpop.xlane.xlu0 %455
  %v457 = vsel %vm253, %v451, 0.0
  %458 = vadd.xlane.f32.xlu0 %v457
  %v459 = vpop.xlane.xlu0 %458
  %v460 = vsel %vm253, %v452, 0.0
  %461 = vadd.xlane.f32.xlu0 %v460
  %v462 = vpop.xlane.xlu0 %461
  %v463 = vsel %vm253, %v453, 0.0
  %464 = vadd.xlane.f32.xlu0 %v463
  %v465 = vpop.xlane.xlu0 %464
  %v466 = vmul.f32 %v456, %v441
  %v467 = vmul.f32 %v459, %v441
  %v468 = vmul.f32 %v462, %v441
  %v469 = vmul.f32 %v465, %v441
  %v470 = vadd.f32 %v466, 1e-05
  %v471 = vadd.f32 %v467, 1e-05
  %v472 = vadd.f32 %v468, 1e-05
  %v473 = vadd.f32 %v469, 1e-05
  %v474 = vrsqrt.pop %v470
  %v475 = vrsqrt.pop %v471
  %v476 = vrsqrt.pop %v472
  %v477 = vrsqrt.pop %v473
  %v478 = vmul.f32 %v446, %v474
  %v479 = vmul.f32 %v447, %v475
  %v480 = vmul.f32 %v448, %v476
  %v481 = vmul.f32 %v449, %v477
  %v483 = vlaneseq
  %v484 = vshrl.u32 %v483, 7
  %v485 = vsub.s32 0, %v484
  %v486 = vrot.slane %v427, %v485
  %v488 = vmul.f32 %v478, %v486
  %v489 = vmul.f32 %v479, %v486
  %v490 = vmul.f32 %v480, %v486
  %v491 = vmul.f32 %v481, %v486
  %v493 = vlaneseq
  %v494 = vshrl.u32 %v493, 7
  %v495 = vsub.s32 0, %v494
  %v496 = vrot.slane %v428, %v495
  %v498 = vadd.f32 %v488, %v496
  %v499 = vadd.f32 %v489, %v496
  %v500 = vadd.f32 %v490, %v496
  %v501 = vadd.f32 %v491, %v496
  %v502 = vld [vmem:[%s12] sm:$0xf]
  %v503 = vld [vmem:[%s12 + $0x4] sm:$0xf]
  %v504 = vld [vmem:[%s12 + $0x8] sm:$0xf]
  %v505 = vld [vmem:[%s12 + $0xc] sm:$0xf]
  %v506 = vld [vmem:[%s12 + $0x10] sm:$0xf]
  %v507 = vld [vmem:[%s12 + $0x14] sm:$0xf]
  %v508 = vld [vmem:[%s12 + $0x18] sm:$0xf]
  %v509 = vld [vmem:[%s12 + $0x1c] sm:$0xf]
  %v510 = vld [vmem:[%s13] sm:$0x1]
  %v511 = vpack.c.bf16 %v499, %v498
  %v512 = vpack.c.bf16 %v501, %v500
  %v514 = vlaneseq
  %v515 = vshrl.u32 %v514, 7
  %v516 = vsub.s32 0, %v515
  %v517 = vrot.slane %v510, %v516
  %v527 = vunpack.c.l.b16 %v502
  %v528 = vunpack.c.l.b16 %v503
  %v529 = vunpack.c.l.b16 %v504
  %v530 = vunpack.c.l.b16 %v505
  %v531 = vunpack.c.l.b16 %v506
  %v532 = vunpack.c.l.b16 %v507
  %v533 = vunpack.c.l.b16 %v508
  %v534 = vunpack.c.l.b16 %v509
  %v535 = vpack.c.b16 %v528, %v527
  %v536 = vpack.c.b16 %v530, %v529
  %v537 = vpack.c.b16 %v532, %v531
  %v538 = vpack.c.b16 %v534, %v533
  %v544 = vsel %vm253, %v511, 0
  %v547 = vsel %vm253, %v512, 0
  %549 = vmatprep.subr.bf16.mxu0 0
  %550 = vmatpush1.bf16.msra.mxu0 0
  %551 = vmatprep.subr.bf16.mxu0 0
  %552 = vmatpush1.bf16.msra.mxu0 0
  %553 = vmatprep.subr.bf16.mxu0 0
  %554 = vmatpush1.bf16.msra.mxu0 0
  %555 = vmatprep.subr.bf16.mxu0 0
  %556 = vmatpush1.bf16.msra.mxu0 0
  %557 = vmatprep.subr.bf16.mxu0 0
  %558 = vmatpush1.bf16.msra.mxu0 %v538
  %559 = vmatprep.subr.bf16.mxu0 0
  %560 = vmatpush1.bf16.msra.mxu0 %v537
  %561 = vmatprep.subr.bf16.mxu0 0
  %562 = vmatpush1.bf16.msra.mxu0 %v536
  %563 = vmatprep.subr.bf16.mxu0 0
  %564 = vmatpush1.bf16.msra.mxu0 %v535
  %565 = vmatprep.subr.bf16.mxu0 0
  %566 = vmatpush2.bf16.msra.mxu0 0
  %567 = vmatprep.subr.bf16.mxu0 0
  %568 = vmatpush2.bf16.msra.mxu0 0
  %569 = vmatprep.subr.bf16.mxu0 0
  %570 = vmatpush2.bf16.msra.mxu0 0
  %571 = vmatprep.subr.bf16.mxu0 0
  %572 = vmatpush2.bf16.msra.mxu0 0
  %573 = vmatprep.subr.bf16.mxu0 0
  %574 = vmatpush2.bf16.msra.mxu0 0
  %575 = vmatprep.subr.bf16.mxu0 0
  %576 = vmatpush2.bf16.msra.mxu0 0
  %577 = vmatprep.subr.bf16.mxu0 0
  %578 = vmatpush2.bf16.msra.mxu0 0
  %579 = vmatprep.subr.bf16.mxu0 0
  %580 = vmatpush2.bf16.msra.mxu0 0
  %581 = vmatprep.mubr.bf16.mxu0 0
  %582 = vmatmul.mubr.bf16.gmra.mxu0 %v544
  %v583 = vpop.f32.mrf.mxu0
  %v584 = vadd.f32 %v517, %v583
  %v585 = vpop.f32.mrf.mxu0
  %v586 = vpop.f32.mrf.mxu0
  %v587 = vadd.f32 %v517, %v586
  %v588 = vpop.f32.mrf.mxu0
  %589 = vmatprep.mubr.bf16.mxu0 0
  %590 = vmatmul.mubr.bf16.gmra.mxu0 %v547
  %v591 = vpop.f32.mrf.mxu0
  %v592 = vadd.f32 %v517, %v591
  %v593 = vpop.f32.mrf.mxu0
  %v594 = vpop.f32.mrf.mxu0
  %v595 = vadd.f32 %v517, %v594
  %v596 = vpop.f32.mrf.mxu0
  %597 = vdwg.mxu0
  %v598 = vpack.c.bf16 %v587, %v584
  %v599 = vpack.c.bf16 %v595, %v592
  %v600 = vld [vmem:[%s1] sm:$0xf]
  %v601 = vld [vmem:[%s1 + $0x4] sm:$0xf]
  %v602 = vld [vmem:[%s1 + $0x8] sm:$0xf]
  %v603 = vld [vmem:[%s1 + $0xc] sm:$0xf]
  %v604 = vld [vmem:[%s1 + $0x10] sm:$0xf]
  %v605 = vld [vmem:[%s1 + $0x14] sm:$0xf]
  %v606 = vld [vmem:[%s1 + $0x18] sm:$0xf]
  %v607 = vld [vmem:[%s1 + $0x1c] sm:$0xf]
  %v616 = vunpack.c.l.b16 %v600
  %v617 = vunpack.c.l.b16 %v601
  %v618 = vunpack.c.l.b16 %v602
  %v619 = vunpack.c.l.b16 %v603
  %v620 = vunpack.c.l.b16 %v604
  %v621 = vunpack.c.l.b16 %v605
  %v622 = vunpack.c.l.b16 %v606
  %v623 = vunpack.c.l.b16 %v607
  %v624 = vpack.c.b16 %v617, %v616
  %v625 = vpack.c.b16 %v619, %v618
  %v626 = vpack.c.b16 %v621, %v620
  %v627 = vpack.c.b16 %v623, %v622
  %v633 = vsel %vm253, %v598, 0
  %v636 = vsel %vm253, %v599, 0
  %638 = vmatprep.subr.bf16.mxu0 0
  %639 = vmatpush1.bf16.msra.mxu0 0
  %640 = vmatprep.subr.bf16.mxu0 0
  %641 = vmatpush1.bf16.msra.mxu0 0
  %642 = vmatprep.subr.bf16.mxu0 0
  %643 = vmatpush1.bf16.msra.mxu0 0
  %644 = vmatprep.subr.bf16.mxu0 0
  %645 = vmatpush1.bf16.msra.mxu0 0
  %646 = vmatprep.subr.bf16.mxu0 0
  %647 = vmatpush1.bf16.msra.mxu0 %v627
  %648 = vmatprep.subr.bf16.mxu0 0
  %649 = vmatpush1.bf16.msra.mxu0 %v626
  %650 = vmatprep.subr.bf16.mxu0 0
  %651 = vmatpush1.bf16.msra.mxu0 %v625
  %652 = vmatprep.subr.bf16.mxu0 0
  %653 = vmatpush1.bf16.msra.mxu0 %v624
  %654 = vmatprep.subr.bf16.mxu0 0
  %655 = vmatpush2.bf16.msra.mxu0 0
  %656 = vmatprep.subr.bf16.mxu0 0
  %657 = vmatpush2.bf16.msra.mxu0 0
  %658 = vmatprep.subr.bf16.mxu0 0
  %659 = vmatpush2.bf16.msra.mxu0 0
  %660 = vmatprep.subr.bf16.mxu0 0
  %661 = vmatpush2.bf16.msra.mxu0 0
  %662 = vmatprep.subr.bf16.mxu0 0
  %663 = vmatpush2.bf16.msra.mxu0 0
  %664 = vmatprep.subr.bf16.mxu0 0
  %665 = vmatpush2.bf16.msra.mxu0 0
  %666 = vmatprep.subr.bf16.mxu0 0
  %667 = vmatpush2.bf16.msra.mxu0 0
  %668 = vmatprep.subr.bf16.mxu0 0
  %669 = vmatpush2.bf16.msra.mxu0 0
  %670 = vmatprep.mubr.bf16.mxu0 0
  %671 = vmatmul.mubr.bf16.gmra.mxu0 %v633
  %v672 = vpop.f32.mrf.mxu0
  %v673 = vadd.f32 0.0, %v672
  %v674 = vpop.f32.mrf.mxu0
  %v675 = vpop.f32.mrf.mxu0
  %v676 = vadd.f32 0.0, %v675
  %v677 = vpop.f32.mrf.mxu0
  %678 = vmatprep.mubr.bf16.mxu0 0
  %679 = vmatmul.mubr.bf16.gmra.mxu0 %v636
  %v680 = vpop.f32.mrf.mxu0
  %v681 = vadd.f32 0.0, %v680
  %v682 = vpop.f32.mrf.mxu0
  %v683 = vpop.f32.mrf.mxu0
  %v684 = vadd.f32 0.0, %v683
  %v685 = vpop.f32.mrf.mxu0
  %686 = vdwg.mxu0
  %687 = vmax.xlane.f32.xlu0 %v673
  %v688 = vpop.xlane.xlu0 %687
  %689 = vmax.xlane.f32.xlu0 %v676
  %v690 = vpop.xlane.xlu0 %689
  %691 = vmax.xlane.f32.xlu0 %v681
  %v692 = vpop.xlane.xlu0 %691
  %693 = vmax.xlane.f32.xlu0 %v684
  %v694 = vpop.xlane.xlu0 %693
  %v695 = vsub.f32 %v673, %v688
  %v696 = vsub.f32 %v676, %v690
  %v697 = vsub.f32 %v681, %v692
  %v698 = vsub.f32 %v684, %v694
  %v699 = vmul.f32 %v695, 1.442695
  %v700 = vpow.pop %v699
  %v701 = vmul.f32 %v696, 1.442695
  %v702 = vpow.pop %v701
  %v703 = vmul.f32 %v697, 1.442695
  %v704 = vpow.pop %v703
  %v705 = vmul.f32 %v698, 1.442695
  %v706 = vpow.pop %v705
  %v707 = vld [vmem:[%s3] sm:$0xff]
  %v708 = vld [vmem:[%s3 + $0x8] sm:$0xff]
  %v709 = vld [vmem:[%s3 + $0x10] sm:$0xff]
  %v710 = vld [vmem:[%s3 + $0x18] sm:$0xff]
  %v711 = vld [vmem:[%s3 + $0x20] sm:$0xff]
  %v712 = vld [vmem:[%s3 + $0x28] sm:$0xff]
  %v713 = vld [vmem:[%s3 + $0x30] sm:$0xff]
  %v714 = vld [vmem:[%s3 + $0x38] sm:$0xff]
  %v715 = vld [vmem:[%s3 + $0x40] sm:$0xff]
  %v716 = vld [vmem:[%s3 + $0x48] sm:$0xff]
  %v717 = vld [vmem:[%s3 + $0x50] sm:$0xff]
  %v718 = vld [vmem:[%s3 + $0x58] sm:$0xff]
  %v719 = vld [vmem:[%s3 + $0x60] sm:$0xff]
  %v720 = vld [vmem:[%s3 + $0x68] sm:$0xff]
  %v721 = vld [vmem:[%s3 + $0x70] sm:$0xff]
  %v722 = vld [vmem:[%s3 + $0x78] sm:$0xff]
  %723 = vmatprep.subr.mxu0 0.0
  %724 = vmatpush1.msra.mxu0 %v722
  %725 = vmatprep.subr.mxu0 0.0
  %726 = vmatpush1.msra.mxu0 %v721
  %727 = vmatprep.subr.mxu0 0.0
  %728 = vmatpush1.msra.mxu0 %v720
  %729 = vmatprep.subr.mxu0 0.0
  %730 = vmatpush1.msra.mxu0 %v719
  %731 = vmatprep.subr.mxu0 0.0
  %732 = vmatpush1.msra.mxu0 %v718
  %733 = vmatprep.subr.mxu0 0.0
  %734 = vmatpush1.msra.mxu0 %v717
  %735 = vmatprep.subr.mxu0 0.0
  %736 = vmatpush1.msra.mxu0 %v716
  %737 = vmatprep.subr.mxu0 0.0
  %738 = vmatpush1.msra.mxu0 %v715
  %739 = vmatprep.subr.mxu0 0.0
  %740 = vmatpush1.msra.mxu0 %v714
  %741 = vmatprep.subr.mxu0 0.0
  %742 = vmatpush1.msra.mxu0 %v713
  %743 = vmatprep.subr.mxu0 0.0
  %744 = vmatpush1.msra.mxu0 %v712
  %745 = vmatprep.subr.mxu0 0.0
  %746 = vmatpush1.msra.mxu0 %v711
  %747 = vmatprep.subr.mxu0 0.0
  %748 = vmatpush1.msra.mxu0 %v710
  %749 = vmatprep.subr.mxu0 0.0
  %750 = vmatpush1.msra.mxu0 %v709
  %751 = vmatprep.subr.mxu0 0.0
  %752 = vmatpush1.msra.mxu0 %v708
  %753 = vmatprep.subr.mxu0 0.0
  %754 = vmatpush1.msra.mxu0 %v707
  %755 = vmatprep.subr.mxu0 0.0
  %756 = vmatpush2.msra.mxu0 0.0
  %757 = vmatprep.subr.mxu0 0.0
  %758 = vmatpush2.msra.mxu0 0.0
  %759 = vmatprep.subr.mxu0 0.0
  %760 = vmatpush2.msra.mxu0 0.0
  %761 = vmatprep.subr.mxu0 0.0
  %762 = vmatpush2.msra.mxu0 0.0
  %763 = vmatprep.subr.mxu0 0.0
  %764 = vmatpush2.msra.mxu0 0.0
  %765 = vmatprep.subr.mxu0 0.0
  %766 = vmatpush2.msra.mxu0 0.0
  %767 = vmatprep.subr.mxu0 0.0
  %768 = vmatpush2.msra.mxu0 0.0
  %769 = vmatprep.subr.mxu0 0.0
  %770 = vmatpush2.msra.mxu0 0.0
  %771 = vmatprep.subr.mxu0 0.0
  %772 = vmatpush2.msra.mxu0 0.0
  %773 = vmatprep.subr.mxu0 0.0
  %774 = vmatpush2.msra.mxu0 0.0
  %775 = vmatprep.subr.mxu0 0.0
  %776 = vmatpush2.msra.mxu0 0.0
  %777 = vmatprep.subr.mxu0 0.0
  %778 = vmatpush2.msra.mxu0 0.0
  %779 = vmatprep.subr.mxu0 0.0
  %780 = vmatpush2.msra.mxu0 0.0
  %781 = vmatprep.subr.mxu0 0.0
  %782 = vmatpush2.msra.mxu0 0.0
  %783 = vmatprep.subr.mxu0 0.0
  %784 = vmatpush2.msra.mxu0 0.0
  %785 = vmatprep.subr.mxu0 0.0
  %786 = vmatpush2.msra.mxu0 0.0
  %787 = vmatprep.mubr.f32.mxu0 0.0
  %788 = vmatmul.mubr.f32.gmra.mxu0 %v700
  %v789 = vpop.f32.mrf.mxu0
  %v790 = vadd.f32 0.0, %v789
  %v791 = vpop.f32.mrf.mxu0
  %792 = vmatprep.mubr.f32.mxu0 0.0
  %793 = vmatmul.mubr.f32.gmra.mxu0 %v702
  %v794 = vpop.f32.mrf.mxu0
  %v795 = vadd.f32 0.0, %v794
  %v796 = vpop.f32.mrf.mxu0
  %797 = vmatprep.mubr.f32.mxu0 0.0
  %798 = vmatmul.mubr.f32.gmra.mxu0 %v704
  %v799 = vpop.f32.mrf.mxu0
  %v800 = vadd.f32 0.0, %v799
  %v801 = vpop.f32.mrf.mxu0
  %802 = vmatprep.mubr.f32.mxu0 0.0
  %803 = vmatmul.mubr.f32.gmra.mxu0 %v706
  %v804 = vpop.f32.mrf.mxu0
  %v805 = vadd.f32 0.0, %v804
  %v806 = vpop.f32.mrf.mxu0
  %807 = vdwg.mxu0
  %v808 = vmax.f32 %v790, 1e-30
  %v809 = vmax.f32 %v795, 1e-30
  %v810 = vmax.f32 %v800, 1e-30
  %v811 = vmax.f32 %v805, 1e-30
  %v812 = vrcp.pop %v808
  %v813 = vmul.f32 %v700, %v812
  %v814 = vrcp.pop %v809
  %v815 = vmul.f32 %v702, %v814
  %v816 = vrcp.pop %v810
  %v817 = vmul.f32 %v704, %v816
  %v818 = vrcp.pop %v811
  %v819 = vmul.f32 %v706, %v818
  %v820 = vpack.c.bf16 %v815, %v813
  %v821 = vpack.c.bf16 %v819, %v817
  %v822 = vld [vmem:[%s2] sm:$0xf]
  %v823 = vld [vmem:[%s2 + $0x4] sm:$0xf]
  %v824 = vld [vmem:[%s2 + $0x8] sm:$0xf]
  %v825 = vld [vmem:[%s2 + $0xc] sm:$0xf]
  %v826 = vld [vmem:[%s2 + $0x10] sm:$0xf]
  %v827 = vld [vmem:[%s2 + $0x14] sm:$0xf]
  %v828 = vld [vmem:[%s2 + $0x18] sm:$0xf]
  %v829 = vld [vmem:[%s2 + $0x1c] sm:$0xf]
  %v830 = vld [vmem:[%s2 + $0x20] sm:$0xf]
  %v831 = vld [vmem:[%s2 + $0x24] sm:$0xf]
  %v832 = vld [vmem:[%s2 + $0x28] sm:$0xf]
  %v833 = vld [vmem:[%s2 + $0x2c] sm:$0xf]
  %v834 = vld [vmem:[%s2 + $0x30] sm:$0xf]
  %v835 = vld [vmem:[%s2 + $0x34] sm:$0xf]
  %v836 = vld [vmem:[%s2 + $0x38] sm:$0xf]
  %v837 = vld [vmem:[%s2 + $0x3c] sm:$0xf]
  %v854 = vunpack.c.l.b16 %v822
  %v855 = vunpack.c.l.b16 %v823
  %v856 = vunpack.c.l.b16 %v824
  %v857 = vunpack.c.l.b16 %v825
  %v858 = vunpack.c.l.b16 %v826
  %v859 = vunpack.c.l.b16 %v827
  %v860 = vunpack.c.l.b16 %v828
  %v861 = vunpack.c.l.b16 %v829
  %v862 = vunpack.c.l.b16 %v830
  %v863 = vunpack.c.l.b16 %v831
  %v864 = vunpack.c.l.b16 %v832
  %v865 = vunpack.c.l.b16 %v833
  %v866 = vunpack.c.l.b16 %v834
  %v867 = vunpack.c.l.b16 %v835
  %v868 = vunpack.c.l.b16 %v836
  %v869 = vunpack.c.l.b16 %v837
  %v870 = vpack.c.b16 %v855, %v854
  %v871 = vpack.c.b16 %v857, %v856
  %v872 = vpack.c.b16 %v859, %v858
  %v873 = vpack.c.b16 %v861, %v860
  %v874 = vpack.c.b16 %v863, %v862
  %v875 = vpack.c.b16 %v865, %v864
  %v876 = vpack.c.b16 %v867, %v866
  %v877 = vpack.c.b16 %v869, %v868
  %886 = vmatprep.subr.bf16.mxu0 0
  %887 = vmatpush1.bf16.msra.mxu0 %v877
  %888 = vmatprep.subr.bf16.mxu0 0
  %889 = vmatpush1.bf16.msra.mxu0 %v876
  %890 = vmatprep.subr.bf16.mxu0 0
  %891 = vmatpush1.bf16.msra.mxu0 %v875
  %892 = vmatprep.subr.bf16.mxu0 0
  %893 = vmatpush1.bf16.msra.mxu0 %v874
  %894 = vmatprep.subr.bf16.mxu0 0
  %895 = vmatpush1.bf16.msra.mxu0 %v873
  %896 = vmatprep.subr.bf16.mxu0 0
  %897 = vmatpush1.bf16.msra.mxu0 %v872
  %898 = vmatprep.subr.bf16.mxu0 0
  %899 = vmatpush1.bf16.msra.mxu0 %v871
  %900 = vmatprep.subr.bf16.mxu0 0
  %901 = vmatpush1.bf16.msra.mxu0 %v870
  %902 = vmatprep.subr.bf16.mxu0 0
  %903 = vmatpush2.bf16.msra.mxu0 0
  %904 = vmatprep.subr.bf16.mxu0 0
  %905 = vmatpush2.bf16.msra.mxu0 0
  %906 = vmatprep.subr.bf16.mxu0 0
  %907 = vmatpush2.bf16.msra.mxu0 0
  %908 = vmatprep.subr.bf16.mxu0 0
  %909 = vmatpush2.bf16.msra.mxu0 0
  %910 = vmatprep.subr.bf16.mxu0 0
  %911 = vmatpush2.bf16.msra.mxu0 0
  %912 = vmatprep.subr.bf16.mxu0 0
  %913 = vmatpush2.bf16.msra.mxu0 0
  %914 = vmatprep.subr.bf16.mxu0 0
  %915 = vmatpush2.bf16.msra.mxu0 0
  %916 = vmatprep.subr.bf16.mxu0 0
  %917 = vmatpush2.bf16.msra.mxu0 0
  %918 = vmatprep.mubr.bf16.mxu0 0
  %919 = vmatmul.mubr.bf16.gmra.mxu0 %v820
  %v920 = vpop.f32.mrf.mxu0
  %v921 = vadd.f32 0.0, %v920
  %v922 = vpop.f32.mrf.mxu0
  %v923 = vpop.f32.mrf.mxu0
  %v924 = vadd.f32 0.0, %v923
  %v925 = vpop.f32.mrf.mxu0
  %926 = vmatprep.mubr.bf16.mxu0 0
  %927 = vmatmul.mubr.bf16.gmra.mxu0 %v821
  %v928 = vpop.f32.mrf.mxu0
  %v929 = vadd.f32 0.0, %v928
  %v930 = vpop.f32.mrf.mxu0
  %v931 = vpop.f32.mrf.mxu0
  %v932 = vadd.f32 0.0, %v931
  %v933 = vpop.f32.mrf.mxu0
  %934 = vdwg.mxu0
  %v935 = vld [vmem:[%s14] sm:$0xf]
  %v936 = vld [vmem:[%s14 + $0x4] sm:$0xf]
  %v937 = vld [vmem:[%s14 + $0x8] sm:$0xf]
  %v938 = vld [vmem:[%s14 + $0xc] sm:$0xf]
  %v939 = vld [vmem:[%s14 + $0x10] sm:$0xf]
  %v940 = vld [vmem:[%s14 + $0x14] sm:$0xf]
  %v941 = vld [vmem:[%s14 + $0x18] sm:$0xf]
  %v942 = vld [vmem:[%s14 + $0x1c] sm:$0xf]
  %v943 = vld [vmem:[%s15] sm:$0x1]
  %v944 = vpack.c.bf16 %v924, %v921
  %v945 = vpack.c.bf16 %v932, %v929
  %v947 = vlaneseq
  %v948 = vshrl.u32 %v947, 7
  %v949 = vsub.s32 0, %v948
  %v950 = vrot.slane %v943, %v949
  %v960 = vunpack.c.l.b16 %v935
  %v961 = vunpack.c.l.b16 %v936
  %v962 = vunpack.c.l.b16 %v937
  %v963 = vunpack.c.l.b16 %v938
  %v964 = vunpack.c.l.b16 %v939
  %v965 = vunpack.c.l.b16 %v940
  %v966 = vunpack.c.l.b16 %v941
  %v967 = vunpack.c.l.b16 %v942
  %v968 = vpack.c.b16 %v961, %v960
  %v969 = vpack.c.b16 %v963, %v962
  %v970 = vpack.c.b16 %v965, %v964
  %v971 = vpack.c.b16 %v967, %v966
  %v977 = vsel %vm253, %v944, 0
  %v980 = vsel %vm253, %v945, 0
  %982 = vmatprep.subr.bf16.mxu0 0
  %983 = vmatpush1.bf16.msra.mxu0 0
  %984 = vmatprep.subr.bf16.mxu0 0
  %985 = vmatpush1.bf16.msra.mxu0 0
  %986 = vmatprep.subr.bf16.mxu0 0
  %987 = vmatpush1.bf16.msra.mxu0 0
  %988 = vmatprep.subr.bf16.mxu0 0
  %989 = vmatpush1.bf16.msra.mxu0 0
  %990 = vmatprep.subr.bf16.mxu0 0
  %991 = vmatpush1.bf16.msra.mxu0 %v971
  %992 = vmatprep.subr.bf16.mxu0 0
  %993 = vmatpush1.bf16.msra.mxu0 %v970
  %994 = vmatprep.subr.bf16.mxu0 0
  %995 = vmatpush1.bf16.msra.mxu0 %v969
  %996 = vmatprep.subr.bf16.mxu0 0
  %997 = vmatpush1.bf16.msra.mxu0 %v968
  %998 = vmatprep.subr.bf16.mxu0 0
  %999 = vmatpush2.bf16.msra.mxu0 0
  %1000 = vmatprep.subr.bf16.mxu0 0
  %1001 = vmatpush2.bf16.msra.mxu0 0
  %1002 = vmatprep.subr.bf16.mxu0 0
  %1003 = vmatpush2.bf16.msra.mxu0 0
  %1004 = vmatprep.subr.bf16.mxu0 0
  %1005 = vmatpush2.bf16.msra.mxu0 0
  %1006 = vmatprep.subr.bf16.mxu0 0
  %1007 = vmatpush2.bf16.msra.mxu0 0
  %1008 = vmatprep.subr.bf16.mxu0 0
  %1009 = vmatpush2.bf16.msra.mxu0 0
  %1010 = vmatprep.subr.bf16.mxu0 0
  %1011 = vmatpush2.bf16.msra.mxu0 0
  %1012 = vmatprep.subr.bf16.mxu0 0
  %1013 = vmatpush2.bf16.msra.mxu0 0
  %1014 = vmatprep.mubr.bf16.mxu0 0
  %1015 = vmatmul.mubr.bf16.gmra.mxu0 %v977
  %v1016 = vpop.f32.mrf.mxu0
  %v1017 = vadd.f32 %v950, %v1016
  %v1018 = vpop.f32.mrf.mxu0
  %v1019 = vpop.f32.mrf.mxu0
  %v1020 = vadd.f32 %v950, %v1019
  %v1021 = vpop.f32.mrf.mxu0
  %1022 = vmatprep.mubr.bf16.mxu0 0
  %1023 = vmatmul.mubr.bf16.gmra.mxu0 %v980
  %v1024 = vpop.f32.mrf.mxu0
  %v1025 = vadd.f32 %v950, %v1024
  %v1026 = vpop.f32.mrf.mxu0
  %v1027 = vpop.f32.mrf.mxu0
  %v1028 = vadd.f32 %v950, %v1027
  %v1029 = vpop.f32.mrf.mxu0
  %1030 = vdwg.mxu0
  %v1031 = vadd.f32 %v413, %v1017
  %v1032 = vadd.f32 %v416, %v1020
  %v1033 = vadd.f32 %v421, %v1025
  %v1034 = vadd.f32 %v424, %v1028
  %v1035 = vld [vmem:[%s10] sm:$0x1]
  %v1036 = vld [vmem:[%s11] sm:$0x1]
  %v1037 = vsel %vm253, %v1031, 0.0
  %1038 = vadd.xlane.f32.xlu0 %v1037
  %v1039 = vpop.xlane.xlu0 %1038
  %v1040 = vsel %vm253, %v1032, 0.0
  %1041 = vadd.xlane.f32.xlu0 %v1040
  %v1042 = vpop.xlane.xlu0 %1041
  %v1043 = vsel %vm253, %v1033, 0.0
  %1044 = vadd.xlane.f32.xlu0 %v1043
  %v1045 = vpop.xlane.xlu0 %1044
  %v1046 = vsel %vm253, %v1034, 0.0
  %1047 = vadd.xlane.f32.xlu0 %v1046
  %v1048 = vpop.xlane.xlu0 %1047
  %v1049 = vmul.f32 %v1039, %v441
  %v1050 = vmul.f32 %v1042, %v441
  %v1051 = vmul.f32 %v1045, %v441
  %v1052 = vmul.f32 %v1048, %v441
  %v1053 = vsub.f32 %v1031, %v1049
  %v1054 = vsub.f32 %v1032, %v1050
  %v1055 = vsub.f32 %v1033, %v1051
  %v1056 = vsub.f32 %v1034, %v1052
  %v1057 = vmul.f32 %v1053, %v1053
  %v1058 = vmul.f32 %v1054, %v1054
  %v1059 = vmul.f32 %v1055, %v1055
  %v1060 = vmul.f32 %v1056, %v1056
  %v1061 = vsel %vm253, %v1057, 0.0
  %1062 = vadd.xlane.f32.xlu0 %v1061
  %v1063 = vpop.xlane.xlu0 %1062
  %v1064 = vsel %vm253, %v1058, 0.0
  %1065 = vadd.xlane.f32.xlu0 %v1064
  %v1066 = vpop.xlane.xlu0 %1065
  %v1067 = vsel %vm253, %v1059, 0.0
  %1068 = vadd.xlane.f32.xlu0 %v1067
  %v1069 = vpop.xlane.xlu0 %1068
  %v1070 = vsel %vm253, %v1060, 0.0
  %1071 = vadd.xlane.f32.xlu0 %v1070
  %v1072 = vpop.xlane.xlu0 %1071
  %v1073 = vmul.f32 %v1063, %v441
  %v1074 = vmul.f32 %v1066, %v441
  %v1075 = vmul.f32 %v1069, %v441
  %v1076 = vmul.f32 %v1072, %v441
  %v1077 = vadd.f32 %v1073, 1e-05
  %v1078 = vadd.f32 %v1074, 1e-05
  %v1079 = vadd.f32 %v1075, 1e-05
  %v1080 = vadd.f32 %v1076, 1e-05
  %v1081 = vrsqrt.pop %v1077
  %v1082 = vrsqrt.pop %v1078
  %v1083 = vrsqrt.pop %v1079
  %v1084 = vrsqrt.pop %v1080
  %v1085 = vmul.f32 %v1053, %v1081
  %v1086 = vmul.f32 %v1054, %v1082
  %v1087 = vmul.f32 %v1055, %v1083
  %v1088 = vmul.f32 %v1056, %v1084
  %v1090 = vlaneseq
  %v1091 = vshrl.u32 %v1090, 7
  %v1092 = vsub.s32 0, %v1091
  %v1093 = vrot.slane %v1035, %v1092
  %v1095 = vmul.f32 %v1085, %v1093
  %v1096 = vmul.f32 %v1086, %v1093
  %v1097 = vmul.f32 %v1087, %v1093
  %v1098 = vmul.f32 %v1088, %v1093
  %v1100 = vlaneseq
  %v1101 = vshrl.u32 %v1100, 7
  %v1102 = vsub.s32 0, %v1101
  %v1103 = vrot.slane %v1036, %v1102
  %v1105 = vadd.f32 %v1095, %v1103
  %v1106 = vadd.f32 %v1096, %v1103
  %v1107 = vadd.f32 %v1097, %v1103
  %v1108 = vadd.f32 %v1098, %v1103
  %v1109 = vld [vmem:[%s16] sm:$0xff]
  %v1110 = vld [vmem:[%s16 + $0x8] sm:$0xff]
  %v1111 = vld [vmem:[%s16 + $0x10] sm:$0xff]
  %v1112 = vld [vmem:[%s16 + $0x18] sm:$0xff]
  %v1113 = vld [vmem:[%s16 + $0x20] sm:$0xff]
  %v1114 = vld [vmem:[%s16 + $0x28] sm:$0xff]
  %v1115 = vld [vmem:[%s16 + $0x30] sm:$0xff]
  %v1116 = vld [vmem:[%s16 + $0x38] sm:$0xff]
  %v1117 = vld [vmem:[%s17] sm:$0x3]
  %v1118 = vpack.c.bf16 %v1106, %v1105
  %v1119 = vpack.c.bf16 %v1108, %v1107
  %v1121 = vlaneseq
  %v1122 = vshrl.u32 %v1121, 7
  %v1123 = vsub.s32 0, %v1122
  %v1124 = vrot.slane %v1117, %v1123
  %v1125 = vlaneseq
  %v1126 = vshrl.u32 %v1125, 7
  %v1127 = vsub.s32 1, %v1126
  %v1128 = vrot.slane %v1117, %v1127
  %v1139 = vunpack.c.l.b16 %v1109
  %v1140 = vunpack.c.h.b16 %v1109
  %v1141 = vunpack.c.l.b16 %v1110
  %v1142 = vunpack.c.h.b16 %v1110
  %v1143 = vunpack.c.l.b16 %v1111
  %v1144 = vunpack.c.h.b16 %v1111
  %v1145 = vunpack.c.l.b16 %v1112
  %v1146 = vunpack.c.h.b16 %v1112
  %v1147 = vunpack.c.l.b16 %v1113
  %v1148 = vunpack.c.h.b16 %v1113
  %v1149 = vunpack.c.l.b16 %v1114
  %v1150 = vunpack.c.h.b16 %v1114
  %v1151 = vunpack.c.l.b16 %v1115
  %v1152 = vunpack.c.h.b16 %v1115
  %v1153 = vunpack.c.l.b16 %v1116
  %v1154 = vunpack.c.h.b16 %v1116
  %v1155 = vpack.c.b16 %v1141, %v1139
  %v1156 = vpack.c.b16 %v1142, %v1140
  %v1157 = vpack.c.b16 %v1145, %v1143
  %v1158 = vpack.c.b16 %v1146, %v1144
  %v1159 = vpack.c.b16 %v1149, %v1147
  %v1160 = vpack.c.b16 %v1150, %v1148
  %v1161 = vpack.c.b16 %v1153, %v1151
  %v1162 = vpack.c.b16 %v1154, %v1152
  %v1172 = vsel %vm253, %v1118, 0
  %v1175 = vsel %vm253, %v1119, 0
  %1177 = vmatprep.subr.bf16.mxu0 0
  %1178 = vmatpush1.bf16.msra.mxu0 0
  %1179 = vmatprep.subr.bf16.mxu0 0
  %1180 = vmatpush1.bf16.msra.mxu0 0
  %1181 = vmatprep.subr.bf16.mxu0 0
  %1182 = vmatpush1.bf16.msra.mxu0 0
  %1183 = vmatprep.subr.bf16.mxu0 0
  %1184 = vmatpush1.bf16.msra.mxu0 0
  %1185 = vmatprep.subr.bf16.mxu0 %v1162
  %1186 = vmatpush1.bf16.msra.mxu0 %v1161
  %1187 = vmatprep.subr.bf16.mxu0 %v1160
  %1188 = vmatpush1.bf16.msra.mxu0 %v1159
  %1189 = vmatprep.subr.bf16.mxu0 %v1158
  %1190 = vmatpush1.bf16.msra.mxu0 %v1157
  %1191 = vmatprep.subr.bf16.mxu0 %v1156
  %1192 = vmatpush1.bf16.msra.mxu0 %v1155
  %1193 = vmatprep.subr.bf16.mxu0 0
  %1194 = vmatpush2.bf16.msra.mxu0 0
  %1195 = vmatprep.subr.bf16.mxu0 0
  %1196 = vmatpush2.bf16.msra.mxu0 0
  %1197 = vmatprep.subr.bf16.mxu0 0
  %1198 = vmatpush2.bf16.msra.mxu0 0
  %1199 = vmatprep.subr.bf16.mxu0 0
  %1200 = vmatpush2.bf16.msra.mxu0 0
  %1201 = vmatprep.subr.bf16.mxu0 0
  %1202 = vmatpush2.bf16.msra.mxu0 0
  %1203 = vmatprep.subr.bf16.mxu0 0
  %1204 = vmatpush2.bf16.msra.mxu0 0
  %1205 = vmatprep.subr.bf16.mxu0 0
  %1206 = vmatpush2.bf16.msra.mxu0 0
  %1207 = vmatprep.subr.bf16.mxu0 0
  %1208 = vmatpush2.bf16.msra.mxu0 0
  %1209 = vmatprep.mubr.bf16.mxu0 0
  %1210 = vmatmul.mubr.bf16.gmra.mxu0 %v1172
  %v1211 = vpop.f32.mrf.mxu0
  %v1212 = vadd.f32 %v1124, %v1211
  %v1213 = vpop.f32.mrf.mxu0
  %v1214 = vadd.f32 %v1128, %v1213
  %v1215 = vpop.f32.mrf.mxu0
  %v1216 = vadd.f32 %v1124, %v1215
  %v1217 = vpop.f32.mrf.mxu0
  %v1218 = vadd.f32 %v1128, %v1217
  %1219 = vmatprep.mubr.bf16.mxu0 0
  %1220 = vmatmul.mubr.bf16.gmra.mxu0 %v1175
  %v1221 = vpop.f32.mrf.mxu0
  %v1222 = vadd.f32 %v1124, %v1221
  %v1223 = vpop.f32.mrf.mxu0
  %v1224 = vadd.f32 %v1128, %v1223
  %v1225 = vpop.f32.mrf.mxu0
  %v1226 = vadd.f32 %v1124, %v1225
  %v1227 = vpop.f32.mrf.mxu0
  %v1228 = vadd.f32 %v1128, %v1227
  %1229 = vdwg.mxu0
  %v1230 = vmul.f32 %v1212, 0.5
  %v1231 = vmul.f32 %v1214, 0.5
  %v1232 = vmul.f32 %v1216, 0.5
  %v1233 = vmul.f32 %v1218, 0.5
  %v1234 = vmul.f32 %v1222, 0.5
  %v1235 = vmul.f32 %v1224, 0.5
  %v1236 = vmul.f32 %v1226, 0.5
  %v1237 = vmul.f32 %v1228, 0.5
  %v1238 = vmul.f32 %v1212, 0.70710677
  %v1239 = vmul.f32 %v1214, 0.70710677
  %v1240 = vmul.f32 %v1216, 0.70710677
  %v1241 = vmul.f32 %v1218, 0.70710677
  %v1242 = vmul.f32 %v1222, 0.70710677
  %v1243 = vmul.f32 %v1224, 0.70710677
  %v1244 = vmul.f32 %v1226, 0.70710677
  %v1245 = vmul.f32 %v1228, 0.70710677
  %v1246 = verf.f32.pop %v1238
  %v1247 = verf.f32.pop %v1239
  %v1248 = verf.f32.pop %v1240
  %v1249 = verf.f32.pop %v1241
  %v1250 = verf.f32.pop %v1242
  %v1251 = verf.f32.pop %v1243
  %v1252 = verf.f32.pop %v1244
  %v1253 = verf.f32.pop %v1245
  %v1254 = vadd.f32 %v1246, 1.0
  %v1255 = vadd.f32 %v1247, 1.0
  %v1256 = vadd.f32 %v1248, 1.0
  %v1257 = vadd.f32 %v1249, 1.0
  %v1258 = vadd.f32 %v1250, 1.0
  %v1259 = vadd.f32 %v1251, 1.0
  %v1260 = vadd.f32 %v1252, 1.0
  %v1261 = vadd.f32 %v1253, 1.0
  %v1262 = vmul.f32 %v1230, %v1254
  %v1263 = vmul.f32 %v1231, %v1255
  %v1264 = vmul.f32 %v1232, %v1256
  %v1265 = vmul.f32 %v1233, %v1257
  %v1266 = vmul.f32 %v1234, %v1258
  %v1267 = vmul.f32 %v1235, %v1259
  %v1268 = vmul.f32 %v1236, %v1260
  %v1269 = vmul.f32 %v1237, %v1261
  %v1270 = vld [vmem:[%s18] sm:$0xf]
  %v1271 = vld [vmem:[%s18 + $0x4] sm:$0xf]
  %v1272 = vld [vmem:[%s18 + $0x8] sm:$0xf]
  %v1273 = vld [vmem:[%s18 + $0xc] sm:$0xf]
  %v1274 = vld [vmem:[%s18 + $0x10] sm:$0xf]
  %v1275 = vld [vmem:[%s18 + $0x14] sm:$0xf]
  %v1276 = vld [vmem:[%s18 + $0x18] sm:$0xf]
  %v1277 = vld [vmem:[%s18 + $0x1c] sm:$0xf]
  %v1278 = vld [vmem:[%s18 + $0x20] sm:$0xf]
  %v1279 = vld [vmem:[%s18 + $0x24] sm:$0xf]
  %v1280 = vld [vmem:[%s18 + $0x28] sm:$0xf]
  %v1281 = vld [vmem:[%s18 + $0x2c] sm:$0xf]
  %v1282 = vld [vmem:[%s18 + $0x30] sm:$0xf]
  %v1283 = vld [vmem:[%s18 + $0x34] sm:$0xf]
  %v1284 = vld [vmem:[%s18 + $0x38] sm:$0xf]
  %v1285 = vld [vmem:[%s18 + $0x3c] sm:$0xf]
  %v1286 = vld [vmem:[%s18 + $0x40] sm:$0xf]
  %v1287 = vld [vmem:[%s18 + $0x44] sm:$0xf]
  %v1288 = vld [vmem:[%s18 + $0x48] sm:$0xf]
  %v1289 = vld [vmem:[%s18 + $0x4c] sm:$0xf]
  %v1290 = vld [vmem:[%s18 + $0x50] sm:$0xf]
  %v1291 = vld [vmem:[%s18 + $0x54] sm:$0xf]
  %v1292 = vld [vmem:[%s18 + $0x58] sm:$0xf]
  %v1293 = vld [vmem:[%s18 + $0x5c] sm:$0xf]
  %v1294 = vld [vmem:[%s18 + $0x60] sm:$0xf]
  %v1295 = vld [vmem:[%s18 + $0x64] sm:$0xf]
  %v1296 = vld [vmem:[%s18 + $0x68] sm:$0xf]
  %v1297 = vld [vmem:[%s18 + $0x6c] sm:$0xf]
  %v1298 = vld [vmem:[%s18 + $0x70] sm:$0xf]
  %v1299 = vld [vmem:[%s18 + $0x74] sm:$0xf]
  %v1300 = vld [vmem:[%s18 + $0x78] sm:$0xf]
  %v1301 = vld [vmem:[%s18 + $0x7c] sm:$0xf]
  %v1302 = vld [vmem:[%s19] sm:$0x1]
  %v1303 = vpack.c.bf16 %v1264, %v1262
  %v1304 = vpack.c.bf16 %v1265, %v1263
  %v1305 = vpack.c.bf16 %v1268, %v1266
  %v1306 = vpack.c.bf16 %v1269, %v1267
  %v1308 = vlaneseq
  %v1309 = vshrl.u32 %v1308, 7
  %v1310 = vsub.s32 0, %v1309
  %v1311 = vrot.slane %v1302, %v1310
  %v1345 = vunpack.c.l.b16 %v1270
  %v1346 = vunpack.c.l.b16 %v1271
  %v1347 = vunpack.c.l.b16 %v1272
  %v1348 = vunpack.c.l.b16 %v1273
  %v1349 = vunpack.c.l.b16 %v1274
  %v1350 = vunpack.c.l.b16 %v1275
  %v1351 = vunpack.c.l.b16 %v1276
  %v1352 = vunpack.c.l.b16 %v1277
  %v1353 = vunpack.c.l.b16 %v1278
  %v1354 = vunpack.c.l.b16 %v1279
  %v1355 = vunpack.c.l.b16 %v1280
  %v1356 = vunpack.c.l.b16 %v1281
  %v1357 = vunpack.c.l.b16 %v1282
  %v1358 = vunpack.c.l.b16 %v1283
  %v1359 = vunpack.c.l.b16 %v1284
  %v1360 = vunpack.c.l.b16 %v1285
  %v1361 = vunpack.c.l.b16 %v1286
  %v1362 = vunpack.c.l.b16 %v1287
  %v1363 = vunpack.c.l.b16 %v1288
  %v1364 = vunpack.c.l.b16 %v1289
  %v1365 = vunpack.c.l.b16 %v1290
  %v1366 = vunpack.c.l.b16 %v1291
  %v1367 = vunpack.c.l.b16 %v1292
  %v1368 = vunpack.c.l.b16 %v1293
  %v1369 = vunpack.c.l.b16 %v1294
  %v1370 = vunpack.c.l.b16 %v1295
  %v1371 = vunpack.c.l.b16 %v1296
  %v1372 = vunpack.c.l.b16 %v1297
  %v1373 = vunpack.c.l.b16 %v1298
  %v1374 = vunpack.c.l.b16 %v1299
  %v1375 = vunpack.c.l.b16 %v1300
  %v1376 = vunpack.c.l.b16 %v1301
  %v1377 = vpack.c.b16 %v1346, %v1345
  %v1378 = vpack.c.b16 %v1348, %v1347
  %v1379 = vpack.c.b16 %v1350, %v1349
  %v1380 = vpack.c.b16 %v1352, %v1351
  %v1381 = vpack.c.b16 %v1354, %v1353
  %v1382 = vpack.c.b16 %v1356, %v1355
  %v1383 = vpack.c.b16 %v1358, %v1357
  %v1384 = vpack.c.b16 %v1360, %v1359
  %v1385 = vpack.c.b16 %v1362, %v1361
  %v1386 = vpack.c.b16 %v1364, %v1363
  %v1387 = vpack.c.b16 %v1366, %v1365
  %v1388 = vpack.c.b16 %v1368, %v1367
  %v1389 = vpack.c.b16 %v1370, %v1369
  %v1390 = vpack.c.b16 %v1372, %v1371
  %v1391 = vpack.c.b16 %v1374, %v1373
  %v1392 = vpack.c.b16 %v1376, %v1375
  %1409 = vmatprep.subr.bf16.mxu0 0
  %1410 = vmatpush1.bf16.msra.mxu0 %v1384
  %1411 = vmatprep.subr.bf16.mxu0 0
  %1412 = vmatpush1.bf16.msra.mxu0 %v1383
  %1413 = vmatprep.subr.bf16.mxu0 0
  %1414 = vmatpush1.bf16.msra.mxu0 %v1382
  %1415 = vmatprep.subr.bf16.mxu0 0
  %1416 = vmatpush1.bf16.msra.mxu0 %v1381
  %1417 = vmatprep.subr.bf16.mxu0 0
  %1418 = vmatpush1.bf16.msra.mxu0 %v1380
  %1419 = vmatprep.subr.bf16.mxu0 0
  %1420 = vmatpush1.bf16.msra.mxu0 %v1379
  %1421 = vmatprep.subr.bf16.mxu0 0
  %1422 = vmatpush1.bf16.msra.mxu0 %v1378
  %1423 = vmatprep.subr.bf16.mxu0 0
  %1424 = vmatpush1.bf16.msra.mxu0 %v1377
  %1425 = vmatprep.subr.bf16.mxu0 0
  %1426 = vmatpush2.bf16.msra.mxu0 %v1392
  %1427 = vmatprep.subr.bf16.mxu0 0
  %1428 = vmatpush2.bf16.msra.mxu0 %v1391
  %1429 = vmatprep.subr.bf16.mxu0 0
  %1430 = vmatpush2.bf16.msra.mxu0 %v1390
  %1431 = vmatprep.subr.bf16.mxu0 0
  %1432 = vmatpush2.bf16.msra.mxu0 %v1389
  %1433 = vmatprep.subr.bf16.mxu0 0
  %1434 = vmatpush2.bf16.msra.mxu0 %v1388
  %1435 = vmatprep.subr.bf16.mxu0 0
  %1436 = vmatpush2.bf16.msra.mxu0 %v1387
  %1437 = vmatprep.subr.bf16.mxu0 0
  %1438 = vmatpush2.bf16.msra.mxu0 %v1386
  %1439 = vmatprep.subr.bf16.mxu0 0
  %1440 = vmatpush2.bf16.msra.mxu0 %v1385
  %1441 = vmatprep.mubr.bf16.mxu0 %v1304
  %1442 = vmatmul.mubr.bf16.gmra.mxu0 %v1303
  %v1443 = vpop.f32.mrf.mxu0
  %v1444 = vadd.f32 %v1311, %v1443
  %v1445 = vpop.f32.mrf.mxu0
  %v1446 = vpop.f32.mrf.mxu0
  %v1447 = vadd.f32 %v1311, %v1446
  %v1448 = vpop.f32.mrf.mxu0
  %1449 = vmatprep.mubr.bf16.mxu0 %v1306
  %1450 = vmatmul.mubr.bf16.gmra.mxu0 %v1305
  %v1451 = vpop.f32.mrf.mxu0
  %v1452 = vadd.f32 %v1311, %v1451
  %v1453 = vpop.f32.mrf.mxu0
  %v1454 = vpop.f32.mrf.mxu0
  %v1455 = vadd.f32 %v1311, %v1454
  %v1456 = vpop.f32.mrf.mxu0
  %1457 = vdwg.mxu0
  %v1458 = vadd.f32 %v1031, %v1444
  %v1459 = vadd.f32 %v1032, %v1447
  %v1460 = vadd.f32 %v1033, %v1452
  %v1461 = vadd.f32 %v1034, %v1455
  %s1462 = scalar_lea.vmem %s8, 1
  %v1463 = vld [vmem:[%s1462] sm:$0x1]
  %s1464 = scalar_lea.vmem %s9, 1
  %v1465 = vld [vmem:[%s1464] sm:$0x1]
  %v1466 = vsel %vm253, %v1458, 0.0
  %1467 = vadd.xlane.f32.xlu0 %v1466
  %v1468 = vpop.xlane.xlu0 %1467
  %v1469 = vsel %vm253, %v1459, 0.0
  %1470 = vadd.xlane.f32.xlu0 %v1469
  %v1471 = vpop.xlane.xlu0 %1470
  %v1472 = vsel %vm253, %v1460, 0.0
  %1473 = vadd.xlane.f32.xlu0 %v1472
  %v1474 = vpop.xlane.xlu0 %1473
  %v1475 = vsel %vm253, %v1461, 0.0
  %1476 = vadd.xlane.f32.xlu0 %v1475
  %v1477 = vpop.xlane.xlu0 %1476
  %v1478 = vmul.f32 %v1468, %v441
  %v1479 = vmul.f32 %v1471, %v441
  %v1480 = vmul.f32 %v1474, %v441
  %v1481 = vmul.f32 %v1477, %v441
  %v1482 = vsub.f32 %v1458, %v1478
  %v1483 = vsub.f32 %v1459, %v1479
  %v1484 = vsub.f32 %v1460, %v1480
  %v1485 = vsub.f32 %v1461, %v1481
  %v1486 = vmul.f32 %v1482, %v1482
  %v1487 = vmul.f32 %v1483, %v1483
  %v1488 = vmul.f32 %v1484, %v1484
  %v1489 = vmul.f32 %v1485, %v1485
  %v1490 = vsel %vm253, %v1486, 0.0
  %1491 = vadd.xlane.f32.xlu0 %v1490
  %v1492 = vpop.xlane.xlu0 %1491
  %v1493 = vsel %vm253, %v1487, 0.0
  %1494 = vadd.xlane.f32.xlu0 %v1493
  %v1495 = vpop.xlane.xlu0 %1494
  %v1496 = vsel %vm253, %v1488, 0.0
  %1497 = vadd.xlane.f32.xlu0 %v1496
  %v1498 = vpop.xlane.xlu0 %1497
  %v1499 = vsel %vm253, %v1489, 0.0
  %1500 = vadd.xlane.f32.xlu0 %v1499
  %v1501 = vpop.xlane.xlu0 %1500
  %v1502 = vmul.f32 %v1492, %v441
  %v1503 = vmul.f32 %v1495, %v441
  %v1504 = vmul.f32 %v1498, %v441
  %v1505 = vmul.f32 %v1501, %v441
  %v1506 = vadd.f32 %v1502, 1e-05
  %v1507 = vadd.f32 %v1503, 1e-05
  %v1508 = vadd.f32 %v1504, 1e-05
  %v1509 = vadd.f32 %v1505, 1e-05
  %v1510 = vrsqrt.pop %v1506
  %v1511 = vrsqrt.pop %v1507
  %v1512 = vrsqrt.pop %v1508
  %v1513 = vrsqrt.pop %v1509
  %v1514 = vmul.f32 %v1482, %v1510
  %v1515 = vmul.f32 %v1483, %v1511
  %v1516 = vmul.f32 %v1484, %v1512
  %v1517 = vmul.f32 %v1485, %v1513
  %v1519 = vlaneseq
  %v1520 = vshrl.u32 %v1519, 7
  %v1521 = vsub.s32 0, %v1520
  %v1522 = vrot.slane %v1463, %v1521
  %v1524 = vmul.f32 %v1514, %v1522
  %v1525 = vmul.f32 %v1515, %v1522
  %v1526 = vmul.f32 %v1516, %v1522
  %v1527 = vmul.f32 %v1517, %v1522
  %v1529 = vlaneseq
  %v1530 = vshrl.u32 %v1529, 7
  %v1531 = vsub.s32 0, %v1530
  %v1532 = vrot.slane %v1465, %v1531
  %v1534 = vadd.f32 %v1524, %v1532
  %v1535 = vadd.f32 %v1525, %v1532
  %v1536 = vadd.f32 %v1526, %v1532
  %v1537 = vadd.f32 %v1527, %v1532
  %s1538 = scalar_lea.vmem %s12, 32
  %v1539 = vld [vmem:[%s1538] sm:$0xf]
  %v1540 = vld [vmem:[%s1538 + $0x4] sm:$0xf]
  %v1541 = vld [vmem:[%s1538 + $0x8] sm:$0xf]
  %v1542 = vld [vmem:[%s1538 + $0xc] sm:$0xf]
  %v1543 = vld [vmem:[%s1538 + $0x10] sm:$0xf]
  %v1544 = vld [vmem:[%s1538 + $0x14] sm:$0xf]
  %v1545 = vld [vmem:[%s1538 + $0x18] sm:$0xf]
  %v1546 = vld [vmem:[%s1538 + $0x1c] sm:$0xf]
  %s1547 = scalar_lea.vmem %s13, 1
  %v1548 = vld [vmem:[%s1547] sm:$0x1]
  %v1549 = vpack.c.bf16 %v1535, %v1534
  %v1550 = vpack.c.bf16 %v1537, %v1536
  %v1552 = vlaneseq
  %v1553 = vshrl.u32 %v1552, 7
  %v1554 = vsub.s32 0, %v1553
  %v1555 = vrot.slane %v1548, %v1554
  %v1565 = vunpack.c.l.b16 %v1539
  %v1566 = vunpack.c.l.b16 %v1540
  %v1567 = vunpack.c.l.b16 %v1541
  %v1568 = vunpack.c.l.b16 %v1542
  %v1569 = vunpack.c.l.b16 %v1543
  %v1570 = vunpack.c.l.b16 %v1544
  %v1571 = vunpack.c.l.b16 %v1545
  %v1572 = vunpack.c.l.b16 %v1546
  %v1573 = vpack.c.b16 %v1566, %v1565
  %v1574 = vpack.c.b16 %v1568, %v1567
  %v1575 = vpack.c.b16 %v1570, %v1569
  %v1576 = vpack.c.b16 %v1572, %v1571
  %v1582 = vsel %vm253, %v1549, 0
  %v1585 = vsel %vm253, %v1550, 0
  %1587 = vmatprep.subr.bf16.mxu0 0
  %1588 = vmatpush1.bf16.msra.mxu0 0
  %1589 = vmatprep.subr.bf16.mxu0 0
  %1590 = vmatpush1.bf16.msra.mxu0 0
  %1591 = vmatprep.subr.bf16.mxu0 0
  %1592 = vmatpush1.bf16.msra.mxu0 0
  %1593 = vmatprep.subr.bf16.mxu0 0
  %1594 = vmatpush1.bf16.msra.mxu0 0
  %1595 = vmatprep.subr.bf16.mxu0 0
  %1596 = vmatpush1.bf16.msra.mxu0 %v1576
  %1597 = vmatprep.subr.bf16.mxu0 0
  %1598 = vmatpush1.bf16.msra.mxu0 %v1575
  %1599 = vmatprep.subr.bf16.mxu0 0
  %1600 = vmatpush1.bf16.msra.mxu0 %v1574
  %1601 = vmatprep.subr.bf16.mxu0 0
  %1602 = vmatpush1.bf16.msra.mxu0 %v1573
  %1603 = vmatprep.subr.bf16.mxu0 0
  %1604 = vmatpush2.bf16.msra.mxu0 0
  %1605 = vmatprep.subr.bf16.mxu0 0
  %1606 = vmatpush2.bf16.msra.mxu0 0
  %1607 = vmatprep.subr.bf16.mxu0 0
  %1608 = vmatpush2.bf16.msra.mxu0 0
  %1609 = vmatprep.subr.bf16.mxu0 0
  %1610 = vmatpush2.bf16.msra.mxu0 0
  %1611 = vmatprep.subr.bf16.mxu0 0
  %1612 = vmatpush2.bf16.msra.mxu0 0
  %1613 = vmatprep.subr.bf16.mxu0 0
  %1614 = vmatpush2.bf16.msra.mxu0 0
  %1615 = vmatprep.subr.bf16.mxu0 0
  %1616 = vmatpush2.bf16.msra.mxu0 0
  %1617 = vmatprep.subr.bf16.mxu0 0
  %1618 = vmatpush2.bf16.msra.mxu0 0
  %1619 = vmatprep.mubr.bf16.mxu0 0
  %1620 = vmatmul.mubr.bf16.gmra.mxu0 %v1582
  %v1621 = vpop.f32.mrf.mxu0
  %v1622 = vadd.f32 %v1555, %v1621
  %v1623 = vpop.f32.mrf.mxu0
  %v1624 = vpop.f32.mrf.mxu0
  %v1625 = vadd.f32 %v1555, %v1624
  %v1626 = vpop.f32.mrf.mxu0
  %1627 = vmatprep.mubr.bf16.mxu0 0
  %1628 = vmatmul.mubr.bf16.gmra.mxu0 %v1585
  %v1629 = vpop.f32.mrf.mxu0
  %v1630 = vadd.f32 %v1555, %v1629
  %v1631 = vpop.f32.mrf.mxu0
  %v1632 = vpop.f32.mrf.mxu0
  %v1633 = vadd.f32 %v1555, %v1632
  %v1634 = vpop.f32.mrf.mxu0
  %1635 = vdwg.mxu0
  %v1636 = vpack.c.bf16 %v1625, %v1622
  %v1637 = vpack.c.bf16 %v1633, %v1630
  %s1638 = scalar_lea.vmem %s1, 32
  %v1639 = vld [vmem:[%s1638] sm:$0xf]
  %v1640 = vld [vmem:[%s1638 + $0x4] sm:$0xf]
  %v1641 = vld [vmem:[%s1638 + $0x8] sm:$0xf]
  %v1642 = vld [vmem:[%s1638 + $0xc] sm:$0xf]
  %v1643 = vld [vmem:[%s1638 + $0x10] sm:$0xf]
  %v1644 = vld [vmem:[%s1638 + $0x14] sm:$0xf]
  %v1645 = vld [vmem:[%s1638 + $0x18] sm:$0xf]
  %v1646 = vld [vmem:[%s1638 + $0x1c] sm:$0xf]
  %v1655 = vunpack.c.l.b16 %v1639
  %v1656 = vunpack.c.l.b16 %v1640
  %v1657 = vunpack.c.l.b16 %v1641
  %v1658 = vunpack.c.l.b16 %v1642
  %v1659 = vunpack.c.l.b16 %v1643
  %v1660 = vunpack.c.l.b16 %v1644
  %v1661 = vunpack.c.l.b16 %v1645
  %v1662 = vunpack.c.l.b16 %v1646
  %v1663 = vpack.c.b16 %v1656, %v1655
  %v1664 = vpack.c.b16 %v1658, %v1657
  %v1665 = vpack.c.b16 %v1660, %v1659
  %v1666 = vpack.c.b16 %v1662, %v1661
  %v1672 = vsel %vm253, %v1636, 0
  %v1675 = vsel %vm253, %v1637, 0
  %1677 = vmatprep.subr.bf16.mxu0 0
  %1678 = vmatpush1.bf16.msra.mxu0 0
  %1679 = vmatprep.subr.bf16.mxu0 0
  %1680 = vmatpush1.bf16.msra.mxu0 0
  %1681 = vmatprep.subr.bf16.mxu0 0
  %1682 = vmatpush1.bf16.msra.mxu0 0
  %1683 = vmatprep.subr.bf16.mxu0 0
  %1684 = vmatpush1.bf16.msra.mxu0 0
  %1685 = vmatprep.subr.bf16.mxu0 0
  %1686 = vmatpush1.bf16.msra.mxu0 %v1666
  %1687 = vmatprep.subr.bf16.mxu0 0
  %1688 = vmatpush1.bf16.msra.mxu0 %v1665
  %1689 = vmatprep.subr.bf16.mxu0 0
  %1690 = vmatpush1.bf16.msra.mxu0 %v1664
  %1691 = vmatprep.subr.bf16.mxu0 0
  %1692 = vmatpush1.bf16.msra.mxu0 %v1663
  %1693 = vmatprep.subr.bf16.mxu0 0
  %1694 = vmatpush2.bf16.msra.mxu0 0
  %1695 = vmatprep.subr.bf16.mxu0 0
  %1696 = vmatpush2.bf16.msra.mxu0 0
  %1697 = vmatprep.subr.bf16.mxu0 0
  %1698 = vmatpush2.bf16.msra.mxu0 0
  %1699 = vmatprep.subr.bf16.mxu0 0
  %1700 = vmatpush2.bf16.msra.mxu0 0
  %1701 = vmatprep.subr.bf16.mxu0 0
  %1702 = vmatpush2.bf16.msra.mxu0 0
  %1703 = vmatprep.subr.bf16.mxu0 0
  %1704 = vmatpush2.bf16.msra.mxu0 0
  %1705 = vmatprep.subr.bf16.mxu0 0
  %1706 = vmatpush2.bf16.msra.mxu0 0
  %1707 = vmatprep.subr.bf16.mxu0 0
  %1708 = vmatpush2.bf16.msra.mxu0 0
  %1709 = vmatprep.mubr.bf16.mxu0 0
  %1710 = vmatmul.mubr.bf16.gmra.mxu0 %v1672
  %v1711 = vpop.f32.mrf.mxu0
  %v1712 = vadd.f32 0.0, %v1711
  %v1713 = vpop.f32.mrf.mxu0
  %v1714 = vpop.f32.mrf.mxu0
  %v1715 = vadd.f32 0.0, %v1714
  %v1716 = vpop.f32.mrf.mxu0
  %1717 = vmatprep.mubr.bf16.mxu0 0
  %1718 = vmatmul.mubr.bf16.gmra.mxu0 %v1675
  %v1719 = vpop.f32.mrf.mxu0
  %v1720 = vadd.f32 0.0, %v1719
  %v1721 = vpop.f32.mrf.mxu0
  %v1722 = vpop.f32.mrf.mxu0
  %v1723 = vadd.f32 0.0, %v1722
  %v1724 = vpop.f32.mrf.mxu0
  %1725 = vdwg.mxu0
  %1726 = vmax.xlane.f32.xlu0 %v1712
  %v1727 = vpop.xlane.xlu0 %1726
  %1728 = vmax.xlane.f32.xlu0 %v1715
  %v1729 = vpop.xlane.xlu0 %1728
  %1730 = vmax.xlane.f32.xlu0 %v1720
  %v1731 = vpop.xlane.xlu0 %1730
  %1732 = vmax.xlane.f32.xlu0 %v1723
  %v1733 = vpop.xlane.xlu0 %1732
  %v1734 = vsub.f32 %v1712, %v1727
  %v1735 = vsub.f32 %v1715, %v1729
  %v1736 = vsub.f32 %v1720, %v1731
  %v1737 = vsub.f32 %v1723, %v1733
  %v1738 = vmul.f32 %v1734, 1.442695
  %v1739 = vpow.pop %v1738
  %v1740 = vmul.f32 %v1735, 1.442695
  %v1741 = vpow.pop %v1740
  %v1742 = vmul.f32 %v1736, 1.442695
  %v1743 = vpow.pop %v1742
  %v1744 = vmul.f32 %v1737, 1.442695
  %v1745 = vpow.pop %v1744
  %1746 = vmatprep.subr.mxu0 0.0
  %1747 = vmatpush1.msra.mxu0 %v722
  %1748 = vmatprep.subr.mxu0 0.0
  %1749 = vmatpush1.msra.mxu0 %v721
  %1750 = vmatprep.subr.mxu0 0.0
  %1751 = vmatpush1.msra.mxu0 %v720
  %1752 = vmatprep.subr.mxu0 0.0
  %1753 = vmatpush1.msra.mxu0 %v719
  %1754 = vmatprep.subr.mxu0 0.0
  %1755 = vmatpush1.msra.mxu0 %v718
  %1756 = vmatprep.subr.mxu0 0.0
  %1757 = vmatpush1.msra.mxu0 %v717
  %1758 = vmatprep.subr.mxu0 0.0
  %1759 = vmatpush1.msra.mxu0 %v716
  %1760 = vmatprep.subr.mxu0 0.0
  %1761 = vmatpush1.msra.mxu0 %v715
  %1762 = vmatprep.subr.mxu0 0.0
  %1763 = vmatpush1.msra.mxu0 %v714
  %1764 = vmatprep.subr.mxu0 0.0
  %1765 = vmatpush1.msra.mxu0 %v713
  %1766 = vmatprep.subr.mxu0 0.0
  %1767 = vmatpush1.msra.mxu0 %v712
  %1768 = vmatprep.subr.mxu0 0.0
  %1769 = vmatpush1.msra.mxu0 %v711
  %1770 = vmatprep.subr.mxu0 0.0
  %1771 = vmatpush1.msra.mxu0 %v710
  %1772 = vmatprep.subr.mxu0 0.0
  %1773 = vmatpush1.msra.mxu0 %v709
  %1774 = vmatprep.subr.mxu0 0.0
  %1775 = vmatpush1.msra.mxu0 %v708
  %1776 = vmatprep.subr.mxu0 0.0
  %1777 = vmatpush1.msra.mxu0 %v707
  %1778 = vmatprep.subr.mxu0 0.0
  %1779 = vmatpush2.msra.mxu0 0.0
  %1780 = vmatprep.subr.mxu0 0.0
  %1781 = vmatpush2.msra.mxu0 0.0
  %1782 = vmatprep.subr.mxu0 0.0
  %1783 = vmatpush2.msra.mxu0 0.0
  %1784 = vmatprep.subr.mxu0 0.0
  %1785 = vmatpush2.msra.mxu0 0.0
  %1786 = vmatprep.subr.mxu0 0.0
  %1787 = vmatpush2.msra.mxu0 0.0
  %1788 = vmatprep.subr.mxu0 0.0
  %1789 = vmatpush2.msra.mxu0 0.0
  %1790 = vmatprep.subr.mxu0 0.0
  %1791 = vmatpush2.msra.mxu0 0.0
  %1792 = vmatprep.subr.mxu0 0.0
  %1793 = vmatpush2.msra.mxu0 0.0
  %1794 = vmatprep.subr.mxu0 0.0
  %1795 = vmatpush2.msra.mxu0 0.0
  %1796 = vmatprep.subr.mxu0 0.0
  %1797 = vmatpush2.msra.mxu0 0.0
  %1798 = vmatprep.subr.mxu0 0.0
  %1799 = vmatpush2.msra.mxu0 0.0
  %1800 = vmatprep.subr.mxu0 0.0
  %1801 = vmatpush2.msra.mxu0 0.0
  %1802 = vmatprep.subr.mxu0 0.0
  %1803 = vmatpush2.msra.mxu0 0.0
  %1804 = vmatprep.subr.mxu0 0.0
  %1805 = vmatpush2.msra.mxu0 0.0
  %1806 = vmatprep.subr.mxu0 0.0
  %1807 = vmatpush2.msra.mxu0 0.0
  %1808 = vmatprep.subr.mxu0 0.0
  %1809 = vmatpush2.msra.mxu0 0.0
  %1810 = vmatprep.mubr.f32.mxu0 0.0
  %1811 = vmatmul.mubr.f32.gmra.mxu0 %v1739
  %v1812 = vpop.f32.mrf.mxu0
  %v1813 = vadd.f32 0.0, %v1812
  %v1814 = vpop.f32.mrf.mxu0
  %1815 = vmatprep.mubr.f32.mxu0 0.0
  %1816 = vmatmul.mubr.f32.gmra.mxu0 %v1741
  %v1817 = vpop.f32.mrf.mxu0
  %v1818 = vadd.f32 0.0, %v1817
  %v1819 = vpop.f32.mrf.mxu0
  %1820 = vmatprep.mubr.f32.mxu0 0.0
  %1821 = vmatmul.mubr.f32.gmra.mxu0 %v1743
  %v1822 = vpop.f32.mrf.mxu0
  %v1823 = vadd.f32 0.0, %v1822
  %v1824 = vpop.f32.mrf.mxu0
  %1825 = vmatprep.mubr.f32.mxu0 0.0
  %1826 = vmatmul.mubr.f32.gmra.mxu0 %v1745
  %v1827 = vpop.f32.mrf.mxu0
  %v1828 = vadd.f32 0.0, %v1827
  %v1829 = vpop.f32.mrf.mxu0
  %1830 = vdwg.mxu0
  %v1831 = vmax.f32 %v1813, 1e-30
  %v1832 = vmax.f32 %v1818, 1e-30
  %v1833 = vmax.f32 %v1823, 1e-30
  %v1834 = vmax.f32 %v1828, 1e-30
  %v1835 = vrcp.pop %v1831
  %v1836 = vmul.f32 %v1739, %v1835
  %v1837 = vrcp.pop %v1832
  %v1838 = vmul.f32 %v1741, %v1837
  %v1839 = vrcp.pop %v1833
  %v1840 = vmul.f32 %v1743, %v1839
  %v1841 = vrcp.pop %v1834
  %v1842 = vmul.f32 %v1745, %v1841
  %v1843 = vpack.c.bf16 %v1838, %v1836
  %v1844 = vpack.c.bf16 %v1842, %v1840
  %s1845 = scalar_lea.vmem %s2, 64
  %v1846 = vld [vmem:[%s1845] sm:$0xf]
  %v1847 = vld [vmem:[%s1845 + $0x4] sm:$0xf]
  %v1848 = vld [vmem:[%s1845 + $0x8] sm:$0xf]
  %v1849 = vld [vmem:[%s1845 + $0xc] sm:$0xf]
  %v1850 = vld [vmem:[%s1845 + $0x10] sm:$0xf]
  %v1851 = vld [vmem:[%s1845 + $0x14] sm:$0xf]
  %v1852 = vld [vmem:[%s1845 + $0x18] sm:$0xf]
  %v1853 = vld [vmem:[%s1845 + $0x1c] sm:$0xf]
  %v1854 = vld [vmem:[%s1845 + $0x20] sm:$0xf]
  %v1855 = vld [vmem:[%s1845 + $0x24] sm:$0xf]
  %v1856 = vld [vmem:[%s1845 + $0x28] sm:$0xf]
  %v1857 = vld [vmem:[%s1845 + $0x2c] sm:$0xf]
  %v1858 = vld [vmem:[%s1845 + $0x30] sm:$0xf]
  %v1859 = vld [vmem:[%s1845 + $0x34] sm:$0xf]
  %v1860 = vld [vmem:[%s1845 + $0x38] sm:$0xf]
  %v1861 = vld [vmem:[%s1845 + $0x3c] sm:$0xf]
  %v1878 = vunpack.c.l.b16 %v1846
  %v1879 = vunpack.c.l.b16 %v1847
  %v1880 = vunpack.c.l.b16 %v1848
  %v1881 = vunpack.c.l.b16 %v1849
  %v1882 = vunpack.c.l.b16 %v1850
  %v1883 = vunpack.c.l.b16 %v1851
  %v1884 = vunpack.c.l.b16 %v1852
  %v1885 = vunpack.c.l.b16 %v1853
  %v1886 = vunpack.c.l.b16 %v1854
  %v1887 = vunpack.c.l.b16 %v1855
  %v1888 = vunpack.c.l.b16 %v1856
  %v1889 = vunpack.c.l.b16 %v1857
  %v1890 = vunpack.c.l.b16 %v1858
  %v1891 = vunpack.c.l.b16 %v1859
  %v1892 = vunpack.c.l.b16 %v1860
  %v1893 = vunpack.c.l.b16 %v1861
  %v1894 = vpack.c.b16 %v1879, %v1878
  %v1895 = vpack.c.b16 %v1881, %v1880
  %v1896 = vpack.c.b16 %v1883, %v1882
  %v1897 = vpack.c.b16 %v1885, %v1884
  %v1898 = vpack.c.b16 %v1887, %v1886
  %v1899 = vpack.c.b16 %v1889, %v1888
  %v1900 = vpack.c.b16 %v1891, %v1890
  %v1901 = vpack.c.b16 %v1893, %v1892
  %1910 = vmatprep.subr.bf16.mxu0 0
  %1911 = vmatpush1.bf16.msra.mxu0 %v1901
  %1912 = vmatprep.subr.bf16.mxu0 0
  %1913 = vmatpush1.bf16.msra.mxu0 %v1900
  %1914 = vmatprep.subr.bf16.mxu0 0
  %1915 = vmatpush1.bf16.msra.mxu0 %v1899
  %1916 = vmatprep.subr.bf16.mxu0 0
  %1917 = vmatpush1.bf16.msra.mxu0 %v1898
  %1918 = vmatprep.subr.bf16.mxu0 0
  %1919 = vmatpush1.bf16.msra.mxu0 %v1897
  %1920 = vmatprep.subr.bf16.mxu0 0
  %1921 = vmatpush1.bf16.msra.mxu0 %v1896
  %1922 = vmatprep.subr.bf16.mxu0 0
  %1923 = vmatpush1.bf16.msra.mxu0 %v1895
  %1924 = vmatprep.subr.bf16.mxu0 0
  %1925 = vmatpush1.bf16.msra.mxu0 %v1894
  %1926 = vmatprep.subr.bf16.mxu0 0
  %1927 = vmatpush2.bf16.msra.mxu0 0
  %1928 = vmatprep.subr.bf16.mxu0 0
  %1929 = vmatpush2.bf16.msra.mxu0 0
  %1930 = vmatprep.subr.bf16.mxu0 0
  %1931 = vmatpush2.bf16.msra.mxu0 0
  %1932 = vmatprep.subr.bf16.mxu0 0
  %1933 = vmatpush2.bf16.msra.mxu0 0
  %1934 = vmatprep.subr.bf16.mxu0 0
  %1935 = vmatpush2.bf16.msra.mxu0 0
  %1936 = vmatprep.subr.bf16.mxu0 0
  %1937 = vmatpush2.bf16.msra.mxu0 0
  %1938 = vmatprep.subr.bf16.mxu0 0
  %1939 = vmatpush2.bf16.msra.mxu0 0
  %1940 = vmatprep.subr.bf16.mxu0 0
  %1941 = vmatpush2.bf16.msra.mxu0 0
  %1942 = vmatprep.mubr.bf16.mxu0 0
  %1943 = vmatmul.mubr.bf16.gmra.mxu0 %v1843
  %v1944 = vpop.f32.mrf.mxu0
  %v1945 = vadd.f32 0.0, %v1944
  %v1946 = vpop.f32.mrf.mxu0
  %v1947 = vpop.f32.mrf.mxu0
  %v1948 = vadd.f32 0.0, %v1947
  %v1949 = vpop.f32.mrf.mxu0
  %1950 = vmatprep.mubr.bf16.mxu0 0
  %1951 = vmatmul.mubr.bf16.gmra.mxu0 %v1844
  %v1952 = vpop.f32.mrf.mxu0
  %v1953 = vadd.f32 0.0, %v1952
  %v1954 = vpop.f32.mrf.mxu0
  %v1955 = vpop.f32.mrf.mxu0
  %v1956 = vadd.f32 0.0, %v1955
  %v1957 = vpop.f32.mrf.mxu0
  %1958 = vdwg.mxu0
  %s1959 = scalar_lea.vmem %s14, 32
  %v1960 = vld [vmem:[%s1959] sm:$0xf]
  %v1961 = vld [vmem:[%s1959 + $0x4] sm:$0xf]
  %v1962 = vld [vmem:[%s1959 + $0x8] sm:$0xf]
  %v1963 = vld [vmem:[%s1959 + $0xc] sm:$0xf]
  %v1964 = vld [vmem:[%s1959 + $0x10] sm:$0xf]
  %v1965 = vld [vmem:[%s1959 + $0x14] sm:$0xf]
  %v1966 = vld [vmem:[%s1959 + $0x18] sm:$0xf]
  %v1967 = vld [vmem:[%s1959 + $0x1c] sm:$0xf]
  %s1968 = scalar_lea.vmem %s15, 1
  %v1969 = vld [vmem:[%s1968] sm:$0x1]
  %v1970 = vpack.c.bf16 %v1948, %v1945
  %v1971 = vpack.c.bf16 %v1956, %v1953
  %v1973 = vlaneseq
  %v1974 = vshrl.u32 %v1973, 7
  %v1975 = vsub.s32 0, %v1974
  %v1976 = vrot.slane %v1969, %v1975
  %v1986 = vunpack.c.l.b16 %v1960
  %v1987 = vunpack.c.l.b16 %v1961
  %v1988 = vunpack.c.l.b16 %v1962
  %v1989 = vunpack.c.l.b16 %v1963
  %v1990 = vunpack.c.l.b16 %v1964
  %v1991 = vunpack.c.l.b16 %v1965
  %v1992 = vunpack.c.l.b16 %v1966
  %v1993 = vunpack.c.l.b16 %v1967
  %v1994 = vpack.c.b16 %v1987, %v1986
  %v1995 = vpack.c.b16 %v1989, %v1988
  %v1996 = vpack.c.b16 %v1991, %v1990
  %v1997 = vpack.c.b16 %v1993, %v1992
  %v2003 = vsel %vm253, %v1970, 0
  %v2006 = vsel %vm253, %v1971, 0
  %2008 = vmatprep.subr.bf16.mxu0 0
  %2009 = vmatpush1.bf16.msra.mxu0 0
  %2010 = vmatprep.subr.bf16.mxu0 0
  %2011 = vmatpush1.bf16.msra.mxu0 0
  %2012 = vmatprep.subr.bf16.mxu0 0
  %2013 = vmatpush1.bf16.msra.mxu0 0
  %2014 = vmatprep.subr.bf16.mxu0 0
  %2015 = vmatpush1.bf16.msra.mxu0 0
  %2016 = vmatprep.subr.bf16.mxu0 0
  %2017 = vmatpush1.bf16.msra.mxu0 %v1997
  %2018 = vmatprep.subr.bf16.mxu0 0
  %2019 = vmatpush1.bf16.msra.mxu0 %v1996
  %2020 = vmatprep.subr.bf16.mxu0 0
  %2021 = vmatpush1.bf16.msra.mxu0 %v1995
  %2022 = vmatprep.subr.bf16.mxu0 0
  %2023 = vmatpush1.bf16.msra.mxu0 %v1994
  %2024 = vmatprep.subr.bf16.mxu0 0
  %2025 = vmatpush2.bf16.msra.mxu0 0
  %2026 = vmatprep.subr.bf16.mxu0 0
  %2027 = vmatpush2.bf16.msra.mxu0 0
  %2028 = vmatprep.subr.bf16.mxu0 0
  %2029 = vmatpush2.bf16.msra.mxu0 0
  %2030 = vmatprep.subr.bf16.mxu0 0
  %2031 = vmatpush2.bf16.msra.mxu0 0
  %2032 = vmatprep.subr.bf16.mxu0 0
  %2033 = vmatpush2.bf16.msra.mxu0 0
  %2034 = vmatprep.subr.bf16.mxu0 0
  %2035 = vmatpush2.bf16.msra.mxu0 0
  %2036 = vmatprep.subr.bf16.mxu0 0
  %2037 = vmatpush2.bf16.msra.mxu0 0
  %2038 = vmatprep.subr.bf16.mxu0 0
  %2039 = vmatpush2.bf16.msra.mxu0 0
  %2040 = vmatprep.mubr.bf16.mxu0 0
  %2041 = vmatmul.mubr.bf16.gmra.mxu0 %v2003
  %v2042 = vpop.f32.mrf.mxu0
  %v2043 = vadd.f32 %v1976, %v2042
  %v2044 = vpop.f32.mrf.mxu0
  %v2045 = vpop.f32.mrf.mxu0
  %v2046 = vadd.f32 %v1976, %v2045
  %v2047 = vpop.f32.mrf.mxu0
  %2048 = vmatprep.mubr.bf16.mxu0 0
  %2049 = vmatmul.mubr.bf16.gmra.mxu0 %v2006
  %v2050 = vpop.f32.mrf.mxu0
  %v2051 = vadd.f32 %v1976, %v2050
  %v2052 = vpop.f32.mrf.mxu0
  %v2053 = vpop.f32.mrf.mxu0
  %v2054 = vadd.f32 %v1976, %v2053
  %v2055 = vpop.f32.mrf.mxu0
  %2056 = vdwg.mxu0
  %v2057 = vadd.f32 %v1458, %v2043
  %v2058 = vadd.f32 %v1459, %v2046
  %v2059 = vadd.f32 %v1460, %v2051
  %v2060 = vadd.f32 %v1461, %v2054
  %s2061 = scalar_lea.vmem %s10, 1
  %v2062 = vld [vmem:[%s2061] sm:$0x1]
  %s2063 = scalar_lea.vmem %s11, 1
  %v2064 = vld [vmem:[%s2063] sm:$0x1]
  %v2065 = vsel %vm253, %v2057, 0.0
  %2066 = vadd.xlane.f32.xlu0 %v2065
  %v2067 = vpop.xlane.xlu0 %2066
  %v2068 = vsel %vm253, %v2058, 0.0
  %2069 = vadd.xlane.f32.xlu0 %v2068
  %v2070 = vpop.xlane.xlu0 %2069
  %v2071 = vsel %vm253, %v2059, 0.0
  %2072 = vadd.xlane.f32.xlu0 %v2071
  %v2073 = vpop.xlane.xlu0 %2072
  %v2074 = vsel %vm253, %v2060, 0.0
  %2075 = vadd.xlane.f32.xlu0 %v2074
  %v2076 = vpop.xlane.xlu0 %2075
  %v2077 = vmul.f32 %v2067, %v441
  %v2078 = vmul.f32 %v2070, %v441
  %v2079 = vmul.f32 %v2073, %v441
  %v2080 = vmul.f32 %v2076, %v441
  %v2081 = vsub.f32 %v2057, %v2077
  %v2082 = vsub.f32 %v2058, %v2078
  %v2083 = vsub.f32 %v2059, %v2079
  %v2084 = vsub.f32 %v2060, %v2080
  %v2085 = vmul.f32 %v2081, %v2081
  %v2086 = vmul.f32 %v2082, %v2082
  %v2087 = vmul.f32 %v2083, %v2083
  %v2088 = vmul.f32 %v2084, %v2084
  %v2089 = vsel %vm253, %v2085, 0.0
  %2090 = vadd.xlane.f32.xlu0 %v2089
  %v2091 = vpop.xlane.xlu0 %2090
  %v2092 = vsel %vm253, %v2086, 0.0
  %2093 = vadd.xlane.f32.xlu0 %v2092
  %v2094 = vpop.xlane.xlu0 %2093
  %v2095 = vsel %vm253, %v2087, 0.0
  %2096 = vadd.xlane.f32.xlu0 %v2095
  %v2097 = vpop.xlane.xlu0 %2096
  %v2098 = vsel %vm253, %v2088, 0.0
  %2099 = vadd.xlane.f32.xlu0 %v2098
  %v2100 = vpop.xlane.xlu0 %2099
  %v2101 = vmul.f32 %v2091, %v441
  %v2102 = vmul.f32 %v2094, %v441
  %v2103 = vmul.f32 %v2097, %v441
  %v2104 = vmul.f32 %v2100, %v441
  %v2105 = vadd.f32 %v2101, 1e-05
  %v2106 = vadd.f32 %v2102, 1e-05
  %v2107 = vadd.f32 %v2103, 1e-05
  %v2108 = vadd.f32 %v2104, 1e-05
  %v2109 = vrsqrt.pop %v2105
  %v2110 = vrsqrt.pop %v2106
  %v2111 = vrsqrt.pop %v2107
  %v2112 = vrsqrt.pop %v2108
  %v2113 = vmul.f32 %v2081, %v2109
  %v2114 = vmul.f32 %v2082, %v2110
  %v2115 = vmul.f32 %v2083, %v2111
  %v2116 = vmul.f32 %v2084, %v2112
  %v2118 = vlaneseq
  %v2119 = vshrl.u32 %v2118, 7
  %v2120 = vsub.s32 0, %v2119
  %v2121 = vrot.slane %v2062, %v2120
  %v2123 = vmul.f32 %v2113, %v2121
  %v2124 = vmul.f32 %v2114, %v2121
  %v2125 = vmul.f32 %v2115, %v2121
  %v2126 = vmul.f32 %v2116, %v2121
  %v2128 = vlaneseq
  %v2129 = vshrl.u32 %v2128, 7
  %v2130 = vsub.s32 0, %v2129
  %v2131 = vrot.slane %v2064, %v2130
  %v2133 = vadd.f32 %v2123, %v2131
  %v2134 = vadd.f32 %v2124, %v2131
  %v2135 = vadd.f32 %v2125, %v2131
  %v2136 = vadd.f32 %v2126, %v2131
  %s2137 = scalar_lea.vmem %s16, 64
  %v2138 = vld [vmem:[%s2137] sm:$0xff]
  %v2139 = vld [vmem:[%s2137 + $0x8] sm:$0xff]
  %v2140 = vld [vmem:[%s2137 + $0x10] sm:$0xff]
  %v2141 = vld [vmem:[%s2137 + $0x18] sm:$0xff]
  %v2142 = vld [vmem:[%s2137 + $0x20] sm:$0xff]
  %v2143 = vld [vmem:[%s2137 + $0x28] sm:$0xff]
  %v2144 = vld [vmem:[%s2137 + $0x30] sm:$0xff]
  %v2145 = vld [vmem:[%s2137 + $0x38] sm:$0xff]
  %s2146 = scalar_lea.vmem %s17, 2
  %v2147 = vld [vmem:[%s2146] sm:$0x3]
  %v2148 = vpack.c.bf16 %v2134, %v2133
  %v2149 = vpack.c.bf16 %v2136, %v2135
  %v2151 = vlaneseq
  %v2152 = vshrl.u32 %v2151, 7
  %v2153 = vsub.s32 0, %v2152
  %v2154 = vrot.slane %v2147, %v2153
  %v2155 = vlaneseq
  %v2156 = vshrl.u32 %v2155, 7
  %v2157 = vsub.s32 1, %v2156
  %v2158 = vrot.slane %v2147, %v2157
  %v2169 = vunpack.c.l.b16 %v2138
  %v2170 = vunpack.c.h.b16 %v2138
  %v2171 = vunpack.c.l.b16 %v2139
  %v2172 = vunpack.c.h.b16 %v2139
  %v2173 = vunpack.c.l.b16 %v2140
  %v2174 = vunpack.c.h.b16 %v2140
  %v2175 = vunpack.c.l.b16 %v2141
  %v2176 = vunpack.c.h.b16 %v2141
  %v2177 = vunpack.c.l.b16 %v2142
  %v2178 = vunpack.c.h.b16 %v2142
  %v2179 = vunpack.c.l.b16 %v2143
  %v2180 = vunpack.c.h.b16 %v2143
  %v2181 = vunpack.c.l.b16 %v2144
  %v2182 = vunpack.c.h.b16 %v2144
  %v2183 = vunpack.c.l.b16 %v2145
  %v2184 = vunpack.c.h.b16 %v2145
  %v2185 = vpack.c.b16 %v2171, %v2169
  %v2186 = vpack.c.b16 %v2172, %v2170
  %v2187 = vpack.c.b16 %v2175, %v2173
  %v2188 = vpack.c.b16 %v2176, %v2174
  %v2189 = vpack.c.b16 %v2179, %v2177
  %v2190 = vpack.c.b16 %v2180, %v2178
  %v2191 = vpack.c.b16 %v2183, %v2181
  %v2192 = vpack.c.b16 %v2184, %v2182
  %v2202 = vsel %vm253, %v2148, 0
  %v2205 = vsel %vm253, %v2149, 0
  %2207 = vmatprep.subr.bf16.mxu0 0
  %2208 = vmatpush1.bf16.msra.mxu0 0
  %2209 = vmatprep.subr.bf16.mxu0 0
  %2210 = vmatpush1.bf16.msra.mxu0 0
  %2211 = vmatprep.subr.bf16.mxu0 0
  %2212 = vmatpush1.bf16.msra.mxu0 0
  %2213 = vmatprep.subr.bf16.mxu0 0
  %2214 = vmatpush1.bf16.msra.mxu0 0
  %2215 = vmatprep.subr.bf16.mxu0 %v2192
  %2216 = vmatpush1.bf16.msra.mxu0 %v2191
  %2217 = vmatprep.subr.bf16.mxu0 %v2190
  %2218 = vmatpush1.bf16.msra.mxu0 %v2189
  %2219 = vmatprep.subr.bf16.mxu0 %v2188
  %2220 = vmatpush1.bf16.msra.mxu0 %v2187
  %2221 = vmatprep.subr.bf16.mxu0 %v2186
  %2222 = vmatpush1.bf16.msra.mxu0 %v2185
  %2223 = vmatprep.subr.bf16.mxu0 0
  %2224 = vmatpush2.bf16.msra.mxu0 0
  %2225 = vmatprep.subr.bf16.mxu0 0
  %2226 = vmatpush2.bf16.msra.mxu0 0
  %2227 = vmatprep.subr.bf16.mxu0 0
  %2228 = vmatpush2.bf16.msra.mxu0 0
  %2229 = vmatprep.subr.bf16.mxu0 0
  %2230 = vmatpush2.bf16.msra.mxu0 0
  %2231 = vmatprep.subr.bf16.mxu0 0
  %2232 = vmatpush2.bf16.msra.mxu0 0
  %2233 = vmatprep.subr.bf16.mxu0 0
  %2234 = vmatpush2.bf16.msra.mxu0 0
  %2235 = vmatprep.subr.bf16.mxu0 0
  %2236 = vmatpush2.bf16.msra.mxu0 0
  %2237 = vmatprep.subr.bf16.mxu0 0
  %2238 = vmatpush2.bf16.msra.mxu0 0
  %2239 = vmatprep.mubr.bf16.mxu0 0
  %2240 = vmatmul.mubr.bf16.gmra.mxu0 %v2202
  %v2241 = vpop.f32.mrf.mxu0
  %v2242 = vadd.f32 %v2154, %v2241
  %v2243 = vpop.f32.mrf.mxu0
  %v2244 = vadd.f32 %v2158, %v2243
  %v2245 = vpop.f32.mrf.mxu0
  %v2246 = vadd.f32 %v2154, %v2245
  %v2247 = vpop.f32.mrf.mxu0
  %v2248 = vadd.f32 %v2158, %v2247
  %2249 = vmatprep.mubr.bf16.mxu0 0
  %2250 = vmatmul.mubr.bf16.gmra.mxu0 %v2205
  %v2251 = vpop.f32.mrf.mxu0
  %v2252 = vadd.f32 %v2154, %v2251
  %v2253 = vpop.f32.mrf.mxu0
  %v2254 = vadd.f32 %v2158, %v2253
  %v2255 = vpop.f32.mrf.mxu0
  %v2256 = vadd.f32 %v2154, %v2255
  %v2257 = vpop.f32.mrf.mxu0
  %v2258 = vadd.f32 %v2158, %v2257
  %2259 = vdwg.mxu0
  %v2260 = vmul.f32 %v2242, 0.5
  %v2261 = vmul.f32 %v2244, 0.5
  %v2262 = vmul.f32 %v2246, 0.5
  %v2263 = vmul.f32 %v2248, 0.5
  %v2264 = vmul.f32 %v2252, 0.5
  %v2265 = vmul.f32 %v2254, 0.5
  %v2266 = vmul.f32 %v2256, 0.5
  %v2267 = vmul.f32 %v2258, 0.5
  %v2268 = vmul.f32 %v2242, 0.70710677
  %v2269 = vmul.f32 %v2244, 0.70710677
  %v2270 = vmul.f32 %v2246, 0.70710677
  %v2271 = vmul.f32 %v2248, 0.70710677
  %v2272 = vmul.f32 %v2252, 0.70710677
  %v2273 = vmul.f32 %v2254, 0.70710677
  %v2274 = vmul.f32 %v2256, 0.70710677
  %v2275 = vmul.f32 %v2258, 0.70710677
  %v2276 = verf.f32.pop %v2268
  %v2277 = verf.f32.pop %v2269
  %v2278 = verf.f32.pop %v2270
  %v2279 = verf.f32.pop %v2271
  %v2280 = verf.f32.pop %v2272
  %v2281 = verf.f32.pop %v2273
  %v2282 = verf.f32.pop %v2274
  %v2283 = verf.f32.pop %v2275
  %v2284 = vadd.f32 %v2276, 1.0
  %v2285 = vadd.f32 %v2277, 1.0
  %v2286 = vadd.f32 %v2278, 1.0
  %v2287 = vadd.f32 %v2279, 1.0
  %v2288 = vadd.f32 %v2280, 1.0
  %v2289 = vadd.f32 %v2281, 1.0
  %v2290 = vadd.f32 %v2282, 1.0
  %v2291 = vadd.f32 %v2283, 1.0
  %v2292 = vmul.f32 %v2260, %v2284
  %v2293 = vmul.f32 %v2261, %v2285
  %v2294 = vmul.f32 %v2262, %v2286
  %v2295 = vmul.f32 %v2263, %v2287
  %v2296 = vmul.f32 %v2264, %v2288
  %v2297 = vmul.f32 %v2265, %v2289
  %v2298 = vmul.f32 %v2266, %v2290
  %v2299 = vmul.f32 %v2267, %v2291
  %s2300 = scalar_lea.vmem %s18, 128
  %v2301 = vld [vmem:[%s2300] sm:$0xf]
  %v2302 = vld [vmem:[%s2300 + $0x4] sm:$0xf]
  %v2303 = vld [vmem:[%s2300 + $0x8] sm:$0xf]
  %v2304 = vld [vmem:[%s2300 + $0xc] sm:$0xf]
  %v2305 = vld [vmem:[%s2300 + $0x10] sm:$0xf]
  %v2306 = vld [vmem:[%s2300 + $0x14] sm:$0xf]
  %v2307 = vld [vmem:[%s2300 + $0x18] sm:$0xf]
  %v2308 = vld [vmem:[%s2300 + $0x1c] sm:$0xf]
  %v2309 = vld [vmem:[%s2300 + $0x20] sm:$0xf]
  %v2310 = vld [vmem:[%s2300 + $0x24] sm:$0xf]
  %v2311 = vld [vmem:[%s2300 + $0x28] sm:$0xf]
  %v2312 = vld [vmem:[%s2300 + $0x2c] sm:$0xf]
  %v2313 = vld [vmem:[%s2300 + $0x30] sm:$0xf]
  %v2314 = vld [vmem:[%s2300 + $0x34] sm:$0xf]
  %v2315 = vld [vmem:[%s2300 + $0x38] sm:$0xf]
  %v2316 = vld [vmem:[%s2300 + $0x3c] sm:$0xf]
  %v2317 = vld [vmem:[%s2300 + $0x40] sm:$0xf]
  %v2318 = vld [vmem:[%s2300 + $0x44] sm:$0xf]
  %v2319 = vld [vmem:[%s2300 + $0x48] sm:$0xf]
  %v2320 = vld [vmem:[%s2300 + $0x4c] sm:$0xf]
  %v2321 = vld [vmem:[%s2300 + $0x50] sm:$0xf]
  %v2322 = vld [vmem:[%s2300 + $0x54] sm:$0xf]
  %v2323 = vld [vmem:[%s2300 + $0x58] sm:$0xf]
  %v2324 = vld [vmem:[%s2300 + $0x5c] sm:$0xf]
  %v2325 = vld [vmem:[%s2300 + $0x60] sm:$0xf]
  %v2326 = vld [vmem:[%s2300 + $0x64] sm:$0xf]
  %v2327 = vld [vmem:[%s2300 + $0x68] sm:$0xf]
  %v2328 = vld [vmem:[%s2300 + $0x6c] sm:$0xf]
  %v2329 = vld [vmem:[%s2300 + $0x70] sm:$0xf]
  %v2330 = vld [vmem:[%s2300 + $0x74] sm:$0xf]
  %v2331 = vld [vmem:[%s2300 + $0x78] sm:$0xf]
  %v2332 = vld [vmem:[%s2300 + $0x7c] sm:$0xf]
  %s2333 = scalar_lea.vmem %s19, 1
  %v2334 = vld [vmem:[%s2333] sm:$0x1]
  %v2335 = vpack.c.bf16 %v2294, %v2292
  %v2336 = vpack.c.bf16 %v2295, %v2293
  %v2337 = vpack.c.bf16 %v2298, %v2296
  %v2338 = vpack.c.bf16 %v2299, %v2297
  %v2340 = vlaneseq
  %v2341 = vshrl.u32 %v2340, 7
  %v2342 = vsub.s32 0, %v2341
  %v2343 = vrot.slane %v2334, %v2342
  %v2377 = vunpack.c.l.b16 %v2301
  %v2378 = vunpack.c.l.b16 %v2302
  %v2379 = vunpack.c.l.b16 %v2303
  %v2380 = vunpack.c.l.b16 %v2304
  %v2381 = vunpack.c.l.b16 %v2305
  %v2382 = vunpack.c.l.b16 %v2306
  %v2383 = vunpack.c.l.b16 %v2307
  %v2384 = vunpack.c.l.b16 %v2308
  %v2385 = vunpack.c.l.b16 %v2309
  %v2386 = vunpack.c.l.b16 %v2310
  %v2387 = vunpack.c.l.b16 %v2311
  %v2388 = vunpack.c.l.b16 %v2312
  %v2389 = vunpack.c.l.b16 %v2313
  %v2390 = vunpack.c.l.b16 %v2314
  %v2391 = vunpack.c.l.b16 %v2315
  %v2392 = vunpack.c.l.b16 %v2316
  %v2393 = vunpack.c.l.b16 %v2317
  %v2394 = vunpack.c.l.b16 %v2318
  %v2395 = vunpack.c.l.b16 %v2319
  %v2396 = vunpack.c.l.b16 %v2320
  %v2397 = vunpack.c.l.b16 %v2321
  %v2398 = vunpack.c.l.b16 %v2322
  %v2399 = vunpack.c.l.b16 %v2323
  %v2400 = vunpack.c.l.b16 %v2324
  %v2401 = vunpack.c.l.b16 %v2325
  %v2402 = vunpack.c.l.b16 %v2326
  %v2403 = vunpack.c.l.b16 %v2327
  %v2404 = vunpack.c.l.b16 %v2328
  %v2405 = vunpack.c.l.b16 %v2329
  %v2406 = vunpack.c.l.b16 %v2330
  %v2407 = vunpack.c.l.b16 %v2331
  %v2408 = vunpack.c.l.b16 %v2332
  %v2409 = vpack.c.b16 %v2378, %v2377
  %v2410 = vpack.c.b16 %v2380, %v2379
  %v2411 = vpack.c.b16 %v2382, %v2381
  %v2412 = vpack.c.b16 %v2384, %v2383
  %v2413 = vpack.c.b16 %v2386, %v2385
  %v2414 = vpack.c.b16 %v2388, %v2387
  %v2415 = vpack.c.b16 %v2390, %v2389
  %v2416 = vpack.c.b16 %v2392, %v2391
  %v2417 = vpack.c.b16 %v2394, %v2393
  %v2418 = vpack.c.b16 %v2396, %v2395
  %v2419 = vpack.c.b16 %v2398, %v2397
  %v2420 = vpack.c.b16 %v2400, %v2399
  %v2421 = vpack.c.b16 %v2402, %v2401
  %v2422 = vpack.c.b16 %v2404, %v2403
  %v2423 = vpack.c.b16 %v2406, %v2405
  %v2424 = vpack.c.b16 %v2408, %v2407
  %2441 = vmatprep.subr.bf16.mxu0 0
  %2442 = vmatpush1.bf16.msra.mxu0 %v2416
  %2443 = vmatprep.subr.bf16.mxu0 0
  %2444 = vmatpush1.bf16.msra.mxu0 %v2415
  %2445 = vmatprep.subr.bf16.mxu0 0
  %2446 = vmatpush1.bf16.msra.mxu0 %v2414
  %2447 = vmatprep.subr.bf16.mxu0 0
  %2448 = vmatpush1.bf16.msra.mxu0 %v2413
  %2449 = vmatprep.subr.bf16.mxu0 0
  %2450 = vmatpush1.bf16.msra.mxu0 %v2412
  %2451 = vmatprep.subr.bf16.mxu0 0
  %2452 = vmatpush1.bf16.msra.mxu0 %v2411
  %2453 = vmatprep.subr.bf16.mxu0 0
  %2454 = vmatpush1.bf16.msra.mxu0 %v2410
  %2455 = vmatprep.subr.bf16.mxu0 0
  %2456 = vmatpush1.bf16.msra.mxu0 %v2409
  %2457 = vmatprep.subr.bf16.mxu0 0
  %2458 = vmatpush2.bf16.msra.mxu0 %v2424
  %2459 = vmatprep.subr.bf16.mxu0 0
  %2460 = vmatpush2.bf16.msra.mxu0 %v2423
  %2461 = vmatprep.subr.bf16.mxu0 0
  %2462 = vmatpush2.bf16.msra.mxu0 %v2422
  %2463 = vmatprep.subr.bf16.mxu0 0
  %2464 = vmatpush2.bf16.msra.mxu0 %v2421
  %2465 = vmatprep.subr.bf16.mxu0 0
  %2466 = vmatpush2.bf16.msra.mxu0 %v2420
  %2467 = vmatprep.subr.bf16.mxu0 0
  %2468 = vmatpush2.bf16.msra.mxu0 %v2419
  %2469 = vmatprep.subr.bf16.mxu0 0
  %2470 = vmatpush2.bf16.msra.mxu0 %v2418
  %2471 = vmatprep.subr.bf16.mxu0 0
  %2472 = vmatpush2.bf16.msra.mxu0 %v2417
  %2473 = vmatprep.mubr.bf16.mxu0 %v2336
  %2474 = vmatmul.mubr.bf16.gmra.mxu0 %v2335
  %v2475 = vpop.f32.mrf.mxu0
  %v2476 = vadd.f32 %v2343, %v2475
  %v2477 = vpop.f32.mrf.mxu0
  %v2478 = vpop.f32.mrf.mxu0
  %v2479 = vadd.f32 %v2343, %v2478
  %v2480 = vpop.f32.mrf.mxu0
  %2481 = vmatprep.mubr.bf16.mxu0 %v2338
  %2482 = vmatmul.mubr.bf16.gmra.mxu0 %v2337
  %v2483 = vpop.f32.mrf.mxu0
  %v2484 = vadd.f32 %v2343, %v2483
  %v2485 = vpop.f32.mrf.mxu0
  %v2486 = vpop.f32.mrf.mxu0
  %v2487 = vadd.f32 %v2343, %v2486
  %v2488 = vpop.f32.mrf.mxu0
  %2489 = vdwg.mxu0
  %v2490 = vadd.f32 %v2057, %v2476
  %v2491 = vadd.f32 %v2058, %v2479
  %v2492 = vadd.f32 %v2059, %v2484
  %v2493 = vadd.f32 %v2060, %v2487
  %s2494 = scalar_lea.vmem %s8, 2
  %v2495 = vld [vmem:[%s2494] sm:$0x1]
  %s2496 = scalar_lea.vmem %s9, 2
  %v2497 = vld [vmem:[%s2496] sm:$0x1]
  %v2498 = vsel %vm253, %v2490, 0.0
  %2499 = vadd.xlane.f32.xlu0 %v2498
  %v2500 = vpop.xlane.xlu0 %2499
  %v2501 = vsel %vm253, %v2491, 0.0
  %2502 = vadd.xlane.f32.xlu0 %v2501
  %v2503 = vpop.xlane.xlu0 %2502
  %v2504 = vsel %vm253, %v2492, 0.0
  %2505 = vadd.xlane.f32.xlu0 %v2504
  %v2506 = vpop.xlane.xlu0 %2505
  %v2507 = vsel %vm253, %v2493, 0.0
  %2508 = vadd.xlane.f32.xlu0 %v2507
  %v2509 = vpop.xlane.xlu0 %2508
  %v2510 = vmul.f32 %v2500, %v441
  %v2511 = vmul.f32 %v2503, %v441
  %v2512 = vmul.f32 %v2506, %v441
  %v2513 = vmul.f32 %v2509, %v441
  %v2514 = vsub.f32 %v2490, %v2510
  %v2515 = vsub.f32 %v2491, %v2511
  %v2516 = vsub.f32 %v2492, %v2512
  %v2517 = vsub.f32 %v2493, %v2513
  %v2518 = vmul.f32 %v2514, %v2514
  %v2519 = vmul.f32 %v2515, %v2515
  %v2520 = vmul.f32 %v2516, %v2516
  %v2521 = vmul.f32 %v2517, %v2517
  %v2522 = vsel %vm253, %v2518, 0.0
  %2523 = vadd.xlane.f32.xlu0 %v2522
  %v2524 = vpop.xlane.xlu0 %2523
  %v2525 = vsel %vm253, %v2519, 0.0
  %2526 = vadd.xlane.f32.xlu0 %v2525
  %v2527 = vpop.xlane.xlu0 %2526
  %v2528 = vsel %vm253, %v2520, 0.0
  %2529 = vadd.xlane.f32.xlu0 %v2528
  %v2530 = vpop.xlane.xlu0 %2529
  %v2531 = vsel %vm253, %v2521, 0.0
  %2532 = vadd.xlane.f32.xlu0 %v2531
  %v2533 = vpop.xlane.xlu0 %2532
  %v2534 = vmul.f32 %v2524, %v441
  %v2535 = vmul.f32 %v2527, %v441
  %v2536 = vmul.f32 %v2530, %v441
  %v2537 = vmul.f32 %v2533, %v441
  %v2538 = vadd.f32 %v2534, 1e-05
  %v2539 = vadd.f32 %v2535, 1e-05
  %v2540 = vadd.f32 %v2536, 1e-05
  %v2541 = vadd.f32 %v2537, 1e-05
  %v2542 = vrsqrt.pop %v2538
  %v2543 = vrsqrt.pop %v2539
  %v2544 = vrsqrt.pop %v2540
  %v2545 = vrsqrt.pop %v2541
  %v2546 = vmul.f32 %v2514, %v2542
  %v2547 = vmul.f32 %v2515, %v2543
  %v2548 = vmul.f32 %v2516, %v2544
  %v2549 = vmul.f32 %v2517, %v2545
  %v2551 = vlaneseq
  %v2552 = vshrl.u32 %v2551, 7
  %v2553 = vsub.s32 0, %v2552
  %v2554 = vrot.slane %v2495, %v2553
  %v2556 = vmul.f32 %v2546, %v2554
  %v2557 = vmul.f32 %v2547, %v2554
  %v2558 = vmul.f32 %v2548, %v2554
  %v2559 = vmul.f32 %v2549, %v2554
  %v2561 = vlaneseq
  %v2562 = vshrl.u32 %v2561, 7
  %v2563 = vsub.s32 0, %v2562
  %v2564 = vrot.slane %v2497, %v2563
  %v2566 = vadd.f32 %v2556, %v2564
  %v2567 = vadd.f32 %v2557, %v2564
  %v2568 = vadd.f32 %v2558, %v2564
  %v2569 = vadd.f32 %v2559, %v2564
  %s2570 = scalar_lea.vmem %s12, 64
  %v2571 = vld [vmem:[%s2570] sm:$0xf]
  %v2572 = vld [vmem:[%s2570 + $0x4] sm:$0xf]
  %v2573 = vld [vmem:[%s2570 + $0x8] sm:$0xf]
  %v2574 = vld [vmem:[%s2570 + $0xc] sm:$0xf]
  %v2575 = vld [vmem:[%s2570 + $0x10] sm:$0xf]
  %v2576 = vld [vmem:[%s2570 + $0x14] sm:$0xf]
  %v2577 = vld [vmem:[%s2570 + $0x18] sm:$0xf]
  %v2578 = vld [vmem:[%s2570 + $0x1c] sm:$0xf]
  %s2579 = scalar_lea.vmem %s13, 2
  %v2580 = vld [vmem:[%s2579] sm:$0x1]
  %v2581 = vpack.c.bf16 %v2567, %v2566
  %v2582 = vpack.c.bf16 %v2569, %v2568
  %v2584 = vlaneseq
  %v2585 = vshrl.u32 %v2584, 7
  %v2586 = vsub.s32 0, %v2585
  %v2587 = vrot.slane %v2580, %v2586
  %v2597 = vunpack.c.l.b16 %v2571
  %v2598 = vunpack.c.l.b16 %v2572
  %v2599 = vunpack.c.l.b16 %v2573
  %v2600 = vunpack.c.l.b16 %v2574
  %v2601 = vunpack.c.l.b16 %v2575
  %v2602 = vunpack.c.l.b16 %v2576
  %v2603 = vunpack.c.l.b16 %v2577
  %v2604 = vunpack.c.l.b16 %v2578
  %v2605 = vpack.c.b16 %v2598, %v2597
  %v2606 = vpack.c.b16 %v2600, %v2599
  %v2607 = vpack.c.b16 %v2602, %v2601
  %v2608 = vpack.c.b16 %v2604, %v2603
  %v2614 = vsel %vm253, %v2581, 0
  %v2617 = vsel %vm253, %v2582, 0
  %2619 = vmatprep.subr.bf16.mxu0 0
  %2620 = vmatpush1.bf16.msra.mxu0 0
  %2621 = vmatprep.subr.bf16.mxu0 0
  %2622 = vmatpush1.bf16.msra.mxu0 0
  %2623 = vmatprep.subr.bf16.mxu0 0
  %2624 = vmatpush1.bf16.msra.mxu0 0
  %2625 = vmatprep.subr.bf16.mxu0 0
  %2626 = vmatpush1.bf16.msra.mxu0 0
  %2627 = vmatprep.subr.bf16.mxu0 0
  %2628 = vmatpush1.bf16.msra.mxu0 %v2608
  %2629 = vmatprep.subr.bf16.mxu0 0
  %2630 = vmatpush1.bf16.msra.mxu0 %v2607
  %2631 = vmatprep.subr.bf16.mxu0 0
  %2632 = vmatpush1.bf16.msra.mxu0 %v2606
  %2633 = vmatprep.subr.bf16.mxu0 0
  %2634 = vmatpush1.bf16.msra.mxu0 %v2605
  %2635 = vmatprep.subr.bf16.mxu0 0
  %2636 = vmatpush2.bf16.msra.mxu0 0
  %2637 = vmatprep.subr.bf16.mxu0 0
  %2638 = vmatpush2.bf16.msra.mxu0 0
  %2639 = vmatprep.subr.bf16.mxu0 0
  %2640 = vmatpush2.bf16.msra.mxu0 0
  %2641 = vmatprep.subr.bf16.mxu0 0
  %2642 = vmatpush2.bf16.msra.mxu0 0
  %2643 = vmatprep.subr.bf16.mxu0 0
  %2644 = vmatpush2.bf16.msra.mxu0 0
  %2645 = vmatprep.subr.bf16.mxu0 0
  %2646 = vmatpush2.bf16.msra.mxu0 0
  %2647 = vmatprep.subr.bf16.mxu0 0
  %2648 = vmatpush2.bf16.msra.mxu0 0
  %2649 = vmatprep.subr.bf16.mxu0 0
  %2650 = vmatpush2.bf16.msra.mxu0 0
  %2651 = vmatprep.mubr.bf16.mxu0 0
  %2652 = vmatmul.mubr.bf16.gmra.mxu0 %v2614
  %v2653 = vpop.f32.mrf.mxu0
  %v2654 = vadd.f32 %v2587, %v2653
  %v2655 = vpop.f32.mrf.mxu0
  %v2656 = vpop.f32.mrf.mxu0
  %v2657 = vadd.f32 %v2587, %v2656
  %v2658 = vpop.f32.mrf.mxu0
  %2659 = vmatprep.mubr.bf16.mxu0 0
  %2660 = vmatmul.mubr.bf16.gmra.mxu0 %v2617
  %v2661 = vpop.f32.mrf.mxu0
  %v2662 = vadd.f32 %v2587, %v2661
  %v2663 = vpop.f32.mrf.mxu0
  %v2664 = vpop.f32.mrf.mxu0
  %v2665 = vadd.f32 %v2587, %v2664
  %v2666 = vpop.f32.mrf.mxu0
  %2667 = vdwg.mxu0
  %v2668 = vpack.c.bf16 %v2657, %v2654
  %v2669 = vpack.c.bf16 %v2665, %v2662
  %s2670 = scalar_lea.vmem %s1, 64
  %v2671 = vld [vmem:[%s2670] sm:$0xf]
  %v2672 = vld [vmem:[%s2670 + $0x4] sm:$0xf]
  %v2673 = vld [vmem:[%s2670 + $0x8] sm:$0xf]
  %v2674 = vld [vmem:[%s2670 + $0xc] sm:$0xf]
  %v2675 = vld [vmem:[%s2670 + $0x10] sm:$0xf]
  %v2676 = vld [vmem:[%s2670 + $0x14] sm:$0xf]
  %v2677 = vld [vmem:[%s2670 + $0x18] sm:$0xf]
  %v2678 = vld [vmem:[%s2670 + $0x1c] sm:$0xf]
  %v2687 = vunpack.c.l.b16 %v2671
  %v2688 = vunpack.c.l.b16 %v2672
  %v2689 = vunpack.c.l.b16 %v2673
  %v2690 = vunpack.c.l.b16 %v2674
  %v2691 = vunpack.c.l.b16 %v2675
  %v2692 = vunpack.c.l.b16 %v2676
  %v2693 = vunpack.c.l.b16 %v2677
  %v2694 = vunpack.c.l.b16 %v2678
  %v2695 = vpack.c.b16 %v2688, %v2687
  %v2696 = vpack.c.b16 %v2690, %v2689
  %v2697 = vpack.c.b16 %v2692, %v2691
  %v2698 = vpack.c.b16 %v2694, %v2693
  %v2704 = vsel %vm253, %v2668, 0
  %v2707 = vsel %vm253, %v2669, 0
  %2709 = vmatprep.subr.bf16.mxu0 0
  %2710 = vmatpush1.bf16.msra.mxu0 0
  %2711 = vmatprep.subr.bf16.mxu0 0
  %2712 = vmatpush1.bf16.msra.mxu0 0
  %2713 = vmatprep.subr.bf16.mxu0 0
  %2714 = vmatpush1.bf16.msra.mxu0 0
  %2715 = vmatprep.subr.bf16.mxu0 0
  %2716 = vmatpush1.bf16.msra.mxu0 0
  %2717 = vmatprep.subr.bf16.mxu0 0
  %2718 = vmatpush1.bf16.msra.mxu0 %v2698
  %2719 = vmatprep.subr.bf16.mxu0 0
  %2720 = vmatpush1.bf16.msra.mxu0 %v2697
  %2721 = vmatprep.subr.bf16.mxu0 0
  %2722 = vmatpush1.bf16.msra.mxu0 %v2696
  %2723 = vmatprep.subr.bf16.mxu0 0
  %2724 = vmatpush1.bf16.msra.mxu0 %v2695
  %2725 = vmatprep.subr.bf16.mxu0 0
  %2726 = vmatpush2.bf16.msra.mxu0 0
  %2727 = vmatprep.subr.bf16.mxu0 0
  %2728 = vmatpush2.bf16.msra.mxu0 0
  %2729 = vmatprep.subr.bf16.mxu0 0
  %2730 = vmatpush2.bf16.msra.mxu0 0
  %2731 = vmatprep.subr.bf16.mxu0 0
  %2732 = vmatpush2.bf16.msra.mxu0 0
  %2733 = vmatprep.subr.bf16.mxu0 0
  %2734 = vmatpush2.bf16.msra.mxu0 0
  %2735 = vmatprep.subr.bf16.mxu0 0
  %2736 = vmatpush2.bf16.msra.mxu0 0
  %2737 = vmatprep.subr.bf16.mxu0 0
  %2738 = vmatpush2.bf16.msra.mxu0 0
  %2739 = vmatprep.subr.bf16.mxu0 0
  %2740 = vmatpush2.bf16.msra.mxu0 0
  %2741 = vmatprep.mubr.bf16.mxu0 0
  %2742 = vmatmul.mubr.bf16.gmra.mxu0 %v2704
  %v2743 = vpop.f32.mrf.mxu0
  %v2744 = vadd.f32 0.0, %v2743
  %v2745 = vpop.f32.mrf.mxu0
  %v2746 = vpop.f32.mrf.mxu0
  %v2747 = vadd.f32 0.0, %v2746
  %v2748 = vpop.f32.mrf.mxu0
  %2749 = vmatprep.mubr.bf16.mxu0 0
  %2750 = vmatmul.mubr.bf16.gmra.mxu0 %v2707
  %v2751 = vpop.f32.mrf.mxu0
  %v2752 = vadd.f32 0.0, %v2751
  %v2753 = vpop.f32.mrf.mxu0
  %v2754 = vpop.f32.mrf.mxu0
  %v2755 = vadd.f32 0.0, %v2754
  %v2756 = vpop.f32.mrf.mxu0
  %2757 = vdwg.mxu0
  %2758 = vmax.xlane.f32.xlu0 %v2744
  %v2759 = vpop.xlane.xlu0 %2758
  %2760 = vmax.xlane.f32.xlu0 %v2747
  %v2761 = vpop.xlane.xlu0 %2760
  %2762 = vmax.xlane.f32.xlu0 %v2752
  %v2763 = vpop.xlane.xlu0 %2762
  %2764 = vmax.xlane.f32.xlu0 %v2755
  %v2765 = vpop.xlane.xlu0 %2764
  %v2766 = vsub.f32 %v2744, %v2759
  %v2767 = vsub.f32 %v2747, %v2761
  %v2768 = vsub.f32 %v2752, %v2763
  %v2769 = vsub.f32 %v2755, %v2765
  %v2770 = vmul.f32 %v2766, 1.442695
  %v2771 = vpow.pop %v2770
  %v2772 = vmul.f32 %v2767, 1.442695
  %v2773 = vpow.pop %v2772
  %v2774 = vmul.f32 %v2768, 1.442695
  %v2775 = vpow.pop %v2774
  %v2776 = vmul.f32 %v2769, 1.442695
  %v2777 = vpow.pop %v2776
  %2778 = vmatprep.subr.mxu0 0.0
  %2779 = vmatpush1.msra.mxu0 %v722
  %2780 = vmatprep.subr.mxu0 0.0
  %2781 = vmatpush1.msra.mxu0 %v721
  %2782 = vmatprep.subr.mxu0 0.0
  %2783 = vmatpush1.msra.mxu0 %v720
  %2784 = vmatprep.subr.mxu0 0.0
  %2785 = vmatpush1.msra.mxu0 %v719
  %2786 = vmatprep.subr.mxu0 0.0
  %2787 = vmatpush1.msra.mxu0 %v718
  %2788 = vmatprep.subr.mxu0 0.0
  %2789 = vmatpush1.msra.mxu0 %v717
  %2790 = vmatprep.subr.mxu0 0.0
  %2791 = vmatpush1.msra.mxu0 %v716
  %2792 = vmatprep.subr.mxu0 0.0
  %2793 = vmatpush1.msra.mxu0 %v715
  %2794 = vmatprep.subr.mxu0 0.0
  %2795 = vmatpush1.msra.mxu0 %v714
  %2796 = vmatprep.subr.mxu0 0.0
  %2797 = vmatpush1.msra.mxu0 %v713
  %2798 = vmatprep.subr.mxu0 0.0
  %2799 = vmatpush1.msra.mxu0 %v712
  %2800 = vmatprep.subr.mxu0 0.0
  %2801 = vmatpush1.msra.mxu0 %v711
  %2802 = vmatprep.subr.mxu0 0.0
  %2803 = vmatpush1.msra.mxu0 %v710
  %2804 = vmatprep.subr.mxu0 0.0
  %2805 = vmatpush1.msra.mxu0 %v709
  %2806 = vmatprep.subr.mxu0 0.0
  %2807 = vmatpush1.msra.mxu0 %v708
  %2808 = vmatprep.subr.mxu0 0.0
  %2809 = vmatpush1.msra.mxu0 %v707
  %2810 = vmatprep.subr.mxu0 0.0
  %2811 = vmatpush2.msra.mxu0 0.0
  %2812 = vmatprep.subr.mxu0 0.0
  %2813 = vmatpush2.msra.mxu0 0.0
  %2814 = vmatprep.subr.mxu0 0.0
  %2815 = vmatpush2.msra.mxu0 0.0
  %2816 = vmatprep.subr.mxu0 0.0
  %2817 = vmatpush2.msra.mxu0 0.0
  %2818 = vmatprep.subr.mxu0 0.0
  %2819 = vmatpush2.msra.mxu0 0.0
  %2820 = vmatprep.subr.mxu0 0.0
  %2821 = vmatpush2.msra.mxu0 0.0
  %2822 = vmatprep.subr.mxu0 0.0
  %2823 = vmatpush2.msra.mxu0 0.0
  %2824 = vmatprep.subr.mxu0 0.0
  %2825 = vmatpush2.msra.mxu0 0.0
  %2826 = vmatprep.subr.mxu0 0.0
  %2827 = vmatpush2.msra.mxu0 0.0
  %2828 = vmatprep.subr.mxu0 0.0
  %2829 = vmatpush2.msra.mxu0 0.0
  %2830 = vmatprep.subr.mxu0 0.0
  %2831 = vmatpush2.msra.mxu0 0.0
  %2832 = vmatprep.subr.mxu0 0.0
  %2833 = vmatpush2.msra.mxu0 0.0
  %2834 = vmatprep.subr.mxu0 0.0
  %2835 = vmatpush2.msra.mxu0 0.0
  %2836 = vmatprep.subr.mxu0 0.0
  %2837 = vmatpush2.msra.mxu0 0.0
  %2838 = vmatprep.subr.mxu0 0.0
  %2839 = vmatpush2.msra.mxu0 0.0
  %2840 = vmatprep.subr.mxu0 0.0
  %2841 = vmatpush2.msra.mxu0 0.0
  %2842 = vmatprep.mubr.f32.mxu0 0.0
  %2843 = vmatmul.mubr.f32.gmra.mxu0 %v2771
  %v2844 = vpop.f32.mrf.mxu0
  %v2845 = vadd.f32 0.0, %v2844
  %v2846 = vpop.f32.mrf.mxu0
  %2847 = vmatprep.mubr.f32.mxu0 0.0
  %2848 = vmatmul.mubr.f32.gmra.mxu0 %v2773
  %v2849 = vpop.f32.mrf.mxu0
  %v2850 = vadd.f32 0.0, %v2849
  %v2851 = vpop.f32.mrf.mxu0
  %2852 = vmatprep.mubr.f32.mxu0 0.0
  %2853 = vmatmul.mubr.f32.gmra.mxu0 %v2775
  %v2854 = vpop.f32.mrf.mxu0
  %v2855 = vadd.f32 0.0, %v2854
  %v2856 = vpop.f32.mrf.mxu0
  %2857 = vmatprep.mubr.f32.mxu0 0.0
  %2858 = vmatmul.mubr.f32.gmra.mxu0 %v2777
  %v2859 = vpop.f32.mrf.mxu0
  %v2860 = vadd.f32 0.0, %v2859
  %v2861 = vpop.f32.mrf.mxu0
  %2862 = vdwg.mxu0
  %v2863 = vmax.f32 %v2845, 1e-30
  %v2864 = vmax.f32 %v2850, 1e-30
  %v2865 = vmax.f32 %v2855, 1e-30
  %v2866 = vmax.f32 %v2860, 1e-30
  %v2867 = vrcp.pop %v2863
  %v2868 = vmul.f32 %v2771, %v2867
  %v2869 = vrcp.pop %v2864
  %v2870 = vmul.f32 %v2773, %v2869
  %v2871 = vrcp.pop %v2865
  %v2872 = vmul.f32 %v2775, %v2871
  %v2873 = vrcp.pop %v2866
  %v2874 = vmul.f32 %v2777, %v2873
  %v2875 = vpack.c.bf16 %v2870, %v2868
  %v2876 = vpack.c.bf16 %v2874, %v2872
  %s2877 = scalar_lea.vmem %s2, 128
  %v2878 = vld [vmem:[%s2877] sm:$0xf]
  %v2879 = vld [vmem:[%s2877 + $0x4] sm:$0xf]
  %v2880 = vld [vmem:[%s2877 + $0x8] sm:$0xf]
  %v2881 = vld [vmem:[%s2877 + $0xc] sm:$0xf]
  %v2882 = vld [vmem:[%s2877 + $0x10] sm:$0xf]
  %v2883 = vld [vmem:[%s2877 + $0x14] sm:$0xf]
  %v2884 = vld [vmem:[%s2877 + $0x18] sm:$0xf]
  %v2885 = vld [vmem:[%s2877 + $0x1c] sm:$0xf]
  %v2886 = vld [vmem:[%s2877 + $0x20] sm:$0xf]
  %v2887 = vld [vmem:[%s2877 + $0x24] sm:$0xf]
  %v2888 = vld [vmem:[%s2877 + $0x28] sm:$0xf]
  %v2889 = vld [vmem:[%s2877 + $0x2c] sm:$0xf]
  %v2890 = vld [vmem:[%s2877 + $0x30] sm:$0xf]
  %v2891 = vld [vmem:[%s2877 + $0x34] sm:$0xf]
  %v2892 = vld [vmem:[%s2877 + $0x38] sm:$0xf]
  %v2893 = vld [vmem:[%s2877 + $0x3c] sm:$0xf]
  %v2910 = vunpack.c.l.b16 %v2878
  %v2911 = vunpack.c.l.b16 %v2879
  %v2912 = vunpack.c.l.b16 %v2880
  %v2913 = vunpack.c.l.b16 %v2881
  %v2914 = vunpack.c.l.b16 %v2882
  %v2915 = vunpack.c.l.b16 %v2883
  %v2916 = vunpack.c.l.b16 %v2884
  %v2917 = vunpack.c.l.b16 %v2885
  %v2918 = vunpack.c.l.b16 %v2886
  %v2919 = vunpack.c.l.b16 %v2887
  %v2920 = vunpack.c.l.b16 %v2888
  %v2921 = vunpack.c.l.b16 %v2889
  %v2922 = vunpack.c.l.b16 %v2890
  %v2923 = vunpack.c.l.b16 %v2891
  %v2924 = vunpack.c.l.b16 %v2892
  %v2925 = vunpack.c.l.b16 %v2893
  %v2926 = vpack.c.b16 %v2911, %v2910
  %v2927 = vpack.c.b16 %v2913, %v2912
  %v2928 = vpack.c.b16 %v2915, %v2914
  %v2929 = vpack.c.b16 %v2917, %v2916
  %v2930 = vpack.c.b16 %v2919, %v2918
  %v2931 = vpack.c.b16 %v2921, %v2920
  %v2932 = vpack.c.b16 %v2923, %v2922
  %v2933 = vpack.c.b16 %v2925, %v2924
  %2942 = vmatprep.subr.bf16.mxu0 0
  %2943 = vmatpush1.bf16.msra.mxu0 %v2933
  %2944 = vmatprep.subr.bf16.mxu0 0
  %2945 = vmatpush1.bf16.msra.mxu0 %v2932
  %2946 = vmatprep.subr.bf16.mxu0 0
  %2947 = vmatpush1.bf16.msra.mxu0 %v2931
  %2948 = vmatprep.subr.bf16.mxu0 0
  %2949 = vmatpush1.bf16.msra.mxu0 %v2930
  %2950 = vmatprep.subr.bf16.mxu0 0
  %2951 = vmatpush1.bf16.msra.mxu0 %v2929
  %2952 = vmatprep.subr.bf16.mxu0 0
  %2953 = vmatpush1.bf16.msra.mxu0 %v2928
  %2954 = vmatprep.subr.bf16.mxu0 0
  %2955 = vmatpush1.bf16.msra.mxu0 %v2927
  %2956 = vmatprep.subr.bf16.mxu0 0
  %2957 = vmatpush1.bf16.msra.mxu0 %v2926
  %2958 = vmatprep.subr.bf16.mxu0 0
  %2959 = vmatpush2.bf16.msra.mxu0 0
  %2960 = vmatprep.subr.bf16.mxu0 0
  %2961 = vmatpush2.bf16.msra.mxu0 0
  %2962 = vmatprep.subr.bf16.mxu0 0
  %2963 = vmatpush2.bf16.msra.mxu0 0
  %2964 = vmatprep.subr.bf16.mxu0 0
  %2965 = vmatpush2.bf16.msra.mxu0 0
  %2966 = vmatprep.subr.bf16.mxu0 0
  %2967 = vmatpush2.bf16.msra.mxu0 0
  %2968 = vmatprep.subr.bf16.mxu0 0
  %2969 = vmatpush2.bf16.msra.mxu0 0
  %2970 = vmatprep.subr.bf16.mxu0 0
  %2971 = vmatpush2.bf16.msra.mxu0 0
  %2972 = vmatprep.subr.bf16.mxu0 0
  %2973 = vmatpush2.bf16.msra.mxu0 0
  %2974 = vmatprep.mubr.bf16.mxu0 0
  %2975 = vmatmul.mubr.bf16.gmra.mxu0 %v2875
  %v2976 = vpop.f32.mrf.mxu0
  %v2977 = vadd.f32 0.0, %v2976
  %v2978 = vpop.f32.mrf.mxu0
  %v2979 = vpop.f32.mrf.mxu0
  %v2980 = vadd.f32 0.0, %v2979
  %v2981 = vpop.f32.mrf.mxu0
  %2982 = vmatprep.mubr.bf16.mxu0 0
  %2983 = vmatmul.mubr.bf16.gmra.mxu0 %v2876
  %v2984 = vpop.f32.mrf.mxu0
  %v2985 = vadd.f32 0.0, %v2984
  %v2986 = vpop.f32.mrf.mxu0
  %v2987 = vpop.f32.mrf.mxu0
  %v2988 = vadd.f32 0.0, %v2987
  %v2989 = vpop.f32.mrf.mxu0
  %2990 = vdwg.mxu0
  %s2991 = scalar_lea.vmem %s14, 64
  %v2992 = vld [vmem:[%s2991] sm:$0xf]
  %v2993 = vld [vmem:[%s2991 + $0x4] sm:$0xf]
  %v2994 = vld [vmem:[%s2991 + $0x8] sm:$0xf]
  %v2995 = vld [vmem:[%s2991 + $0xc] sm:$0xf]
  %v2996 = vld [vmem:[%s2991 + $0x10] sm:$0xf]
  %v2997 = vld [vmem:[%s2991 + $0x14] sm:$0xf]
  %v2998 = vld [vmem:[%s2991 + $0x18] sm:$0xf]
  %v2999 = vld [vmem:[%s2991 + $0x1c] sm:$0xf]
  %s3000 = scalar_lea.vmem %s15, 2
  %v3001 = vld [vmem:[%s3000] sm:$0x1]
  %v3002 = vpack.c.bf16 %v2980, %v2977
  %v3003 = vpack.c.bf16 %v2988, %v2985
  %v3005 = vlaneseq
  %v3006 = vshrl.u32 %v3005, 7
  %v3007 = vsub.s32 0, %v3006
  %v3008 = vrot.slane %v3001, %v3007
  %v3018 = vunpack.c.l.b16 %v2992
  %v3019 = vunpack.c.l.b16 %v2993
  %v3020 = vunpack.c.l.b16 %v2994
  %v3021 = vunpack.c.l.b16 %v2995
  %v3022 = vunpack.c.l.b16 %v2996
  %v3023 = vunpack.c.l.b16 %v2997
  %v3024 = vunpack.c.l.b16 %v2998
  %v3025 = vunpack.c.l.b16 %v2999
  %v3026 = vpack.c.b16 %v3019, %v3018
  %v3027 = vpack.c.b16 %v3021, %v3020
  %v3028 = vpack.c.b16 %v3023, %v3022
  %v3029 = vpack.c.b16 %v3025, %v3024
  %v3035 = vsel %vm253, %v3002, 0
  %v3038 = vsel %vm253, %v3003, 0
  %3040 = vmatprep.subr.bf16.mxu0 0
  %3041 = vmatpush1.bf16.msra.mxu0 0
  %3042 = vmatprep.subr.bf16.mxu0 0
  %3043 = vmatpush1.bf16.msra.mxu0 0
  %3044 = vmatprep.subr.bf16.mxu0 0
  %3045 = vmatpush1.bf16.msra.mxu0 0
  %3046 = vmatprep.subr.bf16.mxu0 0
  %3047 = vmatpush1.bf16.msra.mxu0 0
  %3048 = vmatprep.subr.bf16.mxu0 0
  %3049 = vmatpush1.bf16.msra.mxu0 %v3029
  %3050 = vmatprep.subr.bf16.mxu0 0
  %3051 = vmatpush1.bf16.msra.mxu0 %v3028
  %3052 = vmatprep.subr.bf16.mxu0 0
  %3053 = vmatpush1.bf16.msra.mxu0 %v3027
  %3054 = vmatprep.subr.bf16.mxu0 0
  %3055 = vmatpush1.bf16.msra.mxu0 %v3026
  %3056 = vmatprep.subr.bf16.mxu0 0
  %3057 = vmatpush2.bf16.msra.mxu0 0
  %3058 = vmatprep.subr.bf16.mxu0 0
  %3059 = vmatpush2.bf16.msra.mxu0 0
  %3060 = vmatprep.subr.bf16.mxu0 0
  %3061 = vmatpush2.bf16.msra.mxu0 0
  %3062 = vmatprep.subr.bf16.mxu0 0
  %3063 = vmatpush2.bf16.msra.mxu0 0
  %3064 = vmatprep.subr.bf16.mxu0 0
  %3065 = vmatpush2.bf16.msra.mxu0 0
  %3066 = vmatprep.subr.bf16.mxu0 0
  %3067 = vmatpush2.bf16.msra.mxu0 0
  %3068 = vmatprep.subr.bf16.mxu0 0
  %3069 = vmatpush2.bf16.msra.mxu0 0
  %3070 = vmatprep.subr.bf16.mxu0 0
  %3071 = vmatpush2.bf16.msra.mxu0 0
  %3072 = vmatprep.mubr.bf16.mxu0 0
  %3073 = vmatmul.mubr.bf16.gmra.mxu0 %v3035
  %v3074 = vpop.f32.mrf.mxu0
  %v3075 = vadd.f32 %v3008, %v3074
  %v3076 = vpop.f32.mrf.mxu0
  %v3077 = vpop.f32.mrf.mxu0
  %v3078 = vadd.f32 %v3008, %v3077
  %v3079 = vpop.f32.mrf.mxu0
  %3080 = vmatprep.mubr.bf16.mxu0 0
  %3081 = vmatmul.mubr.bf16.gmra.mxu0 %v3038
  %v3082 = vpop.f32.mrf.mxu0
  %v3083 = vadd.f32 %v3008, %v3082
  %v3084 = vpop.f32.mrf.mxu0
  %v3085 = vpop.f32.mrf.mxu0
  %v3086 = vadd.f32 %v3008, %v3085
  %v3087 = vpop.f32.mrf.mxu0
  %3088 = vdwg.mxu0
  %v3089 = vadd.f32 %v2490, %v3075
  %v3090 = vadd.f32 %v2491, %v3078
  %v3091 = vadd.f32 %v2492, %v3083
  %v3092 = vadd.f32 %v2493, %v3086
  %s3093 = scalar_lea.vmem %s10, 2
  %v3094 = vld [vmem:[%s3093] sm:$0x1]
  %s3095 = scalar_lea.vmem %s11, 2
  %v3096 = vld [vmem:[%s3095] sm:$0x1]
  %v3097 = vsel %vm253, %v3089, 0.0
  %3098 = vadd.xlane.f32.xlu0 %v3097
  %v3099 = vpop.xlane.xlu0 %3098
  %v3100 = vsel %vm253, %v3090, 0.0
  %3101 = vadd.xlane.f32.xlu0 %v3100
  %v3102 = vpop.xlane.xlu0 %3101
  %v3103 = vsel %vm253, %v3091, 0.0
  %3104 = vadd.xlane.f32.xlu0 %v3103
  %v3105 = vpop.xlane.xlu0 %3104
  %v3106 = vsel %vm253, %v3092, 0.0
  %3107 = vadd.xlane.f32.xlu0 %v3106
  %v3108 = vpop.xlane.xlu0 %3107
  %v3109 = vmul.f32 %v3099, %v441
  %v3110 = vmul.f32 %v3102, %v441
  %v3111 = vmul.f32 %v3105, %v441
  %v3112 = vmul.f32 %v3108, %v441
  %v3113 = vsub.f32 %v3089, %v3109
  %v3114 = vsub.f32 %v3090, %v3110
  %v3115 = vsub.f32 %v3091, %v3111
  %v3116 = vsub.f32 %v3092, %v3112
  %v3117 = vmul.f32 %v3113, %v3113
  %v3118 = vmul.f32 %v3114, %v3114
  %v3119 = vmul.f32 %v3115, %v3115
  %v3120 = vmul.f32 %v3116, %v3116
  %v3121 = vsel %vm253, %v3117, 0.0
  %3122 = vadd.xlane.f32.xlu0 %v3121
  %v3123 = vpop.xlane.xlu0 %3122
  %v3124 = vsel %vm253, %v3118, 0.0
  %3125 = vadd.xlane.f32.xlu0 %v3124
  %v3126 = vpop.xlane.xlu0 %3125
  %v3127 = vsel %vm253, %v3119, 0.0
  %3128 = vadd.xlane.f32.xlu0 %v3127
  %v3129 = vpop.xlane.xlu0 %3128
  %v3130 = vsel %vm253, %v3120, 0.0
  %3131 = vadd.xlane.f32.xlu0 %v3130
  %v3132 = vpop.xlane.xlu0 %3131
  %v3133 = vmul.f32 %v3123, %v441
  %v3134 = vmul.f32 %v3126, %v441
  %v3135 = vmul.f32 %v3129, %v441
  %v3136 = vmul.f32 %v3132, %v441
  %v3137 = vadd.f32 %v3133, 1e-05
  %v3138 = vadd.f32 %v3134, 1e-05
  %v3139 = vadd.f32 %v3135, 1e-05
  %v3140 = vadd.f32 %v3136, 1e-05
  %v3141 = vrsqrt.pop %v3137
  %v3142 = vrsqrt.pop %v3138
  %v3143 = vrsqrt.pop %v3139
  %v3144 = vrsqrt.pop %v3140
  %v3145 = vmul.f32 %v3113, %v3141
  %v3146 = vmul.f32 %v3114, %v3142
  %v3147 = vmul.f32 %v3115, %v3143
  %v3148 = vmul.f32 %v3116, %v3144
  %v3150 = vlaneseq
  %v3151 = vshrl.u32 %v3150, 7
  %v3152 = vsub.s32 0, %v3151
  %v3153 = vrot.slane %v3094, %v3152
  %v3155 = vmul.f32 %v3145, %v3153
  %v3156 = vmul.f32 %v3146, %v3153
  %v3157 = vmul.f32 %v3147, %v3153
  %v3158 = vmul.f32 %v3148, %v3153
  %v3160 = vlaneseq
  %v3161 = vshrl.u32 %v3160, 7
  %v3162 = vsub.s32 0, %v3161
  %v3163 = vrot.slane %v3096, %v3162
  %v3165 = vadd.f32 %v3155, %v3163
  %v3166 = vadd.f32 %v3156, %v3163
  %v3167 = vadd.f32 %v3157, %v3163
  %v3168 = vadd.f32 %v3158, %v3163
  %s3169 = scalar_lea.vmem %s16, 128
  %v3170 = vld [vmem:[%s3169] sm:$0xff]
  %v3171 = vld [vmem:[%s3169 + $0x8] sm:$0xff]
  %v3172 = vld [vmem:[%s3169 + $0x10] sm:$0xff]
  %v3173 = vld [vmem:[%s3169 + $0x18] sm:$0xff]
  %v3174 = vld [vmem:[%s3169 + $0x20] sm:$0xff]
  %v3175 = vld [vmem:[%s3169 + $0x28] sm:$0xff]
  %v3176 = vld [vmem:[%s3169 + $0x30] sm:$0xff]
  %v3177 = vld [vmem:[%s3169 + $0x38] sm:$0xff]
  %s3178 = scalar_lea.vmem %s17, 4
  %v3179 = vld [vmem:[%s3178] sm:$0x3]
  %v3180 = vpack.c.bf16 %v3166, %v3165
  %v3181 = vpack.c.bf16 %v3168, %v3167
  %v3183 = vlaneseq
  %v3184 = vshrl.u32 %v3183, 7
  %v3185 = vsub.s32 0, %v3184
  %v3186 = vrot.slane %v3179, %v3185
  %v3187 = vlaneseq
  %v3188 = vshrl.u32 %v3187, 7
  %v3189 = vsub.s32 1, %v3188
  %v3190 = vrot.slane %v3179, %v3189
  %v3201 = vunpack.c.l.b16 %v3170
  %v3202 = vunpack.c.h.b16 %v3170
  %v3203 = vunpack.c.l.b16 %v3171
  %v3204 = vunpack.c.h.b16 %v3171
  %v3205 = vunpack.c.l.b16 %v3172
  %v3206 = vunpack.c.h.b16 %v3172
  %v3207 = vunpack.c.l.b16 %v3173
  %v3208 = vunpack.c.h.b16 %v3173
  %v3209 = vunpack.c.l.b16 %v3174
  %v3210 = vunpack.c.h.b16 %v3174
  %v3211 = vunpack.c.l.b16 %v3175
  %v3212 = vunpack.c.h.b16 %v3175
  %v3213 = vunpack.c.l.b16 %v3176
  %v3214 = vunpack.c.h.b16 %v3176
  %v3215 = vunpack.c.l.b16 %v3177
  %v3216 = vunpack.c.h.b16 %v3177
  %v3217 = vpack.c.b16 %v3203, %v3201
  %v3218 = vpack.c.b16 %v3204, %v3202
  %v3219 = vpack.c.b16 %v3207, %v3205
  %v3220 = vpack.c.b16 %v3208, %v3206
  %v3221 = vpack.c.b16 %v3211, %v3209
  %v3222 = vpack.c.b16 %v3212, %v3210
  %v3223 = vpack.c.b16 %v3215, %v3213
  %v3224 = vpack.c.b16 %v3216, %v3214
  %v3234 = vsel %vm253, %v3180, 0
  %v3237 = vsel %vm253, %v3181, 0
  %3239 = vmatprep.subr.bf16.mxu0 0
  %3240 = vmatpush1.bf16.msra.mxu0 0
  %3241 = vmatprep.subr.bf16.mxu0 0
  %3242 = vmatpush1.bf16.msra.mxu0 0
  %3243 = vmatprep.subr.bf16.mxu0 0
  %3244 = vmatpush1.bf16.msra.mxu0 0
  %3245 = vmatprep.subr.bf16.mxu0 0
  %3246 = vmatpush1.bf16.msra.mxu0 0
  %3247 = vmatprep.subr.bf16.mxu0 %v3224
  %3248 = vmatpush1.bf16.msra.mxu0 %v3223
  %3249 = vmatprep.subr.bf16.mxu0 %v3222
  %3250 = vmatpush1.bf16.msra.mxu0 %v3221
  %3251 = vmatprep.subr.bf16.mxu0 %v3220
  %3252 = vmatpush1.bf16.msra.mxu0 %v3219
  %3253 = vmatprep.subr.bf16.mxu0 %v3218
  %3254 = vmatpush1.bf16.msra.mxu0 %v3217
  %3255 = vmatprep.subr.bf16.mxu0 0
  %3256 = vmatpush2.bf16.msra.mxu0 0
  %3257 = vmatprep.subr.bf16.mxu0 0
  %3258 = vmatpush2.bf16.msra.mxu0 0
  %3259 = vmatprep.subr.bf16.mxu0 0
  %3260 = vmatpush2.bf16.msra.mxu0 0
  %3261 = vmatprep.subr.bf16.mxu0 0
  %3262 = vmatpush2.bf16.msra.mxu0 0
  %3263 = vmatprep.subr.bf16.mxu0 0
  %3264 = vmatpush2.bf16.msra.mxu0 0
  %3265 = vmatprep.subr.bf16.mxu0 0
  %3266 = vmatpush2.bf16.msra.mxu0 0
  %3267 = vmatprep.subr.bf16.mxu0 0
  %3268 = vmatpush2.bf16.msra.mxu0 0
  %3269 = vmatprep.subr.bf16.mxu0 0
  %3270 = vmatpush2.bf16.msra.mxu0 0
  %3271 = vmatprep.mubr.bf16.mxu0 0
  %3272 = vmatmul.mubr.bf16.gmra.mxu0 %v3234
  %v3273 = vpop.f32.mrf.mxu0
  %v3274 = vadd.f32 %v3186, %v3273
  %v3275 = vpop.f32.mrf.mxu0
  %v3276 = vadd.f32 %v3190, %v3275
  %v3277 = vpop.f32.mrf.mxu0
  %v3278 = vadd.f32 %v3186, %v3277
  %v3279 = vpop.f32.mrf.mxu0
  %v3280 = vadd.f32 %v3190, %v3279
  %3281 = vmatprep.mubr.bf16.mxu0 0
  %3282 = vmatmul.mubr.bf16.gmra.mxu0 %v3237
  %v3283 = vpop.f32.mrf.mxu0
  %v3284 = vadd.f32 %v3186, %v3283
  %v3285 = vpop.f32.mrf.mxu0
  %v3286 = vadd.f32 %v3190, %v3285
  %v3287 = vpop.f32.mrf.mxu0
  %v3288 = vadd.f32 %v3186, %v3287
  %v3289 = vpop.f32.mrf.mxu0
  %v3290 = vadd.f32 %v3190, %v3289
  %3291 = vdwg.mxu0
  %v3292 = vmul.f32 %v3274, 0.5
  %v3293 = vmul.f32 %v3276, 0.5
  %v3294 = vmul.f32 %v3278, 0.5
  %v3295 = vmul.f32 %v3280, 0.5
  %v3296 = vmul.f32 %v3284, 0.5
  %v3297 = vmul.f32 %v3286, 0.5
  %v3298 = vmul.f32 %v3288, 0.5
  %v3299 = vmul.f32 %v3290, 0.5
  %v3300 = vmul.f32 %v3274, 0.70710677
  %v3301 = vmul.f32 %v3276, 0.70710677
  %v3302 = vmul.f32 %v3278, 0.70710677
  %v3303 = vmul.f32 %v3280, 0.70710677
  %v3304 = vmul.f32 %v3284, 0.70710677
  %v3305 = vmul.f32 %v3286, 0.70710677
  %v3306 = vmul.f32 %v3288, 0.70710677
  %v3307 = vmul.f32 %v3290, 0.70710677
  %v3308 = verf.f32.pop %v3300
  %v3309 = verf.f32.pop %v3301
  %v3310 = verf.f32.pop %v3302
  %v3311 = verf.f32.pop %v3303
  %v3312 = verf.f32.pop %v3304
  %v3313 = verf.f32.pop %v3305
  %v3314 = verf.f32.pop %v3306
  %v3315 = verf.f32.pop %v3307
  %v3316 = vadd.f32 %v3308, 1.0
  %v3317 = vadd.f32 %v3309, 1.0
  %v3318 = vadd.f32 %v3310, 1.0
  %v3319 = vadd.f32 %v3311, 1.0
  %v3320 = vadd.f32 %v3312, 1.0
  %v3321 = vadd.f32 %v3313, 1.0
  %v3322 = vadd.f32 %v3314, 1.0
  %v3323 = vadd.f32 %v3315, 1.0
  %v3324 = vmul.f32 %v3292, %v3316
  %v3325 = vmul.f32 %v3293, %v3317
  %v3326 = vmul.f32 %v3294, %v3318
  %v3327 = vmul.f32 %v3295, %v3319
  %v3328 = vmul.f32 %v3296, %v3320
  %v3329 = vmul.f32 %v3297, %v3321
  %v3330 = vmul.f32 %v3298, %v3322
  %v3331 = vmul.f32 %v3299, %v3323
  %s3332 = scalar_lea.vmem %s18, 256
  %v3333 = vld [vmem:[%s3332] sm:$0xf]
  %v3334 = vld [vmem:[%s3332 + $0x4] sm:$0xf]
  %v3335 = vld [vmem:[%s3332 + $0x8] sm:$0xf]
  %v3336 = vld [vmem:[%s3332 + $0xc] sm:$0xf]
  %v3337 = vld [vmem:[%s3332 + $0x10] sm:$0xf]
  %v3338 = vld [vmem:[%s3332 + $0x14] sm:$0xf]
  %v3339 = vld [vmem:[%s3332 + $0x18] sm:$0xf]
  %v3340 = vld [vmem:[%s3332 + $0x1c] sm:$0xf]
  %v3341 = vld [vmem:[%s3332 + $0x20] sm:$0xf]
  %v3342 = vld [vmem:[%s3332 + $0x24] sm:$0xf]
  %v3343 = vld [vmem:[%s3332 + $0x28] sm:$0xf]
  %v3344 = vld [vmem:[%s3332 + $0x2c] sm:$0xf]
  %v3345 = vld [vmem:[%s3332 + $0x30] sm:$0xf]
  %v3346 = vld [vmem:[%s3332 + $0x34] sm:$0xf]
  %v3347 = vld [vmem:[%s3332 + $0x38] sm:$0xf]
  %v3348 = vld [vmem:[%s3332 + $0x3c] sm:$0xf]
  %v3349 = vld [vmem:[%s3332 + $0x40] sm:$0xf]
  %v3350 = vld [vmem:[%s3332 + $0x44] sm:$0xf]
  %v3351 = vld [vmem:[%s3332 + $0x48] sm:$0xf]
  %v3352 = vld [vmem:[%s3332 + $0x4c] sm:$0xf]
  %v3353 = vld [vmem:[%s3332 + $0x50] sm:$0xf]
  %v3354 = vld [vmem:[%s3332 + $0x54] sm:$0xf]
  %v3355 = vld [vmem:[%s3332 + $0x58] sm:$0xf]
  %v3356 = vld [vmem:[%s3332 + $0x5c] sm:$0xf]
  %v3357 = vld [vmem:[%s3332 + $0x60] sm:$0xf]
  %v3358 = vld [vmem:[%s3332 + $0x64] sm:$0xf]
  %v3359 = vld [vmem:[%s3332 + $0x68] sm:$0xf]
  %v3360 = vld [vmem:[%s3332 + $0x6c] sm:$0xf]
  %v3361 = vld [vmem:[%s3332 + $0x70] sm:$0xf]
  %v3362 = vld [vmem:[%s3332 + $0x74] sm:$0xf]
  %v3363 = vld [vmem:[%s3332 + $0x78] sm:$0xf]
  %v3364 = vld [vmem:[%s3332 + $0x7c] sm:$0xf]
  %s3365 = scalar_lea.vmem %s19, 2
  %v3366 = vld [vmem:[%s3365] sm:$0x1]
  %v3367 = vpack.c.bf16 %v3326, %v3324
  %v3368 = vpack.c.bf16 %v3327, %v3325
  %v3369 = vpack.c.bf16 %v3330, %v3328
  %v3370 = vpack.c.bf16 %v3331, %v3329
  %v3372 = vlaneseq
  %v3373 = vshrl.u32 %v3372, 7
  %v3374 = vsub.s32 0, %v3373
  %v3375 = vrot.slane %v3366, %v3374
  %v3409 = vunpack.c.l.b16 %v3333
  %v3410 = vunpack.c.l.b16 %v3334
  %v3411 = vunpack.c.l.b16 %v3335
  %v3412 = vunpack.c.l.b16 %v3336
  %v3413 = vunpack.c.l.b16 %v3337
  %v3414 = vunpack.c.l.b16 %v3338
  %v3415 = vunpack.c.l.b16 %v3339
  %v3416 = vunpack.c.l.b16 %v3340
  %v3417 = vunpack.c.l.b16 %v3341
  %v3418 = vunpack.c.l.b16 %v3342
  %v3419 = vunpack.c.l.b16 %v3343
  %v3420 = vunpack.c.l.b16 %v3344
  %v3421 = vunpack.c.l.b16 %v3345
  %v3422 = vunpack.c.l.b16 %v3346
  %v3423 = vunpack.c.l.b16 %v3347
  %v3424 = vunpack.c.l.b16 %v3348
  %v3425 = vunpack.c.l.b16 %v3349
  %v3426 = vunpack.c.l.b16 %v3350
  %v3427 = vunpack.c.l.b16 %v3351
  %v3428 = vunpack.c.l.b16 %v3352
  %v3429 = vunpack.c.l.b16 %v3353
  %v3430 = vunpack.c.l.b16 %v3354
  %v3431 = vunpack.c.l.b16 %v3355
  %v3432 = vunpack.c.l.b16 %v3356
  %v3433 = vunpack.c.l.b16 %v3357
  %v3434 = vunpack.c.l.b16 %v3358
  %v3435 = vunpack.c.l.b16 %v3359
  %v3436 = vunpack.c.l.b16 %v3360
  %v3437 = vunpack.c.l.b16 %v3361
  %v3438 = vunpack.c.l.b16 %v3362
  %v3439 = vunpack.c.l.b16 %v3363
  %v3440 = vunpack.c.l.b16 %v3364
  %v3441 = vpack.c.b16 %v3410, %v3409
  %v3442 = vpack.c.b16 %v3412, %v3411
  %v3443 = vpack.c.b16 %v3414, %v3413
  %v3444 = vpack.c.b16 %v3416, %v3415
  %v3445 = vpack.c.b16 %v3418, %v3417
  %v3446 = vpack.c.b16 %v3420, %v3419
  %v3447 = vpack.c.b16 %v3422, %v3421
  %v3448 = vpack.c.b16 %v3424, %v3423
  %v3449 = vpack.c.b16 %v3426, %v3425
  %v3450 = vpack.c.b16 %v3428, %v3427
  %v3451 = vpack.c.b16 %v3430, %v3429
  %v3452 = vpack.c.b16 %v3432, %v3431
  %v3453 = vpack.c.b16 %v3434, %v3433
  %v3454 = vpack.c.b16 %v3436, %v3435
  %v3455 = vpack.c.b16 %v3438, %v3437
  %v3456 = vpack.c.b16 %v3440, %v3439
  %3473 = vmatprep.subr.bf16.mxu0 0
  %3474 = vmatpush1.bf16.msra.mxu0 %v3448
  %3475 = vmatprep.subr.bf16.mxu0 0
  %3476 = vmatpush1.bf16.msra.mxu0 %v3447
  %3477 = vmatprep.subr.bf16.mxu0 0
  %3478 = vmatpush1.bf16.msra.mxu0 %v3446
  %3479 = vmatprep.subr.bf16.mxu0 0
  %3480 = vmatpush1.bf16.msra.mxu0 %v3445
  %3481 = vmatprep.subr.bf16.mxu0 0
  %3482 = vmatpush1.bf16.msra.mxu0 %v3444
  %3483 = vmatprep.subr.bf16.mxu0 0
  %3484 = vmatpush1.bf16.msra.mxu0 %v3443
  %3485 = vmatprep.subr.bf16.mxu0 0
  %3486 = vmatpush1.bf16.msra.mxu0 %v3442
  %3487 = vmatprep.subr.bf16.mxu0 0
  %3488 = vmatpush1.bf16.msra.mxu0 %v3441
  %3489 = vmatprep.subr.bf16.mxu0 0
  %3490 = vmatpush2.bf16.msra.mxu0 %v3456
  %3491 = vmatprep.subr.bf16.mxu0 0
  %3492 = vmatpush2.bf16.msra.mxu0 %v3455
  %3493 = vmatprep.subr.bf16.mxu0 0
  %3494 = vmatpush2.bf16.msra.mxu0 %v3454
  %3495 = vmatprep.subr.bf16.mxu0 0
  %3496 = vmatpush2.bf16.msra.mxu0 %v3453
  %3497 = vmatprep.subr.bf16.mxu0 0
  %3498 = vmatpush2.bf16.msra.mxu0 %v3452
  %3499 = vmatprep.subr.bf16.mxu0 0
  %3500 = vmatpush2.bf16.msra.mxu0 %v3451
  %3501 = vmatprep.subr.bf16.mxu0 0
  %3502 = vmatpush2.bf16.msra.mxu0 %v3450
  %3503 = vmatprep.subr.bf16.mxu0 0
  %3504 = vmatpush2.bf16.msra.mxu0 %v3449
  %3505 = vmatprep.mubr.bf16.mxu0 %v3368
  %3506 = vmatmul.mubr.bf16.gmra.mxu0 %v3367
  %v3507 = vpop.f32.mrf.mxu0
  %v3508 = vadd.f32 %v3375, %v3507
  %v3509 = vpop.f32.mrf.mxu0
  %v3510 = vpop.f32.mrf.mxu0
  %v3511 = vadd.f32 %v3375, %v3510
  %v3512 = vpop.f32.mrf.mxu0
  %3513 = vmatprep.mubr.bf16.mxu0 %v3370
  %3514 = vmatmul.mubr.bf16.gmra.mxu0 %v3369
  %v3515 = vpop.f32.mrf.mxu0
  %v3516 = vadd.f32 %v3375, %v3515
  %v3517 = vpop.f32.mrf.mxu0
  %v3518 = vpop.f32.mrf.mxu0
  %v3519 = vadd.f32 %v3375, %v3518
  %v3520 = vpop.f32.mrf.mxu0
  %3521 = vdwg.mxu0
  %v3522 = vadd.f32 %v3089, %v3508
  %v3523 = vadd.f32 %v3090, %v3511
  %v3524 = vadd.f32 %v3091, %v3516
  %v3525 = vadd.f32 %v3092, %v3519
  %v3526 = vld [vmem:[%s20] sm:$0xf]
  %v3527 = vld [vmem:[%s20 + $0x4] sm:$0xf]
  %v3528 = vld [vmem:[%s20 + $0x8] sm:$0xf]
  %v3529 = vld [vmem:[%s20 + $0xc] sm:$0xf]
  %v3530 = vld [vmem:[%s20 + $0x10] sm:$0xf]
  %v3531 = vld [vmem:[%s20 + $0x14] sm:$0xf]
  %v3532 = vld [vmem:[%s20 + $0x18] sm:$0xf]
  %v3533 = vld [vmem:[%s20 + $0x1c] sm:$0xf]
  %v3534 = vld [vmem:[%s21] sm:$0x1]
  %v3535 = vpack.c.bf16 %v3523, %v3522
  %v3536 = vpack.c.bf16 %v3525, %v3524
  %v3538 = vlaneseq
  %v3539 = vshrl.u32 %v3538, 7
  %v3540 = vsub.s32 0, %v3539
  %v3541 = vrot.slane %v3534, %v3540
  %v3551 = vunpack.c.l.b16 %v3526
  %v3552 = vunpack.c.l.b16 %v3527
  %v3553 = vunpack.c.l.b16 %v3528
  %v3554 = vunpack.c.l.b16 %v3529
  %v3555 = vunpack.c.l.b16 %v3530
  %v3556 = vunpack.c.l.b16 %v3531
  %v3557 = vunpack.c.l.b16 %v3532
  %v3558 = vunpack.c.l.b16 %v3533
  %v3559 = vpack.c.b16 %v3552, %v3551
  %v3560 = vpack.c.b16 %v3554, %v3553
  %v3561 = vpack.c.b16 %v3556, %v3555
  %v3562 = vpack.c.b16 %v3558, %v3557
  %v3568 = vsel %vm253, %v3535, 0
  %v3571 = vsel %vm253, %v3536, 0
  %3573 = vmatprep.subr.bf16.mxu0 0
  %3574 = vmatpush1.bf16.msra.mxu0 0
  %3575 = vmatprep.subr.bf16.mxu0 0
  %3576 = vmatpush1.bf16.msra.mxu0 0
  %3577 = vmatprep.subr.bf16.mxu0 0
  %3578 = vmatpush1.bf16.msra.mxu0 0
  %3579 = vmatprep.subr.bf16.mxu0 0
  %3580 = vmatpush1.bf16.msra.mxu0 0
  %3581 = vmatprep.subr.bf16.mxu0 0
  %3582 = vmatpush1.bf16.msra.mxu0 %v3562
  %3583 = vmatprep.subr.bf16.mxu0 0
  %3584 = vmatpush1.bf16.msra.mxu0 %v3561
  %3585 = vmatprep.subr.bf16.mxu0 0
  %3586 = vmatpush1.bf16.msra.mxu0 %v3560
  %3587 = vmatprep.subr.bf16.mxu0 0
  %3588 = vmatpush1.bf16.msra.mxu0 %v3559
  %3589 = vmatprep.subr.bf16.mxu0 0
  %3590 = vmatpush2.bf16.msra.mxu0 0
  %3591 = vmatprep.subr.bf16.mxu0 0
  %3592 = vmatpush2.bf16.msra.mxu0 0
  %3593 = vmatprep.subr.bf16.mxu0 0
  %3594 = vmatpush2.bf16.msra.mxu0 0
  %3595 = vmatprep.subr.bf16.mxu0 0
  %3596 = vmatpush2.bf16.msra.mxu0 0
  %3597 = vmatprep.subr.bf16.mxu0 0
  %3598 = vmatpush2.bf16.msra.mxu0 0
  %3599 = vmatprep.subr.bf16.mxu0 0
  %3600 = vmatpush2.bf16.msra.mxu0 0
  %3601 = vmatprep.subr.bf16.mxu0 0
  %3602 = vmatpush2.bf16.msra.mxu0 0
  %3603 = vmatprep.subr.bf16.mxu0 0
  %3604 = vmatpush2.bf16.msra.mxu0 0
  %3605 = vmatprep.mubr.bf16.mxu0 0
  %3606 = vmatmul.mubr.bf16.gmra.mxu0 %v3568
  %v3607 = vpop.f32.mrf.mxu0
  %v3608 = vadd.f32 %v3541, %v3607
  %v3609 = vpop.f32.mrf.mxu0
  %v3610 = vpop.f32.mrf.mxu0
  %v3611 = vadd.f32 %v3541, %v3610
  %v3612 = vpop.f32.mrf.mxu0
  %3613 = vmatprep.mubr.bf16.mxu0 0
  %3614 = vmatmul.mubr.bf16.gmra.mxu0 %v3571
  %v3615 = vpop.f32.mrf.mxu0
  %v3616 = vadd.f32 %v3541, %v3615
  %v3617 = vpop.f32.mrf.mxu0
  %v3618 = vpop.f32.mrf.mxu0
  %v3619 = vadd.f32 %v3541, %v3618
  %v3620 = vpop.f32.mrf.mxu0
  %3621 = vdwg.mxu0
  %v3622 = vmul.f32 %v3608, 0.5
  %v3623 = vmul.f32 %v3611, 0.5
  %v3624 = vmul.f32 %v3616, 0.5
  %v3625 = vmul.f32 %v3619, 0.5
  %v3626 = vmul.f32 %v3608, 0.70710677
  %v3627 = vmul.f32 %v3611, 0.70710677
  %v3628 = vmul.f32 %v3616, 0.70710677
  %v3629 = vmul.f32 %v3619, 0.70710677
  %v3630 = verf.f32.pop %v3626
  %v3631 = verf.f32.pop %v3627
  %v3632 = verf.f32.pop %v3628
  %v3633 = verf.f32.pop %v3629
  %v3634 = vadd.f32 %v3630, 1.0
  %v3635 = vadd.f32 %v3631, 1.0
  %v3636 = vadd.f32 %v3632, 1.0
  %v3637 = vadd.f32 %v3633, 1.0
  %v3638 = vmul.f32 %v3622, %v3634
  %v3639 = vmul.f32 %v3623, %v3635
  %v3640 = vmul.f32 %v3624, %v3636
  %v3641 = vmul.f32 %v3625, %v3637
  %s3642 = scalar_lea.vmem %s20, 32
  %v3643 = vld [vmem:[%s3642] sm:$0xf]
  %v3644 = vld [vmem:[%s3642 + $0x4] sm:$0xf]
  %v3645 = vld [vmem:[%s3642 + $0x8] sm:$0xf]
  %v3646 = vld [vmem:[%s3642 + $0xc] sm:$0xf]
  %v3647 = vld [vmem:[%s3642 + $0x10] sm:$0xf]
  %v3648 = vld [vmem:[%s3642 + $0x14] sm:$0xf]
  %v3649 = vld [vmem:[%s3642 + $0x18] sm:$0xf]
  %v3650 = vld [vmem:[%s3642 + $0x1c] sm:$0xf]
  %s3651 = scalar_lea.vmem %s21, 1
  %v3652 = vld [vmem:[%s3651] sm:$0x1]
  %v3653 = vpack.c.bf16 %v3639, %v3638
  %v3654 = vpack.c.bf16 %v3641, %v3640
  %v3656 = vlaneseq
  %v3657 = vshrl.u32 %v3656, 7
  %v3658 = vsub.s32 0, %v3657
  %v3659 = vrot.slane %v3652, %v3658
  %v3669 = vunpack.c.l.b16 %v3643
  %v3670 = vunpack.c.l.b16 %v3644
  %v3671 = vunpack.c.l.b16 %v3645
  %v3672 = vunpack.c.l.b16 %v3646
  %v3673 = vunpack.c.l.b16 %v3647
  %v3674 = vunpack.c.l.b16 %v3648
  %v3675 = vunpack.c.l.b16 %v3649
  %v3676 = vunpack.c.l.b16 %v3650
  %v3677 = vpack.c.b16 %v3670, %v3669
  %v3678 = vpack.c.b16 %v3672, %v3671
  %v3679 = vpack.c.b16 %v3674, %v3673
  %v3680 = vpack.c.b16 %v3676, %v3675
  %v3686 = vsel %vm253, %v3653, 0
  %v3689 = vsel %vm253, %v3654, 0
  %3691 = vmatprep.subr.bf16.mxu0 0
  %3692 = vmatpush1.bf16.msra.mxu0 0
  %3693 = vmatprep.subr.bf16.mxu0 0
  %3694 = vmatpush1.bf16.msra.mxu0 0
  %3695 = vmatprep.subr.bf16.mxu0 0
  %3696 = vmatpush1.bf16.msra.mxu0 0
  %3697 = vmatprep.subr.bf16.mxu0 0
  %3698 = vmatpush1.bf16.msra.mxu0 0
  %3699 = vmatprep.subr.bf16.mxu0 0
  %3700 = vmatpush1.bf16.msra.mxu0 %v3680
  %3701 = vmatprep.subr.bf16.mxu0 0
  %3702 = vmatpush1.bf16.msra.mxu0 %v3679
  %3703 = vmatprep.subr.bf16.mxu0 0
  %3704 = vmatpush1.bf16.msra.mxu0 %v3678
  %3705 = vmatprep.subr.bf16.mxu0 0
  %3706 = vmatpush1.bf16.msra.mxu0 %v3677
  %3707 = vmatprep.subr.bf16.mxu0 0
  %3708 = vmatpush2.bf16.msra.mxu0 0
  %3709 = vmatprep.subr.bf16.mxu0 0
  %3710 = vmatpush2.bf16.msra.mxu0 0
  %3711 = vmatprep.subr.bf16.mxu0 0
  %3712 = vmatpush2.bf16.msra.mxu0 0
  %3713 = vmatprep.subr.bf16.mxu0 0
  %3714 = vmatpush2.bf16.msra.mxu0 0
  %3715 = vmatprep.subr.bf16.mxu0 0
  %3716 = vmatpush2.bf16.msra.mxu0 0
  %3717 = vmatprep.subr.bf16.mxu0 0
  %3718 = vmatpush2.bf16.msra.mxu0 0
  %3719 = vmatprep.subr.bf16.mxu0 0
  %3720 = vmatpush2.bf16.msra.mxu0 0
  %3721 = vmatprep.subr.bf16.mxu0 0
  %3722 = vmatpush2.bf16.msra.mxu0 0
  %3723 = vmatprep.mubr.bf16.mxu0 0
  %3724 = vmatmul.mubr.bf16.gmra.mxu0 %v3686
  %v3725 = vpop.f32.mrf.mxu0
  %v3726 = vadd.f32 %v3659, %v3725
  %v3727 = vpop.f32.mrf.mxu0
  %v3728 = vpop.f32.mrf.mxu0
  %v3729 = vadd.f32 %v3659, %v3728
  %v3730 = vpop.f32.mrf.mxu0
  %3731 = vmatprep.mubr.bf16.mxu0 0
  %3732 = vmatmul.mubr.bf16.gmra.mxu0 %v3689
  %v3733 = vpop.f32.mrf.mxu0
  %v3734 = vadd.f32 %v3659, %v3733
  %v3735 = vpop.f32.mrf.mxu0
  %v3736 = vpop.f32.mrf.mxu0
  %v3737 = vadd.f32 %v3659, %v3736
  %v3738 = vpop.f32.mrf.mxu0
  %3739 = vdwg.mxu0
  %v3740 = vmul.f32 %v3726, 0.5
  %v3741 = vmul.f32 %v3729, 0.5
  %v3742 = vmul.f32 %v3734, 0.5
  %v3743 = vmul.f32 %v3737, 0.5
  %v3744 = vmul.f32 %v3726, 0.70710677
  %v3745 = vmul.f32 %v3729, 0.70710677
  %v3746 = vmul.f32 %v3734, 0.70710677
  %v3747 = vmul.f32 %v3737, 0.70710677
  %v3748 = verf.f32.pop %v3744
  %v3749 = verf.f32.pop %v3745
  %v3750 = verf.f32.pop %v3746
  %v3751 = verf.f32.pop %v3747
  %v3752 = vadd.f32 %v3748, 1.0
  %v3753 = vadd.f32 %v3749, 1.0
  %v3754 = vadd.f32 %v3750, 1.0
  %v3755 = vadd.f32 %v3751, 1.0
  %v3756 = vmul.f32 %v3740, %v3752
  %v3757 = vmul.f32 %v3741, %v3753
  %v3758 = vmul.f32 %v3742, %v3754
  %v3759 = vmul.f32 %v3743, %v3755
  %s3760 = scalar_lea.vmem %s20, 64
  %v3761 = vld [vmem:[%s3760] sm:$0xf]
  %v3762 = vld [vmem:[%s3760 + $0x4] sm:$0xf]
  %v3763 = vld [vmem:[%s3760 + $0x8] sm:$0xf]
  %v3764 = vld [vmem:[%s3760 + $0xc] sm:$0xf]
  %v3765 = vld [vmem:[%s3760 + $0x10] sm:$0xf]
  %v3766 = vld [vmem:[%s3760 + $0x14] sm:$0xf]
  %v3767 = vld [vmem:[%s3760 + $0x18] sm:$0xf]
  %v3768 = vld [vmem:[%s3760 + $0x1c] sm:$0xf]
  %s3769 = scalar_lea.vmem %s21, 2
  %v3770 = vld [vmem:[%s3769] sm:$0x1]
  %v3771 = vpack.c.bf16 %v3757, %v3756
  %v3772 = vpack.c.bf16 %v3759, %v3758
  %v3774 = vlaneseq
  %v3775 = vshrl.u32 %v3774, 7
  %v3776 = vsub.s32 0, %v3775
  %v3777 = vrot.slane %v3770, %v3776
  %v3787 = vunpack.c.l.b16 %v3761
  %v3788 = vunpack.c.l.b16 %v3762
  %v3789 = vunpack.c.l.b16 %v3763
  %v3790 = vunpack.c.l.b16 %v3764
  %v3791 = vunpack.c.l.b16 %v3765
  %v3792 = vunpack.c.l.b16 %v3766
  %v3793 = vunpack.c.l.b16 %v3767
  %v3794 = vunpack.c.l.b16 %v3768
  %v3795 = vpack.c.b16 %v3788, %v3787
  %v3796 = vpack.c.b16 %v3790, %v3789
  %v3797 = vpack.c.b16 %v3792, %v3791
  %v3798 = vpack.c.b16 %v3794, %v3793
  %v3804 = vsel %vm253, %v3771, 0
  %v3807 = vsel %vm253, %v3772, 0
  %3809 = vmatprep.subr.bf16.mxu0 0
  %3810 = vmatpush1.bf16.msra.mxu0 0
  %3811 = vmatprep.subr.bf16.mxu0 0
  %3812 = vmatpush1.bf16.msra.mxu0 0
  %3813 = vmatprep.subr.bf16.mxu0 0
  %3814 = vmatpush1.bf16.msra.mxu0 0
  %3815 = vmatprep.subr.bf16.mxu0 0
  %3816 = vmatpush1.bf16.msra.mxu0 0
  %3817 = vmatprep.subr.bf16.mxu0 0
  %3818 = vmatpush1.bf16.msra.mxu0 %v3798
  %3819 = vmatprep.subr.bf16.mxu0 0
  %3820 = vmatpush1.bf16.msra.mxu0 %v3797
  %3821 = vmatprep.subr.bf16.mxu0 0
  %3822 = vmatpush1.bf16.msra.mxu0 %v3796
  %3823 = vmatprep.subr.bf16.mxu0 0
  %3824 = vmatpush1.bf16.msra.mxu0 %v3795
  %3825 = vmatprep.subr.bf16.mxu0 0
  %3826 = vmatpush2.bf16.msra.mxu0 0
  %3827 = vmatprep.subr.bf16.mxu0 0
  %3828 = vmatpush2.bf16.msra.mxu0 0
  %3829 = vmatprep.subr.bf16.mxu0 0
  %3830 = vmatpush2.bf16.msra.mxu0 0
  %3831 = vmatprep.subr.bf16.mxu0 0
  %3832 = vmatpush2.bf16.msra.mxu0 0
  %3833 = vmatprep.subr.bf16.mxu0 0
  %3834 = vmatpush2.bf16.msra.mxu0 0
  %3835 = vmatprep.subr.bf16.mxu0 0
  %3836 = vmatpush2.bf16.msra.mxu0 0
  %3837 = vmatprep.subr.bf16.mxu0 0
  %3838 = vmatpush2.bf16.msra.mxu0 0
  %3839 = vmatprep.subr.bf16.mxu0 0
  %3840 = vmatpush2.bf16.msra.mxu0 0
  %3841 = vmatprep.mubr.bf16.mxu0 0
  %3842 = vmatmul.mubr.bf16.gmra.mxu0 %v3804
  %v3843 = vpop.f32.mrf.mxu0
  %v3844 = vadd.f32 %v3777, %v3843
  %v3845 = vpop.f32.mrf.mxu0
  %v3846 = vpop.f32.mrf.mxu0
  %v3847 = vadd.f32 %v3777, %v3846
  %v3848 = vpop.f32.mrf.mxu0
  %3849 = vmatprep.mubr.bf16.mxu0 0
  %3850 = vmatmul.mubr.bf16.gmra.mxu0 %v3807
  %v3851 = vpop.f32.mrf.mxu0
  %v3852 = vadd.f32 %v3777, %v3851
  %v3853 = vpop.f32.mrf.mxu0
  %v3854 = vpop.f32.mrf.mxu0
  %v3855 = vadd.f32 %v3777, %v3854
  %v3856 = vpop.f32.mrf.mxu0
  %3857 = vdwg.mxu0
  %v3858 = vmul.f32 %v3844, 0.5
  %v3859 = vmul.f32 %v3847, 0.5
  %v3860 = vmul.f32 %v3852, 0.5
  %v3861 = vmul.f32 %v3855, 0.5
  %v3862 = vmul.f32 %v3844, 0.70710677
  %v3863 = vmul.f32 %v3847, 0.70710677
  %v3864 = vmul.f32 %v3852, 0.70710677
  %v3865 = vmul.f32 %v3855, 0.70710677
  %v3866 = verf.f32.pop %v3862
  %v3867 = verf.f32.pop %v3863
  %v3868 = verf.f32.pop %v3864
  %v3869 = verf.f32.pop %v3865
  %v3870 = vadd.f32 %v3866, 1.0
  %v3871 = vadd.f32 %v3867, 1.0
  %v3872 = vadd.f32 %v3868, 1.0
  %v3873 = vadd.f32 %v3869, 1.0
  %v3874 = vmul.f32 %v3858, %v3870
  %v3875 = vmul.f32 %v3859, %v3871
  %v3876 = vmul.f32 %v3860, %v3872
  %v3877 = vmul.f32 %v3861, %v3873
  %v3878 = vld [vmem:[%s22] sm:$0xf]
  %v3879 = vld [vmem:[%s22 + $0x4] sm:$0xf]
  %v3880 = vld [vmem:[%s22 + $0x8] sm:$0xf]
  %v3881 = vld [vmem:[%s22 + $0xc] sm:$0xf]
  %v3882 = vld [vmem:[%s22 + $0x10] sm:$0xf]
  %v3883 = vld [vmem:[%s22 + $0x14] sm:$0xf]
  %v3884 = vld [vmem:[%s22 + $0x18] sm:$0xf]
  %v3885 = vld [vmem:[%s22 + $0x1c] sm:$0xf]
  %v3886 = vld [vmem:[%s23] sm:$0x1]
  %v3887 = vpack.c.bf16 %v3875, %v3874
  %v3888 = vpack.c.bf16 %v3877, %v3876
  %v3890 = vlaneseq
  %v3891 = vshrl.u32 %v3890, 7
  %v3892 = vsub.s32 0, %v3891
  %v3893 = vrot.slane %v3886, %v3892
  %v3903 = vunpack.c.l.b16 %v3878
  %v3904 = vunpack.c.l.b16 %v3879
  %v3905 = vunpack.c.l.b16 %v3880
  %v3906 = vunpack.c.l.b16 %v3881
  %v3907 = vunpack.c.l.b16 %v3882
  %v3908 = vunpack.c.l.b16 %v3883
  %v3909 = vunpack.c.l.b16 %v3884
  %v3910 = vunpack.c.l.b16 %v3885
  %v3911 = vpack.c.b16 %v3904, %v3903
  %v3912 = vpack.c.b16 %v3906, %v3905
  %v3913 = vpack.c.b16 %v3908, %v3907
  %v3914 = vpack.c.b16 %v3910, %v3909
  %v3920 = vsel %vm253, %v3887, 0
  %v3923 = vsel %vm253, %v3888, 0
  %3925 = vmatprep.subr.bf16.mxu0 0
  %3926 = vmatpush1.bf16.msra.mxu0 0
  %3927 = vmatprep.subr.bf16.mxu0 0
  %3928 = vmatpush1.bf16.msra.mxu0 0
  %3929 = vmatprep.subr.bf16.mxu0 0
  %3930 = vmatpush1.bf16.msra.mxu0 0
  %3931 = vmatprep.subr.bf16.mxu0 0
  %3932 = vmatpush1.bf16.msra.mxu0 0
  %3933 = vmatprep.subr.bf16.mxu0 0
  %3934 = vmatpush1.bf16.msra.mxu0 %v3914
  %3935 = vmatprep.subr.bf16.mxu0 0
  %3936 = vmatpush1.bf16.msra.mxu0 %v3913
  %3937 = vmatprep.subr.bf16.mxu0 0
  %3938 = vmatpush1.bf16.msra.mxu0 %v3912
  %3939 = vmatprep.subr.bf16.mxu0 0
  %3940 = vmatpush1.bf16.msra.mxu0 %v3911
  %3941 = vmatprep.subr.bf16.mxu0 0
  %3942 = vmatpush2.bf16.msra.mxu0 0
  %3943 = vmatprep.subr.bf16.mxu0 0
  %3944 = vmatpush2.bf16.msra.mxu0 0
  %3945 = vmatprep.subr.bf16.mxu0 0
  %3946 = vmatpush2.bf16.msra.mxu0 0
  %3947 = vmatprep.subr.bf16.mxu0 0
  %3948 = vmatpush2.bf16.msra.mxu0 0
  %3949 = vmatprep.subr.bf16.mxu0 0
  %3950 = vmatpush2.bf16.msra.mxu0 0
  %3951 = vmatprep.subr.bf16.mxu0 0
  %3952 = vmatpush2.bf16.msra.mxu0 0
  %3953 = vmatprep.subr.bf16.mxu0 0
  %3954 = vmatpush2.bf16.msra.mxu0 0
  %3955 = vmatprep.subr.bf16.mxu0 0
  %3956 = vmatpush2.bf16.msra.mxu0 0
  %3957 = vmatprep.mubr.bf16.mxu0 0
  %3958 = vmatmul.mubr.bf16.gmra.mxu0 %v3920
  %v3959 = vpop.f32.mrf.mxu0
  %v3960 = vadd.f32 %v3893, %v3959
  %v3961 = vpop.f32.mrf.mxu0
  %v3962 = vpop.f32.mrf.mxu0
  %v3963 = vadd.f32 %v3893, %v3962
  %v3964 = vpop.f32.mrf.mxu0
  %3965 = vmatprep.mubr.bf16.mxu0 0
  %3966 = vmatmul.mubr.bf16.gmra.mxu0 %v3923
  %v3967 = vpop.f32.mrf.mxu0
  %v3968 = vadd.f32 %v3893, %v3967
  %v3969 = vpop.f32.mrf.mxu0
  %v3970 = vpop.f32.mrf.mxu0
  %v3971 = vadd.f32 %v3893, %v3970
  %v3972 = vpop.f32.mrf.mxu0
  %3973 = vdwg.mxu0
  %v3974 = vsub.f32 0.0, %v3960
  %v3975 = vsub.f32 0.0, %v3963
  %v3976 = vsub.f32 0.0, %v3968
  %v3977 = vsub.f32 0.0, %v3971
  %v3978 = vmul.f32 %v3974, 1.442695
  %v3979 = vpow.pop %v3978
  %v3980 = vmul.f32 %v3975, 1.442695
  %v3981 = vpow.pop %v3980
  %v3982 = vmul.f32 %v3976, 1.442695
  %v3983 = vpow.pop %v3982
  %v3984 = vmul.f32 %v3977, 1.442695
  %v3985 = vpow.pop %v3984
  %v3986 = vadd.f32 %v3979, 1.0
  %v3987 = vadd.f32 %v3981, 1.0
  %v3988 = vadd.f32 %v3983, 1.0
  %v3989 = vadd.f32 %v3985, 1.0
  %v3990 = vrcp.pop %v3986
  %v3991 = vmul.f32 1.0, %v3990
  %v3992 = vrcp.pop %v3987
  %v3993 = vmul.f32 1.0, %v3992
  %v3994 = vrcp.pop %v3988
  %v3995 = vmul.f32 1.0, %v3994
  %v3996 = vrcp.pop %v3989
  %v3997 = vmul.f32 1.0, %v3996
  %3998 = vst [vmem:[%s24] sm:$0xff] %v3991
  %3999 = vst [vmem:[%s24 + $0x8] sm:$0xff] %v3993
  %4000 = vst [vmem:[%s24 + $0x10] sm:$0xff] %v3995
  %4001 = vst [vmem:[%s24 + $0x18] sm:$0xff] %v3997
  // Predicated region
  $region98: #{transformer_forward.1} parent=0 // pred_check
    _
  $region99: #{transformer_forward.1} parent=0 // pred_check_branch
    %4003 = sbr.rel (0) target = $region101
  $region100: #{transformer_forward.1} parent=0 // pred_region
    _
  $region101: #{transformer_forward.1} parent=0 // pred_fallthru
    _
  // Predicated region
  $region102: #{transformer_forward.1} parent=0 // pred_check
    _
  $region103: #{transformer_forward.1} parent=0 // pred_check_branch
    %4005 = sbr.rel (0) target = $region105
  $region104: #{transformer_forward.1} parent=0 // pred_region
    _
  $region105: #{transformer_forward.1} parent=0 // pred_fallthru
    _

</llo_original>
